<compile_context>
chip_gen: v7x
topology: tpu7x:2x2x1
jax: 0.10.0
libtpu: 0.0.40
codegen_flags: <defaults>
</compile_context>

<pallas_src>
import numpy as np

import jax
import jax.numpy as jnp
from jax.experimental import pallas as pl
from jax.experimental.pallas import tpu as pltpu


# ----------------------------------------------------------------------------
# Fused Pallas kernel: one grid step == `bt` images, everything in VMEM/vregs.
# ----------------------------------------------------------------------------
def _make_projnet_kernel(bt):
    def kernel(x_ref, band1_ref, bias1_ref, rsel1_ref, csel1_ref,
               band2_ref, bias2_ref, rsel2_ref, csel2_ref,
               fc1p_ref, fc1b_ref, fc2t_ref, fc2b_ref,
               fc3m_ref, fc3b_ref, out_ref, yscr):
        def dot(a, b):
            return jnp.dot(a, b, preferred_element_type=jnp.float32)

        # -------- per-image conv / pool / fc1 (static unroll over block) ----
        for b in range(bt):
            x = x_ref[b]                                       # (28, 28)

            # conv1 + bias + ReLU -> (24, 144) laid out [ho, oc*24 + wo]
            c1 = dot(x[0:24, :], band1_ref[0])
            for i in range(1, 5):
                c1 = c1 + dot(x[i:i + 24, :], band1_ref[i])
            c1 = jnp.maximum(c1 + bias1_ref[...], 0.0)

            # 2x2 max-pool (exact 0/1 selection matmuls) -> (12, 72)
            r1 = jnp.maximum(dot(rsel1_ref[0], c1), dot(rsel1_ref[1], c1))
            p1 = jnp.maximum(dot(r1, csel1_ref[0]), dot(r1, csel1_ref[1]))

            # conv2 + bias + ReLU -> (8, 80) laid out [ho, oc*8 + wo]
            c2 = dot(p1[0:8, :], band2_ref[0])
            for i in range(1, 5):
                c2 = c2 + dot(p1[i:i + 8, :], band2_ref[i])
            c2 = jnp.maximum(c2 + bias2_ref[...], 0.0)

            # 2x2 max-pool -> (4, 40) laid out [h, oc*4 + w]
            r2 = jnp.maximum(dot(rsel2_ref[0], c2), dot(rsel2_ref[1], c2))
            p2 = jnp.maximum(dot(r2, csel2_ref[0]), dot(r2, csel2_ref[1]))

            # fc1 (NCHW flatten permutation folded into fc1p[h]); pre-bias sum
            y = dot(p2[0:1, :], fc1p_ref[0])
            for h in range(1, 4):
                y = y + dot(p2[h:h + 1, :], fc1p_ref[h])
            yscr[b:b + 1, :] = y                               # stack rows

        # -------- batched FC tail across the block (bt rows per push) -------
        y = jnp.maximum(yscr[...] + fc1b_ref[...], 0.0)        # fc1: (bt, 80)
        y = jnp.maximum(dot(y, fc2t_ref[...]) + fc2b_ref[...], 0.0)  # (bt, 30)
        # (x @ cvecs.T) @ fc3_w.T + fc3_b merged; lane-padded to 128 lanes
        out_ref[...] = dot(y, fc3m_ref[...]) + fc3b_ref[...]   # (bt, 128)

    return kernel


# ----------------------------------------------------------------------------
# One-time host-side weight preprocessing (runs OUTSIDE the per-call forward).
# ----------------------------------------------------------------------------
def prepare_params(p):
    f32 = np.float32
    w1 = np.asarray(p["conv1_w"], f32)      # (6, 1, 5, 5)
    b1 = np.asarray(p["conv1_b"], f32)      # (6,)
    w2 = np.asarray(p["conv2_w"], f32)      # (10, 6, 5, 5)
    b2 = np.asarray(p["conv2_b"], f32)      # (10,)
    fc1_w = np.asarray(p["fc1_w"], f32)     # (80, 160)
    fc1_b = np.asarray(p["fc1_b"], f32)
    fc2_w = np.asarray(p["fc2_w"], f32)     # (30, 80)
    fc2_b = np.asarray(p["fc2_b"], f32)
    fc3_w = np.asarray(p["fc3_w"], f32)     # (10, 30)
    fc3_b = np.asarray(p["fc3_b"], f32)
    cvecs = np.asarray(p["cvecs"], f32)     # (30, 30)

    # conv1 as banded matmuls: band1[i, c, oc*24+wo] = w1[oc, 0, i, c-wo]
    band1 = np.zeros((5, 28, 6 * 24), f32)
    for i in range(5):
        for oc in range(6):
            for wo in range(24):
                band1[i, wo:wo + 5, oc * 24 + wo] = w1[oc, 0, i, :]
    bias1 = np.repeat(b1, 24)[None, :]                      # (1, 144)

    # conv2 as banded matmuls: band2[i, ic*12+c, oc*8+wo] = w2[oc, ic, i, c-wo]
    band2 = np.zeros((5, 6 * 12, 10 * 8), f32)
    for i in range(5):
        for oc in range(10):
            for ic in range(6):
                for wo in range(8):
                    band2[i, ic * 12 + wo:ic * 12 + wo + 5, oc * 8 + wo] = \
                        w2[oc, ic, i, :]
    bias2 = np.repeat(b2, 8)[None, :]                       # (1, 80)

    # 2x2 max-pool selection matrices (each column has exactly one 1 -> exact)
    def row_sel(n):
        s = np.zeros((2, n // 2, n), f32)
        for r in range(n // 2):
            s[0, r, 2 * r] = 1.0
            s[1, r, 2 * r + 1] = 1.0
        return s

    def col_sel(nchan, w):      # block-diagonal over channel blocks of width w
        s = np.zeros((2, nchan * w, nchan * (w // 2)), f32)
        for c in range(nchan):
            for q in range(w // 2):
                s[0, c * w + 2 * q, c * (w // 2) + q] = 1.0
                s[1, c * w + 2 * q + 1, c * (w // 2) + q] = 1.0
        return s

    rsel1 = row_sel(24)         # (2, 12, 24)
    csel1 = col_sel(6, 24)      # (2, 144, 72)
    rsel2 = row_sel(8)          # (2, 4, 8)
    csel2 = col_sel(10, 8)      # (2, 80, 40)

    # fc1 with the NCHW flatten permutation folded in:
    #   fc1p[h, oc*4+w, n] = fc1_w[n, oc*16 + h*4 + w]
    fc1p = np.zeros((4, 40, 80), f32)
    for h in range(4):
        for oc in range(10):
            for w in range(4):
                fc1p[h, oc * 4 + w, :] = fc1_w[:, oc * 16 + h * 4 + w]
    fc1b = fc1_b[None, :]                                   # (1, 80)

    fc2t = np.ascontiguousarray(fc2_w.T)                    # (80, 30)
    fc2b = fc2_b[None, :]                                   # (1, 30)

    # Merge cvecs projection with fc3 (no nonlinearity between them),
    # lane-pad the output dimension 10 -> 128.
    w3 = cvecs.T @ fc3_w.T                                  # (30, 10)
    fc3m = np.zeros((30, 128), f32)
    fc3m[:, :10] = w3
    fc3b = np.zeros((1, 128), f32)
    fc3b[0, :10] = fc3_b

    host = dict(band1=band1, bias1=bias1, rsel1=rsel1, csel1=csel1,
                band2=band2, bias2=bias2, rsel2=rsel2, csel2=csel2,
                fc1p=fc1p, fc1b=fc1b, fc2t=fc2t, fc2b=fc2b,
                fc3m=fc3m, fc3b=fc3b)
    return {k: jnp.asarray(v, jnp.float32) for k, v in host.items()}


# ----------------------------------------------------------------------------
# Forward: one fused pallas_call, grid over batch blocks (parallel).
# ----------------------------------------------------------------------------
def projnet_forward(x_nchw, prep):
    B = x_nchw.shape[0]
    bt = B if B <= 8 else 8                       # images per grid step
    bpad = pl.cdiv(B, bt) * bt

    x3 = x_nchw.astype(jnp.float32).reshape(B, 28, 28)
    if bpad != B:
        x3 = jnp.pad(x3, ((0, bpad - B), (0, 0), (0, 0)))

    weight_names = ("band1", "bias1", "rsel1", "csel1",
                    "band2", "bias2", "rsel2", "csel2",
                    "fc1p", "fc1b", "fc2t", "fc2b", "fc3m", "fc3b")
    weights = tuple(prep[k] for k in weight_names)

    def resident(a):
        # whole-array block, same block index every grid step -> stays in VMEM
        nd = a.ndim
        return pl.BlockSpec(a.shape, lambda g, _nd=nd: (0,) * _nd)

    out = pl.pallas_call(
        _make_projnet_kernel(bt),
        out_shape=jax.ShapeDtypeStruct((bpad, 128), jnp.float32),
        grid=(bpad // bt,),
        in_specs=[pl.BlockSpec((bt, 28, 28), lambda g: (g, 0, 0))]
                 + [resident(w) for w in weights],
        out_specs=pl.BlockSpec((bt, 128), lambda g: (g, 0)),
        scratch_shapes=[pltpu.VMEM((bt, 80), jnp.float32)],
        compiler_params=pltpu.CompilerParams(
            dimension_semantics=("parallel",)),
    )(x3, *weights)

    # lane-dense (padded-to-128) kernel output; valid logits are columns 0..9
    return out[:B, :10]


# ----------------------------------------------------------------------------
# Pure-JAX reference (for correctness check)
# ----------------------------------------------------------------------------
def projnet_reference(x_nchw, p):
    x = jnp.transpose(x_nchw, (0, 2, 3, 1)).astype(jnp.float32)

    def conv(x, w, b):
        y = jax.lax.conv_general_dilated(
            x, jnp.transpose(w, (2, 3, 1, 0)), (1, 1), "VALID",
            dimension_numbers=("NHWC", "HWIO", "NHWC"))
        return jax.nn.relu(y + b)

    def pool(x):
        return jax.lax.reduce_window(
            x, -jnp.inf, jax.lax.max, (1, 2, 2, 1), (1, 2, 2, 1), "VALID")

    x = pool(conv(x, p["conv1_w"], p["conv1_b"]))
    x = pool(conv(x, p["conv2_w"], p["conv2_b"]))
    B = x.shape[0]
    x = jnp.transpose(x, (0, 3, 1, 2)).reshape(B, -1)
    x = jax.nn.relu(x @ p["fc1_w"].T + p["fc1_b"])
    x = jax.nn.relu(x @ p["fc2_w"].T + p["fc2_b"])
    x = x @ p["cvecs"].T
    x = x @ p["fc3_w"].T + p["fc3_b"]
    return x


# ----------------------------------------------------------------------------
# Deterministic parameter init (shapes from ProjNet.__init__)
# ----------------------------------------------------------------------------
def init_params(key):
    ks = jax.random.split(key, 11)
    f32 = jnp.float32
    return {
        "conv1_w": 0.1 * jax.random.normal(ks[0], (6, 1, 5, 5), f32),
        "conv1_b": 0.1 * jax.random.normal(ks[1], (6,), f32),
        "conv2_w": 0.1 * jax.random.normal(ks[2], (10, 6, 5, 5), f32),
        "conv2_b": 0.1 * jax.random.normal(ks[3], (10,), f32),
        "fc1_w":   0.1 * jax.random.normal(ks[4], (80, 160), f32),
        "fc1_b":   0.1 * jax.random.normal(ks[5], (80,), f32),
        "fc2_w":   0.1 * jax.random.normal(ks[6], (30, 80), f32),
        "fc2_b":   0.1 * jax.random.normal(ks[7], (30,), f32),
        "fc3_w":   0.1 * jax.random.normal(ks[8], (10, 30), f32),
        "fc3_b":   0.1 * jax.random.normal(ks[9], (10,), f32),
        # TODO(synk): cvecs come from np.load(str(ver)+'_cvecs.npy') in the
        # original module; synthesized in-script here (no file I/O allowed).
        "cvecs":   0.1 * jax.random.normal(ks[10], (30, 30), f32),
    }


if __name__ == "__main__":
    key = jax.random.PRNGKey(0)
    kx, kp = jax.random.split(key)
    params = init_params(kp)
    prep = prepare_params(params)     # one-time host-side weight preprocessing

    # flatten(..., 1) == 160 implies 28x28 single-channel input (MNIST-like)
    x = jax.random.normal(kx, (2, 1, 28, 28), jnp.float32)

    fwd = jax.jit(projnet_forward)
    out = jax.block_until_ready(fwd(x, prep))

    ref = projnet_reference(x, params)
    assert out.shape == (2, 10), out.shape
    max_err = float(jnp.max(jnp.abs(out - ref)))
    assert jnp.allclose(out, ref, atol=1e-4, rtol=1e-4), \
        f"mismatch: max err {max_err}"

    print("KERNEL_OK")
</pallas_src>

<mosaic_0001>
module attributes {stable_mosaic.version = 11 : i64} {
  func.func @kernel(%arg0: i32, %arg1: memref<2x28x28xf32, #tpu.memory_space<vmem>>, %arg2: memref<5x28x144xf32, #tpu.memory_space<vmem>>, %arg3: memref<1x144xf32, #tpu.memory_space<vmem>>, %arg4: memref<2x12x24xf32, #tpu.memory_space<vmem>>, %arg5: memref<2x144x72xf32, #tpu.memory_space<vmem>>, %arg6: memref<5x72x80xf32, #tpu.memory_space<vmem>>, %arg7: memref<1x80xf32, #tpu.memory_space<vmem>>, %arg8: memref<2x4x8xf32, #tpu.memory_space<vmem>>, %arg9: memref<2x80x40xf32, #tpu.memory_space<vmem>>, %arg10: memref<4x40x80xf32, #tpu.memory_space<vmem>>, %arg11: memref<1x80xf32, #tpu.memory_space<vmem>>, %arg12: memref<80x30xf32, #tpu.memory_space<vmem>>, %arg13: memref<1x30xf32, #tpu.memory_space<vmem>>, %arg14: memref<30x128xf32, #tpu.memory_space<vmem>>, %arg15: memref<1x128xf32, #tpu.memory_space<vmem>>, %arg16: memref<2x128xf32, #tpu.memory_space<vmem>>, %arg17: memref<2x80xf32, #tpu.memory_space<vmem>>) attributes {dimension_semantics = [#tpu.dimension_semantics<parallel>], iteration_bounds = array<i64: 1>, scalar_prefetch = 0 : i64, scratch_operands = 1 : i64, tpu.core_type = #tpu.core_type<tc>, window_params = [{transform_indices = @transform_0, window_bounds = array<i64: 2, 28, 28>}, {pipeline_mode = #tpu.pipeline_mode<synchronous>, transform_indices = @transform_1, window_bounds = array<i64: 5, 28, 144>}, {pipeline_mode = #tpu.pipeline_mode<synchronous>, transform_indices = @transform_2, window_bounds = array<i64: 1, 144>}, {pipeline_mode = #tpu.pipeline_mode<synchronous>, transform_indices = @transform_3, window_bounds = array<i64: 2, 12, 24>}, {pipeline_mode = #tpu.pipeline_mode<synchronous>, transform_indices = @transform_4, window_bounds = array<i64: 2, 144, 72>}, {pipeline_mode = #tpu.pipeline_mode<synchronous>, transform_indices = @transform_5, window_bounds = array<i64: 5, 72, 80>}, {pipeline_mode = #tpu.pipeline_mode<synchronous>, transform_indices = @transform_6, window_bounds = array<i64: 1, 80>}, {pipeline_mode = #tpu.pipeline_mode<synchronous>, transform_indices = @transform_7, window_bounds = array<i64: 2, 4, 8>}, {pipeline_mode = #tpu.pipeline_mode<synchronous>, transform_indices = @transform_8, window_bounds = array<i64: 2, 80, 40>}, {pipeline_mode = #tpu.pipeline_mode<synchronous>, transform_indices = @transform_9, window_bounds = array<i64: 4, 40, 80>}, {pipeline_mode = #tpu.pipeline_mode<synchronous>, transform_indices = @transform_10, window_bounds = array<i64: 1, 80>}, {pipeline_mode = #tpu.pipeline_mode<synchronous>, transform_indices = @transform_11, window_bounds = array<i64: 80, 30>}, {pipeline_mode = #tpu.pipeline_mode<synchronous>, transform_indices = @transform_12, window_bounds = array<i64: 1, 30>}, {pipeline_mode = #tpu.pipeline_mode<synchronous>, transform_indices = @transform_13, window_bounds = array<i64: 30, 128>}, {pipeline_mode = #tpu.pipeline_mode<synchronous>, transform_indices = @transform_14, window_bounds = array<i64: 1, 128>}, {transform_indices = @transform_15, window_bounds = array<i64: 2, 128>}]} {
    %c0 = arith.constant 0 : index
    %c0_0 = arith.constant 0 : index
    %c0_1 = arith.constant 0 : index
    %0 = vector.load %arg1[%c0, %c0_0, %c0_1] : memref<2x28x28xf32, #tpu.memory_space<vmem>>, vector<1x28x28xf32>
    %1 = vector.shape_cast %0 : vector<1x28x28xf32> to vector<28x28xf32>
    %2 = vector.extract_strided_slice %1 {offsets = [0, 0], sizes = [24, 28], strides = [1, 1]} : vector<28x28xf32> to vector<24x28xf32>
    %c0_2 = arith.constant 0 : index
    %c0_3 = arith.constant 0 : index
    %c0_4 = arith.constant 0 : index
    %3 = vector.load %arg2[%c0_2, %c0_3, %c0_4] : memref<5x28x144xf32, #tpu.memory_space<vmem>>, vector<1x28x144xf32>
    %4 = vector.shape_cast %3 : vector<1x28x144xf32> to vector<28x144xf32>
    %cst = arith.constant dense<0.000000e+00> : vector<24x144xf32>
    %5 = tpu.matmul %2, %4, %cst {dimension_numbers = #tpu.dot_dimension_numbers<[1], [0], [0], [1], [0, 0, 1, 1], [], []>} : vector<24x28xf32>, vector<28x144xf32>, vector<24x144xf32> -> vector<24x144xf32>
    %6 = vector.extract_strided_slice %1 {offsets = [1, 0], sizes = [24, 28], strides = [1, 1]} : vector<28x28xf32> to vector<24x28xf32>
    %c1 = arith.constant 1 : index
    %c0_5 = arith.constant 0 : index
    %c0_6 = arith.constant 0 : index
    %7 = vector.load %arg2[%c1, %c0_5, %c0_6] : memref<5x28x144xf32, #tpu.memory_space<vmem>>, vector<1x28x144xf32>
    %8 = vector.shape_cast %7 : vector<1x28x144xf32> to vector<28x144xf32>
    %cst_7 = arith.constant dense<0.000000e+00> : vector<24x144xf32>
    %9 = tpu.matmul %6, %8, %cst_7 {dimension_numbers = #tpu.dot_dimension_numbers<[1], [0], [0], [1], [0, 0, 1, 1], [], []>} : vector<24x28xf32>, vector<28x144xf32>, vector<24x144xf32> -> vector<24x144xf32>
    %10 = arith.addf %5, %9 : vector<24x144xf32>
    %11 = vector.extract_strided_slice %1 {offsets = [2, 0], sizes = [24, 28], strides = [1, 1]} : vector<28x28xf32> to vector<24x28xf32>
    %c2 = arith.constant 2 : index
    %c0_8 = arith.constant 0 : index
    %c0_9 = arith.constant 0 : index
    %12 = vector.load %arg2[%c2, %c0_8, %c0_9] : memref<5x28x144xf32, #tpu.memory_space<vmem>>, vector<1x28x144xf32>
    %13 = vector.shape_cast %12 : vector<1x28x144xf32> to vector<28x144xf32>
    %cst_10 = arith.constant dense<0.000000e+00> : vector<24x144xf32>
    %14 = tpu.matmul %11, %13, %cst_10 {dimension_numbers = #tpu.dot_dimension_numbers<[1], [0], [0], [1], [0, 0, 1, 1], [], []>} : vector<24x28xf32>, vector<28x144xf32>, vector<24x144xf32> -> vector<24x144xf32>
    %15 = arith.addf %10, %14 : vector<24x144xf32>
    %16 = vector.extract_strided_slice %1 {offsets = [3, 0], sizes = [24, 28], strides = [1, 1]} : vector<28x28xf32> to vector<24x28xf32>
    %c3 = arith.constant 3 : index
    %c0_11 = arith.constant 0 : index
    %c0_12 = arith.constant 0 : index
    %17 = vector.load %arg2[%c3, %c0_11, %c0_12] : memref<5x28x144xf32, #tpu.memory_space<vmem>>, vector<1x28x144xf32>
    %18 = vector.shape_cast %17 : vector<1x28x144xf32> to vector<28x144xf32>
    %cst_13 = arith.constant dense<0.000000e+00> : vector<24x144xf32>
    %19 = tpu.matmul %16, %18, %cst_13 {dimension_numbers = #tpu.dot_dimension_numbers<[1], [0], [0], [1], [0, 0, 1, 1], [], []>} : vector<24x28xf32>, vector<28x144xf32>, vector<24x144xf32> -> vector<24x144xf32>
    %20 = arith.addf %15, %19 : vector<24x144xf32>
    %21 = vector.extract_strided_slice %1 {offsets = [4, 0], sizes = [24, 28], strides = [1, 1]} : vector<28x28xf32> to vector<24x28xf32>
    %c4 = arith.constant 4 : index
    %c0_14 = arith.constant 0 : index
    %c0_15 = arith.constant 0 : index
    %22 = vector.load %arg2[%c4, %c0_14, %c0_15] : memref<5x28x144xf32, #tpu.memory_space<vmem>>, vector<1x28x144xf32>
    %23 = vector.shape_cast %22 : vector<1x28x144xf32> to vector<28x144xf32>
    %cst_16 = arith.constant dense<0.000000e+00> : vector<24x144xf32>
    %24 = tpu.matmul %21, %23, %cst_16 {dimension_numbers = #tpu.dot_dimension_numbers<[1], [0], [0], [1], [0, 0, 1, 1], [], []>} : vector<24x28xf32>, vector<28x144xf32>, vector<24x144xf32> -> vector<24x144xf32>
    %25 = arith.addf %20, %24 : vector<24x144xf32>
    %c0_17 = arith.constant 0 : index
    %c0_18 = arith.constant 0 : index
    %26 = vector.load %arg3[%c0_17, %c0_18] : memref<1x144xf32, #tpu.memory_space<vmem>>, vector<1x144xf32>
    %27 = vector.broadcast %26 : vector<1x144xf32> to vector<24x144xf32>
    %28 = arith.addf %25, %27 : vector<24x144xf32>
    %cst_19 = arith.constant 0.000000e+00 : f32
    %29 = vector.broadcast %cst_19 : f32 to vector<24x144xf32>
    %30 = arith.maximumf %28, %29 : vector<24x144xf32>
    %c0_20 = arith.constant 0 : index
    %c0_21 = arith.constant 0 : index
    %c0_22 = arith.constant 0 : index
    %31 = vector.load %arg4[%c0_20, %c0_21, %c0_22] : memref<2x12x24xf32, #tpu.memory_space<vmem>>, vector<1x12x24xf32>
    %32 = vector.shape_cast %31 : vector<1x12x24xf32> to vector<12x24xf32>
    %cst_23 = arith.constant dense<0.000000e+00> : vector<12x144xf32>
    %33 = tpu.matmul %32, %30, %cst_23 {dimension_numbers = #tpu.dot_dimension_numbers<[1], [0], [0], [1], [0, 0, 1, 1], [], []>} : vector<12x24xf32>, vector<24x144xf32>, vector<12x144xf32> -> vector<12x144xf32>
    %c1_24 = arith.constant 1 : index
    %c0_25 = arith.constant 0 : index
    %c0_26 = arith.constant 0 : index
    %34 = vector.load %arg4[%c1_24, %c0_25, %c0_26] : memref<2x12x24xf32, #tpu.memory_space<vmem>>, vector<1x12x24xf32>
    %35 = vector.shape_cast %34 : vector<1x12x24xf32> to vector<12x24xf32>
    %cst_27 = arith.constant dense<0.000000e+00> : vector<12x144xf32>
    %36 = tpu.matmul %35, %30, %cst_27 {dimension_numbers = #tpu.dot_dimension_numbers<[1], [0], [0], [1], [0, 0, 1, 1], [], []>} : vector<12x24xf32>, vector<24x144xf32>, vector<12x144xf32> -> vector<12x144xf32>
    %37 = arith.maximumf %33, %36 : vector<12x144xf32>
    %c0_28 = arith.constant 0 : index
    %c0_29 = arith.constant 0 : index
    %c0_30 = arith.constant 0 : index
    %38 = vector.load %arg5[%c0_28, %c0_29, %c0_30] : memref<2x144x72xf32, #tpu.memory_space<vmem>>, vector<1x144x72xf32>
    %39 = vector.shape_cast %38 : vector<1x144x72xf32> to vector<144x72xf32>
    %cst_31 = arith.constant dense<0.000000e+00> : vector<12x72xf32>
    %40 = tpu.matmul %37, %39, %cst_31 {dimension_numbers = #tpu.dot_dimension_numbers<[1], [0], [0], [1], [0, 0, 1, 1], [], []>} : vector<12x144xf32>, vector<144x72xf32>, vector<12x72xf32> -> vector<12x72xf32>
    %c1_32 = arith.constant 1 : index
    %c0_33 = arith.constant 0 : index
    %c0_34 = arith.constant 0 : index
    %41 = vector.load %arg5[%c1_32, %c0_33, %c0_34] : memref<2x144x72xf32, #tpu.memory_space<vmem>>, vector<1x144x72xf32>
    %42 = vector.shape_cast %41 : vector<1x144x72xf32> to vector<144x72xf32>
    %cst_35 = arith.constant dense<0.000000e+00> : vector<12x72xf32>
    %43 = tpu.matmul %37, %42, %cst_35 {dimension_numbers = #tpu.dot_dimension_numbers<[1], [0], [0], [1], [0, 0, 1, 1], [], []>} : vector<12x144xf32>, vector<144x72xf32>, vector<12x72xf32> -> vector<12x72xf32>
    %44 = arith.maximumf %40, %43 : vector<12x72xf32>
    %45 = vector.extract_strided_slice %44 {offsets = [0, 0], sizes = [8, 72], strides = [1, 1]} : vector<12x72xf32> to vector<8x72xf32>
    %c0_36 = arith.constant 0 : index
    %c0_37 = arith.constant 0 : index
    %c0_38 = arith.constant 0 : index
    %46 = vector.load %arg6[%c0_36, %c0_37, %c0_38] : memref<5x72x80xf32, #tpu.memory_space<vmem>>, vector<1x72x80xf32>
    %47 = vector.shape_cast %46 : vector<1x72x80xf32> to vector<72x80xf32>
    %cst_39 = arith.constant dense<0.000000e+00> : vector<8x80xf32>
    %48 = tpu.matmul %45, %47, %cst_39 {dimension_numbers = #tpu.dot_dimension_numbers<[1], [0], [0], [1], [0, 0, 1, 1], [], []>} : vector<8x72xf32>, vector<72x80xf32>, vector<8x80xf32> -> vector<8x80xf32>
    %49 = vector.extract_strided_slice %44 {offsets = [1, 0], sizes = [8, 72], strides = [1, 1]} : vector<12x72xf32> to vector<8x72xf32>
    %c1_40 = arith.constant 1 : index
    %c0_41 = arith.constant 0 : index
    %c0_42 = arith.constant 0 : index
    %50 = vector.load %arg6[%c1_40, %c0_41, %c0_42] : memref<5x72x80xf32, #tpu.memory_space<vmem>>, vector<1x72x80xf32>
    %51 = vector.shape_cast %50 : vector<1x72x80xf32> to vector<72x80xf32>
    %cst_43 = arith.constant dense<0.000000e+00> : vector<8x80xf32>
    %52 = tpu.matmul %49, %51, %cst_43 {dimension_numbers = #tpu.dot_dimension_numbers<[1], [0], [0], [1], [0, 0, 1, 1], [], []>} : vector<8x72xf32>, vector<72x80xf32>, vector<8x80xf32> -> vector<8x80xf32>
    %53 = arith.addf %48, %52 : vector<8x80xf32>
    %54 = vector.extract_strided_slice %44 {offsets = [2, 0], sizes = [8, 72], strides = [1, 1]} : vector<12x72xf32> to vector<8x72xf32>
    %c2_44 = arith.constant 2 : index
    %c0_45 = arith.constant 0 : index
    %c0_46 = arith.constant 0 : index
    %55 = vector.load %arg6[%c2_44, %c0_45, %c0_46] : memref<5x72x80xf32, #tpu.memory_space<vmem>>, vector<1x72x80xf32>
    %56 = vector.shape_cast %55 : vector<1x72x80xf32> to vector<72x80xf32>
    %cst_47 = arith.constant dense<0.000000e+00> : vector<8x80xf32>
    %57 = tpu.matmul %54, %56, %cst_47 {dimension_numbers = #tpu.dot_dimension_numbers<[1], [0], [0], [1], [0, 0, 1, 1], [], []>} : vector<8x72xf32>, vector<72x80xf32>, vector<8x80xf32> -> vector<8x80xf32>
    %58 = arith.addf %53, %57 : vector<8x80xf32>
    %59 = vector.extract_strided_slice %44 {offsets = [3, 0], sizes = [8, 72], strides = [1, 1]} : vector<12x72xf32> to vector<8x72xf32>
    %c3_48 = arith.constant 3 : index
    %c0_49 = arith.constant 0 : index
    %c0_50 = arith.constant 0 : index
    %60 = vector.load %arg6[%c3_48, %c0_49, %c0_50] : memref<5x72x80xf32, #tpu.memory_space<vmem>>, vector<1x72x80xf32>
    %61 = vector.shape_cast %60 : vector<1x72x80xf32> to vector<72x80xf32>
    %cst_51 = arith.constant dense<0.000000e+00> : vector<8x80xf32>
    %62 = tpu.matmul %59, %61, %cst_51 {dimension_numbers = #tpu.dot_dimension_numbers<[1], [0], [0], [1], [0, 0, 1, 1], [], []>} : vector<8x72xf32>, vector<72x80xf32>, vector<8x80xf32> -> vector<8x80xf32>
    %63 = arith.addf %58, %62 : vector<8x80xf32>
    %64 = vector.extract_strided_slice %44 {offsets = [4, 0], sizes = [8, 72], strides = [1, 1]} : vector<12x72xf32> to vector<8x72xf32>
    %c4_52 = arith.constant 4 : index
    %c0_53 = arith.constant 0 : index
    %c0_54 = arith.constant 0 : index
    %65 = vector.load %arg6[%c4_52, %c0_53, %c0_54] : memref<5x72x80xf32, #tpu.memory_space<vmem>>, vector<1x72x80xf32>
    %66 = vector.shape_cast %65 : vector<1x72x80xf32> to vector<72x80xf32>
    %cst_55 = arith.constant dense<0.000000e+00> : vector<8x80xf32>
    %67 = tpu.matmul %64, %66, %cst_55 {dimension_numbers = #tpu.dot_dimension_numbers<[1], [0], [0], [1], [0, 0, 1, 1], [], []>} : vector<8x72xf32>, vector<72x80xf32>, vector<8x80xf32> -> vector<8x80xf32>
    %68 = arith.addf %63, %67 : vector<8x80xf32>
    %c0_56 = arith.constant 0 : index
    %c0_57 = arith.constant 0 : index
    %69 = vector.load %arg7[%c0_56, %c0_57] : memref<1x80xf32, #tpu.memory_space<vmem>>, vector<1x80xf32>
    %70 = vector.broadcast %69 : vector<1x80xf32> to vector<8x80xf32>
    %71 = arith.addf %68, %70 : vector<8x80xf32>
    %cst_58 = arith.constant 0.000000e+00 : f32
    %72 = vector.broadcast %cst_58 : f32 to vector<8x80xf32>
    %73 = arith.maximumf %71, %72 : vector<8x80xf32>
    %c0_59 = arith.constant 0 : index
    %c0_60 = arith.constant 0 : index
    %c0_61 = arith.constant 0 : index
    %74 = vector.load %arg8[%c0_59, %c0_60, %c0_61] : memref<2x4x8xf32, #tpu.memory_space<vmem>>, vector<1x4x8xf32>
    %75 = vector.shape_cast %74 : vector<1x4x8xf32> to vector<4x8xf32>
    %cst_62 = arith.constant dense<0.000000e+00> : vector<4x80xf32>
    %76 = tpu.matmul %75, %73, %cst_62 {dimension_numbers = #tpu.dot_dimension_numbers<[1], [0], [0], [1], [0, 0, 1, 1], [], []>} : vector<4x8xf32>, vector<8x80xf32>, vector<4x80xf32> -> vector<4x80xf32>
    %c1_63 = arith.constant 1 : index
    %c0_64 = arith.constant 0 : index
    %c0_65 = arith.constant 0 : index
    %77 = vector.load %arg8[%c1_63, %c0_64, %c0_65] : memref<2x4x8xf32, #tpu.memory_space<vmem>>, vector<1x4x8xf32>
    %78 = vector.shape_cast %77 : vector<1x4x8xf32> to vector<4x8xf32>
    %cst_66 = arith.constant dense<0.000000e+00> : vector<4x80xf32>
    %79 = tpu.matmul %78, %73, %cst_66 {dimension_numbers = #tpu.dot_dimension_numbers<[1], [0], [0], [1], [0, 0, 1, 1], [], []>} : vector<4x8xf32>, vector<8x80xf32>, vector<4x80xf32> -> vector<4x80xf32>
    %80 = arith.maximumf %76, %79 : vector<4x80xf32>
    %c0_67 = arith.constant 0 : index
    %c0_68 = arith.constant 0 : index
    %c0_69 = arith.constant 0 : index
    %81 = vector.load %arg9[%c0_67, %c0_68, %c0_69] : memref<2x80x40xf32, #tpu.memory_space<vmem>>, vector<1x80x40xf32>
    %82 = vector.shape_cast %81 : vector<1x80x40xf32> to vector<80x40xf32>
    %cst_70 = arith.constant dense<0.000000e+00> : vector<4x40xf32>
    %83 = tpu.matmul %80, %82, %cst_70 {dimension_numbers = #tpu.dot_dimension_numbers<[1], [0], [0], [1], [0, 0, 1, 1], [], []>} : vector<4x80xf32>, vector<80x40xf32>, vector<4x40xf32> -> vector<4x40xf32>
    %c1_71 = arith.constant 1 : index
    %c0_72 = arith.constant 0 : index
    %c0_73 = arith.constant 0 : index
    %84 = vector.load %arg9[%c1_71, %c0_72, %c0_73] : memref<2x80x40xf32, #tpu.memory_space<vmem>>, vector<1x80x40xf32>
    %85 = vector.shape_cast %84 : vector<1x80x40xf32> to vector<80x40xf32>
    %cst_74 = arith.constant dense<0.000000e+00> : vector<4x40xf32>
    %86 = tpu.matmul %80, %85, %cst_74 {dimension_numbers = #tpu.dot_dimension_numbers<[1], [0], [0], [1], [0, 0, 1, 1], [], []>} : vector<4x80xf32>, vector<80x40xf32>, vector<4x40xf32> -> vector<4x40xf32>
    %87 = arith.maximumf %83, %86 : vector<4x40xf32>
    %88 = vector.extract_strided_slice %87 {offsets = [0, 0], sizes = [1, 40], strides = [1, 1]} : vector<4x40xf32> to vector<1x40xf32>
    %c0_75 = arith.constant 0 : index
    %c0_76 = arith.constant 0 : index
    %c0_77 = arith.constant 0 : index
    %89 = vector.load %arg10[%c0_75, %c0_76, %c0_77] : memref<4x40x80xf32, #tpu.memory_space<vmem>>, vector<1x40x80xf32>
    %90 = vector.shape_cast %89 : vector<1x40x80xf32> to vector<40x80xf32>
    %cst_78 = arith.constant dense<0.000000e+00> : vector<1x80xf32>
    %91 = tpu.matmul %88, %90, %cst_78 {dimension_numbers = #tpu.dot_dimension_numbers<[1], [0], [0], [1], [0, 0, 1, 1], [], []>} : vector<1x40xf32>, vector<40x80xf32>, vector<1x80xf32> -> vector<1x80xf32>
    %92 = vector.extract_strided_slice %87 {offsets = [1, 0], sizes = [1, 40], strides = [1, 1]} : vector<4x40xf32> to vector<1x40xf32>
    %c1_79 = arith.constant 1 : index
    %c0_80 = arith.constant 0 : index
    %c0_81 = arith.constant 0 : index
    %93 = vector.load %arg10[%c1_79, %c0_80, %c0_81] : memref<4x40x80xf32, #tpu.memory_space<vmem>>, vector<1x40x80xf32>
    %94 = vector.shape_cast %93 : vector<1x40x80xf32> to vector<40x80xf32>
    %cst_82 = arith.constant dense<0.000000e+00> : vector<1x80xf32>
    %95 = tpu.matmul %92, %94, %cst_82 {dimension_numbers = #tpu.dot_dimension_numbers<[1], [0], [0], [1], [0, 0, 1, 1], [], []>} : vector<1x40xf32>, vector<40x80xf32>, vector<1x80xf32> -> vector<1x80xf32>
    %96 = arith.addf %91, %95 : vector<1x80xf32>
    %97 = vector.extract_strided_slice %87 {offsets = [2, 0], sizes = [1, 40], strides = [1, 1]} : vector<4x40xf32> to vector<1x40xf32>
    %c2_83 = arith.constant 2 : index
    %c0_84 = arith.constant 0 : index
    %c0_85 = arith.constant 0 : index
    %98 = vector.load %arg10[%c2_83, %c0_84, %c0_85] : memref<4x40x80xf32, #tpu.memory_space<vmem>>, vector<1x40x80xf32>
    %99 = vector.shape_cast %98 : vector<1x40x80xf32> to vector<40x80xf32>
    %cst_86 = arith.constant dense<0.000000e+00> : vector<1x80xf32>
    %100 = tpu.matmul %97, %99, %cst_86 {dimension_numbers = #tpu.dot_dimension_numbers<[1], [0], [0], [1], [0, 0, 1, 1], [], []>} : vector<1x40xf32>, vector<40x80xf32>, vector<1x80xf32> -> vector<1x80xf32>
    %101 = arith.addf %96, %100 : vector<1x80xf32>
    %102 = vector.extract_strided_slice %87 {offsets = [3, 0], sizes = [1, 40], strides = [1, 1]} : vector<4x40xf32> to vector<1x40xf32>
    %c3_87 = arith.constant 3 : index
    %c0_88 = arith.constant 0 : index
    %c0_89 = arith.constant 0 : index
    %103 = vector.load %arg10[%c3_87, %c0_88, %c0_89] : memref<4x40x80xf32, #tpu.memory_space<vmem>>, vector<1x40x80xf32>
    %104 = vector.shape_cast %103 : vector<1x40x80xf32> to vector<40x80xf32>
    %cst_90 = arith.constant dense<0.000000e+00> : vector<1x80xf32>
    %105 = tpu.matmul %102, %104, %cst_90 {dimension_numbers = #tpu.dot_dimension_numbers<[1], [0], [0], [1], [0, 0, 1, 1], [], []>} : vector<1x40xf32>, vector<40x80xf32>, vector<1x80xf32> -> vector<1x80xf32>
    %106 = arith.addf %101, %105 : vector<1x80xf32>
    %c0_91 = arith.constant 0 : index
    %c0_92 = arith.constant 0 : index
    %107 = vector.load %arg17[%c0_91, %c0_92] : memref<2x80xf32, #tpu.memory_space<vmem>>, vector<1x80xf32>
    tpu.vector_store %arg17[%c0_91, %c0_92], %106 {strides = array<i32>} : memref<2x80xf32, #tpu.memory_space<vmem>>, vector<1x80xf32>,
    %c1_93 = arith.constant 1 : index
    %c0_94 = arith.constant 0 : index
    %c0_95 = arith.constant 0 : index
    %108 = vector.load %arg1[%c1_93, %c0_94, %c0_95] : memref<2x28x28xf32, #tpu.memory_space<vmem>>, vector<1x28x28xf32>
    %109 = vector.shape_cast %108 : vector<1x28x28xf32> to vector<28x28xf32>
    %110 = vector.extract_strided_slice %109 {offsets = [0, 0], sizes = [24, 28], strides = [1, 1]} : vector<28x28xf32> to vector<24x28xf32>
    %c0_96 = arith.constant 0 : index
    %c0_97 = arith.constant 0 : index
    %c0_98 = arith.constant 0 : index
    %111 = vector.load %arg2[%c0_96, %c0_97, %c0_98] : memref<5x28x144xf32, #tpu.memory_space<vmem>>, vector<1x28x144xf32>
    %112 = vector.shape_cast %111 : vector<1x28x144xf32> to vector<28x144xf32>
    %cst_99 = arith.constant dense<0.000000e+00> : vector<24x144xf32>
    %113 = tpu.matmul %110, %112, %cst_99 {dimension_numbers = #tpu.dot_dimension_numbers<[1], [0], [0], [1], [0, 0, 1, 1], [], []>} : vector<24x28xf32>, vector<28x144xf32>, vector<24x144xf32> -> vector<24x144xf32>
    %114 = vector.extract_strided_slice %109 {offsets = [1, 0], sizes = [24, 28], strides = [1, 1]} : vector<28x28xf32> to vector<24x28xf32>
    %c1_100 = arith.constant 1 : index
    %c0_101 = arith.constant 0 : index
    %c0_102 = arith.constant 0 : index
    %115 = vector.load %arg2[%c1_100, %c0_101, %c0_102] : memref<5x28x144xf32, #tpu.memory_space<vmem>>, vector<1x28x144xf32>
    %116 = vector.shape_cast %115 : vector<1x28x144xf32> to vector<28x144xf32>
    %cst_103 = arith.constant dense<0.000000e+00> : vector<24x144xf32>
    %117 = tpu.matmul %114, %116, %cst_103 {dimension_numbers = #tpu.dot_dimension_numbers<[1], [0], [0], [1], [0, 0, 1, 1], [], []>} : vector<24x28xf32>, vector<28x144xf32>, vector<24x144xf32> -> vector<24x144xf32>
    %118 = arith.addf %113, %117 : vector<24x144xf32>
    %119 = vector.extract_strided_slice %109 {offsets = [2, 0], sizes = [24, 28], strides = [1, 1]} : vector<28x28xf32> to vector<24x28xf32>
    %c2_104 = arith.constant 2 : index
    %c0_105 = arith.constant 0 : index
    %c0_106 = arith.constant 0 : index
    %120 = vector.load %arg2[%c2_104, %c0_105, %c0_106] : memref<5x28x144xf32, #tpu.memory_space<vmem>>, vector<1x28x144xf32>
    %121 = vector.shape_cast %120 : vector<1x28x144xf32> to vector<28x144xf32>
    %cst_107 = arith.constant dense<0.000000e+00> : vector<24x144xf32>
    %122 = tpu.matmul %119, %121, %cst_107 {dimension_numbers = #tpu.dot_dimension_numbers<[1], [0], [0], [1], [0, 0, 1, 1], [], []>} : vector<24x28xf32>, vector<28x144xf32>, vector<24x144xf32> -> vector<24x144xf32>
    %123 = arith.addf %118, %122 : vector<24x144xf32>
    %124 = vector.extract_strided_slice %109 {offsets = [3, 0], sizes = [24, 28], strides = [1, 1]} : vector<28x28xf32> to vector<24x28xf32>
    %c3_108 = arith.constant 3 : index
    %c0_109 = arith.constant 0 : index
    %c0_110 = arith.constant 0 : index
    %125 = vector.load %arg2[%c3_108, %c0_109, %c0_110] : memref<5x28x144xf32, #tpu.memory_space<vmem>>, vector<1x28x144xf32>
    %126 = vector.shape_cast %125 : vector<1x28x144xf32> to vector<28x144xf32>
    %cst_111 = arith.constant dense<0.000000e+00> : vector<24x144xf32>
    %127 = tpu.matmul %124, %126, %cst_111 {dimension_numbers = #tpu.dot_dimension_numbers<[1], [0], [0], [1], [0, 0, 1, 1], [], []>} : vector<24x28xf32>, vector<28x144xf32>, vector<24x144xf32> -> vector<24x144xf32>
    %128 = arith.addf %123, %127 : vector<24x144xf32>
    %129 = vector.extract_strided_slice %109 {offsets = [4, 0], sizes = [24, 28], strides = [1, 1]} : vector<28x28xf32> to vector<24x28xf32>
    %c4_112 = arith.constant 4 : index
    %c0_113 = arith.constant 0 : index
    %c0_114 = arith.constant 0 : index
    %130 = vector.load %arg2[%c4_112, %c0_113, %c0_114] : memref<5x28x144xf32, #tpu.memory_space<vmem>>, vector<1x28x144xf32>
    %131 = vector.shape_cast %130 : vector<1x28x144xf32> to vector<28x144xf32>
    %cst_115 = arith.constant dense<0.000000e+00> : vector<24x144xf32>
    %132 = tpu.matmul %129, %131, %cst_115 {dimension_numbers = #tpu.dot_dimension_numbers<[1], [0], [0], [1], [0, 0, 1, 1], [], []>} : vector<24x28xf32>, vector<28x144xf32>, vector<24x144xf32> -> vector<24x144xf32>
    %133 = arith.addf %128, %132 : vector<24x144xf32>
    %c0_116 = arith.constant 0 : index
    %c0_117 = arith.constant 0 : index
    %134 = vector.load %arg3[%c0_116, %c0_117] : memref<1x144xf32, #tpu.memory_space<vmem>>, vector<1x144xf32>
    %135 = vector.broadcast %134 : vector<1x144xf32> to vector<24x144xf32>
    %136 = arith.addf %133, %135 : vector<24x144xf32>
    %cst_118 = arith.constant 0.000000e+00 : f32
    %137 = vector.broadcast %cst_118 : f32 to vector<24x144xf32>
    %138 = arith.maximumf %136, %137 : vector<24x144xf32>
    %c0_119 = arith.constant 0 : index
    %c0_120 = arith.constant 0 : index
    %c0_121 = arith.constant 0 : index
    %139 = vector.load %arg4[%c0_119, %c0_120, %c0_121] : memref<2x12x24xf32, #tpu.memory_space<vmem>>, vector<1x12x24xf32>
    %140 = vector.shape_cast %139 : vector<1x12x24xf32> to vector<12x24xf32>
    %cst_122 = arith.constant dense<0.000000e+00> : vector<12x144xf32>
    %141 = tpu.matmul %140, %138, %cst_122 {dimension_numbers = #tpu.dot_dimension_numbers<[1], [0], [0], [1], [0, 0, 1, 1], [], []>} : vector<12x24xf32>, vector<24x144xf32>, vector<12x144xf32> -> vector<12x144xf32>
    %c1_123 = arith.constant 1 : index
    %c0_124 = arith.constant 0 : index
    %c0_125 = arith.constant 0 : index
    %142 = vector.load %arg4[%c1_123, %c0_124, %c0_125] : memref<2x12x24xf32, #tpu.memory_space<vmem>>, vector<1x12x24xf32>
    %143 = vector.shape_cast %142 : vector<1x12x24xf32> to vector<12x24xf32>
    %cst_126 = arith.constant dense<0.000000e+00> : vector<12x144xf32>
    %144 = tpu.matmul %143, %138, %cst_126 {dimension_numbers = #tpu.dot_dimension_numbers<[1], [0], [0], [1], [0, 0, 1, 1], [], []>} : vector<12x24xf32>, vector<24x144xf32>, vector<12x144xf32> -> vector<12x144xf32>
    %145 = arith.maximumf %141, %144 : vector<12x144xf32>
    %c0_127 = arith.constant 0 : index
    %c0_128 = arith.constant 0 : index
    %c0_129 = arith.constant 0 : index
    %146 = vector.load %arg5[%c0_127, %c0_128, %c0_129] : memref<2x144x72xf32, #tpu.memory_space<vmem>>, vector<1x144x72xf32>
    %147 = vector.shape_cast %146 : vector<1x144x72xf32> to vector<144x72xf32>
    %cst_130 = arith.constant dense<0.000000e+00> : vector<12x72xf32>
    %148 = tpu.matmul %145, %147, %cst_130 {dimension_numbers = #tpu.dot_dimension_numbers<[1], [0], [0], [1], [0, 0, 1, 1], [], []>} : vector<12x144xf32>, vector<144x72xf32>, vector<12x72xf32> -> vector<12x72xf32>
    %c1_131 = arith.constant 1 : index
    %c0_132 = arith.constant 0 : index
    %c0_133 = arith.constant 0 : index
    %149 = vector.load %arg5[%c1_131, %c0_132, %c0_133] : memref<2x144x72xf32, #tpu.memory_space<vmem>>, vector<1x144x72xf32>
    %150 = vector.shape_cast %149 : vector<1x144x72xf32> to vector<144x72xf32>
    %cst_134 = arith.constant dense<0.000000e+00> : vector<12x72xf32>
    %151 = tpu.matmul %145, %150, %cst_134 {dimension_numbers = #tpu.dot_dimension_numbers<[1], [0], [0], [1], [0, 0, 1, 1], [], []>} : vector<12x144xf32>, vector<144x72xf32>, vector<12x72xf32> -> vector<12x72xf32>
    %152 = arith.maximumf %148, %151 : vector<12x72xf32>
    %153 = vector.extract_strided_slice %152 {offsets = [0, 0], sizes = [8, 72], strides = [1, 1]} : vector<12x72xf32> to vector<8x72xf32>
    %c0_135 = arith.constant 0 : index
    %c0_136 = arith.constant 0 : index
    %c0_137 = arith.constant 0 : index
    %154 = vector.load %arg6[%c0_135, %c0_136, %c0_137] : memref<5x72x80xf32, #tpu.memory_space<vmem>>, vector<1x72x80xf32>
    %155 = vector.shape_cast %154 : vector<1x72x80xf32> to vector<72x80xf32>
    %cst_138 = arith.constant dense<0.000000e+00> : vector<8x80xf32>
    %156 = tpu.matmul %153, %155, %cst_138 {dimension_numbers = #tpu.dot_dimension_numbers<[1], [0], [0], [1], [0, 0, 1, 1], [], []>} : vector<8x72xf32>, vector<72x80xf32>, vector<8x80xf32> -> vector<8x80xf32>
    %157 = vector.extract_strided_slice %152 {offsets = [1, 0], sizes = [8, 72], strides = [1, 1]} : vector<12x72xf32> to vector<8x72xf32>
    %c1_139 = arith.constant 1 : index
    %c0_140 = arith.constant 0 : index
    %c0_141 = arith.constant 0 : index
    %158 = vector.load %arg6[%c1_139, %c0_140, %c0_141] : memref<5x72x80xf32, #tpu.memory_space<vmem>>, vector<1x72x80xf32>
    %159 = vector.shape_cast %158 : vector<1x72x80xf32> to vector<72x80xf32>
    %cst_142 = arith.constant dense<0.000000e+00> : vector<8x80xf32>
    %160 = tpu.matmul %157, %159, %cst_142 {dimension_numbers = #tpu.dot_dimension_numbers<[1], [0], [0], [1], [0, 0, 1, 1], [], []>} : vector<8x72xf32>, vector<72x80xf32>, vector<8x80xf32> -> vector<8x80xf32>
    %161 = arith.addf %156, %160 : vector<8x80xf32>
    %162 = vector.extract_strided_slice %152 {offsets = [2, 0], sizes = [8, 72], strides = [1, 1]} : vector<12x72xf32> to vector<8x72xf32>
    %c2_143 = arith.constant 2 : index
    %c0_144 = arith.constant 0 : index
    %c0_145 = arith.constant 0 : index
    %163 = vector.load %arg6[%c2_143, %c0_144, %c0_145] : memref<5x72x80xf32, #tpu.memory_space<vmem>>, vector<1x72x80xf32>
    %164 = vector.shape_cast %163 : vector<1x72x80xf32> to vector<72x80xf32>
    %cst_146 = arith.constant dense<0.000000e+00> : vector<8x80xf32>
    %165 = tpu.matmul %162, %164, %cst_146 {dimension_numbers = #tpu.dot_dimension_numbers<[1], [0], [0], [1], [0, 0, 1, 1], [], []>} : vector<8x72xf32>, vector<72x80xf32>, vector<8x80xf32> -> vector<8x80xf32>
    %166 = arith.addf %161, %165 : vector<8x80xf32>
    %167 = vector.extract_strided_slice %152 {offsets = [3, 0], sizes = [8, 72], strides = [1, 1]} : vector<12x72xf32> to vector<8x72xf32>
    %c3_147 = arith.constant 3 : index
    %c0_148 = arith.constant 0 : index
    %c0_149 = arith.constant 0 : index
    %168 = vector.load %arg6[%c3_147, %c0_148, %c0_149] : memref<5x72x80xf32, #tpu.memory_space<vmem>>, vector<1x72x80xf32>
    %169 = vector.shape_cast %168 : vector<1x72x80xf32> to vector<72x80xf32>
    %cst_150 = arith.constant dense<0.000000e+00> : vector<8x80xf32>
    %170 = tpu.matmul %167, %169, %cst_150 {dimension_numbers = #tpu.dot_dimension_numbers<[1], [0], [0], [1], [0, 0, 1, 1], [], []>} : vector<8x72xf32>, vector<72x80xf32>, vector<8x80xf32> -> vector<8x80xf32>
    %171 = arith.addf %166, %170 : vector<8x80xf32>
    %172 = vector.extract_strided_slice %152 {offsets = [4, 0], sizes = [8, 72], strides = [1, 1]} : vector<12x72xf32> to vector<8x72xf32>
    %c4_151 = arith.constant 4 : index
    %c0_152 = arith.constant 0 : index
    %c0_153 = arith.constant 0 : index
    %173 = vector.load %arg6[%c4_151, %c0_152, %c0_153] : memref<5x72x80xf32, #tpu.memory_space<vmem>>, vector<1x72x80xf32>
    %174 = vector.shape_cast %173 : vector<1x72x80xf32> to vector<72x80xf32>
    %cst_154 = arith.constant dense<0.000000e+00> : vector<8x80xf32>
    %175 = tpu.matmul %172, %174, %cst_154 {dimension_numbers = #tpu.dot_dimension_numbers<[1], [0], [0], [1], [0, 0, 1, 1], [], []>} : vector<8x72xf32>, vector<72x80xf32>, vector<8x80xf32> -> vector<8x80xf32>
    %176 = arith.addf %171, %175 : vector<8x80xf32>
    %c0_155 = arith.constant 0 : index
    %c0_156 = arith.constant 0 : index
    %177 = vector.load %arg7[%c0_155, %c0_156] : memref<1x80xf32, #tpu.memory_space<vmem>>, vector<1x80xf32>
    %178 = vector.broadcast %177 : vector<1x80xf32> to vector<8x80xf32>
    %179 = arith.addf %176, %178 : vector<8x80xf32>
    %cst_157 = arith.constant 0.000000e+00 : f32
    %180 = vector.broadcast %cst_157 : f32 to vector<8x80xf32>
    %181 = arith.maximumf %179, %180 : vector<8x80xf32>
    %c0_158 = arith.constant 0 : index
    %c0_159 = arith.constant 0 : index
    %c0_160 = arith.constant 0 : index
    %182 = vector.load %arg8[%c0_158, %c0_159, %c0_160] : memref<2x4x8xf32, #tpu.memory_space<vmem>>, vector<1x4x8xf32>
    %183 = vector.shape_cast %182 : vector<1x4x8xf32> to vector<4x8xf32>
    %cst_161 = arith.constant dense<0.000000e+00> : vector<4x80xf32>
    %184 = tpu.matmul %183, %181, %cst_161 {dimension_numbers = #tpu.dot_dimension_numbers<[1], [0], [0], [1], [0, 0, 1, 1], [], []>} : vector<4x8xf32>, vector<8x80xf32>, vector<4x80xf32> -> vector<4x80xf32>
    %c1_162 = arith.constant 1 : index
    %c0_163 = arith.constant 0 : index
    %c0_164 = arith.constant 0 : index
    %185 = vector.load %arg8[%c1_162, %c0_163, %c0_164] : memref<2x4x8xf32, #tpu.memory_space<vmem>>, vector<1x4x8xf32>
    %186 = vector.shape_cast %185 : vector<1x4x8xf32> to vector<4x8xf32>
    %cst_165 = arith.constant dense<0.000000e+00> : vector<4x80xf32>
    %187 = tpu.matmul %186, %181, %cst_165 {dimension_numbers = #tpu.dot_dimension_numbers<[1], [0], [0], [1], [0, 0, 1, 1], [], []>} : vector<4x8xf32>, vector<8x80xf32>, vector<4x80xf32> -> vector<4x80xf32>
    %188 = arith.maximumf %184, %187 : vector<4x80xf32>
    %c0_166 = arith.constant 0 : index
    %c0_167 = arith.constant 0 : index
    %c0_168 = arith.constant 0 : index
    %189 = vector.load %arg9[%c0_166, %c0_167, %c0_168] : memref<2x80x40xf32, #tpu.memory_space<vmem>>, vector<1x80x40xf32>
    %190 = vector.shape_cast %189 : vector<1x80x40xf32> to vector<80x40xf32>
    %cst_169 = arith.constant dense<0.000000e+00> : vector<4x40xf32>
    %191 = tpu.matmul %188, %190, %cst_169 {dimension_numbers = #tpu.dot_dimension_numbers<[1], [0], [0], [1], [0, 0, 1, 1], [], []>} : vector<4x80xf32>, vector<80x40xf32>, vector<4x40xf32> -> vector<4x40xf32>
    %c1_170 = arith.constant 1 : index
    %c0_171 = arith.constant 0 : index
    %c0_172 = arith.constant 0 : index
    %192 = vector.load %arg9[%c1_170, %c0_171, %c0_172] : memref<2x80x40xf32, #tpu.memory_space<vmem>>, vector<1x80x40xf32>
    %193 = vector.shape_cast %192 : vector<1x80x40xf32> to vector<80x40xf32>
    %cst_173 = arith.constant dense<0.000000e+00> : vector<4x40xf32>
    %194 = tpu.matmul %188, %193, %cst_173 {dimension_numbers = #tpu.dot_dimension_numbers<[1], [0], [0], [1], [0, 0, 1, 1], [], []>} : vector<4x80xf32>, vector<80x40xf32>, vector<4x40xf32> -> vector<4x40xf32>
    %195 = arith.maximumf %191, %194 : vector<4x40xf32>
    %196 = vector.extract_strided_slice %195 {offsets = [0, 0], sizes = [1, 40], strides = [1, 1]} : vector<4x40xf32> to vector<1x40xf32>
    %c0_174 = arith.constant 0 : index
    %c0_175 = arith.constant 0 : index
    %c0_176 = arith.constant 0 : index
    %197 = vector.load %arg10[%c0_174, %c0_175, %c0_176] : memref<4x40x80xf32, #tpu.memory_space<vmem>>, vector<1x40x80xf32>
    %198 = vector.shape_cast %197 : vector<1x40x80xf32> to vector<40x80xf32>
    %cst_177 = arith.constant dense<0.000000e+00> : vector<1x80xf32>
    %199 = tpu.matmul %196, %198, %cst_177 {dimension_numbers = #tpu.dot_dimension_numbers<[1], [0], [0], [1], [0, 0, 1, 1], [], []>} : vector<1x40xf32>, vector<40x80xf32>, vector<1x80xf32> -> vector<1x80xf32>
    %200 = vector.extract_strided_slice %195 {offsets = [1, 0], sizes = [1, 40], strides = [1, 1]} : vector<4x40xf32> to vector<1x40xf32>
    %c1_178 = arith.constant 1 : index
    %c0_179 = arith.constant 0 : index
    %c0_180 = arith.constant 0 : index
    %201 = vector.load %arg10[%c1_178, %c0_179, %c0_180] : memref<4x40x80xf32, #tpu.memory_space<vmem>>, vector<1x40x80xf32>
    %202 = vector.shape_cast %201 : vector<1x40x80xf32> to vector<40x80xf32>
    %cst_181 = arith.constant dense<0.000000e+00> : vector<1x80xf32>
    %203 = tpu.matmul %200, %202, %cst_181 {dimension_numbers = #tpu.dot_dimension_numbers<[1], [0], [0], [1], [0, 0, 1, 1], [], []>} : vector<1x40xf32>, vector<40x80xf32>, vector<1x80xf32> -> vector<1x80xf32>
    %204 = arith.addf %199, %203 : vector<1x80xf32>
    %205 = vector.extract_strided_slice %195 {offsets = [2, 0], sizes = [1, 40], strides = [1, 1]} : vector<4x40xf32> to vector<1x40xf32>
    %c2_182 = arith.constant 2 : index
    %c0_183 = arith.constant 0 : index
    %c0_184 = arith.constant 0 : index
    %206 = vector.load %arg10[%c2_182, %c0_183, %c0_184] : memref<4x40x80xf32, #tpu.memory_space<vmem>>, vector<1x40x80xf32>
    %207 = vector.shape_cast %206 : vector<1x40x80xf32> to vector<40x80xf32>
    %cst_185 = arith.constant dense<0.000000e+00> : vector<1x80xf32>
    %208 = tpu.matmul %205, %207, %cst_185 {dimension_numbers = #tpu.dot_dimension_numbers<[1], [0], [0], [1], [0, 0, 1, 1], [], []>} : vector<1x40xf32>, vector<40x80xf32>, vector<1x80xf32> -> vector<1x80xf32>
    %209 = arith.addf %204, %208 : vector<1x80xf32>
    %210 = vector.extract_strided_slice %195 {offsets = [3, 0], sizes = [1, 40], strides = [1, 1]} : vector<4x40xf32> to vector<1x40xf32>
    %c3_186 = arith.constant 3 : index
    %c0_187 = arith.constant 0 : index
    %c0_188 = arith.constant 0 : index
    %211 = vector.load %arg10[%c3_186, %c0_187, %c0_188] : memref<4x40x80xf32, #tpu.memory_space<vmem>>, vector<1x40x80xf32>
    %212 = vector.shape_cast %211 : vector<1x40x80xf32> to vector<40x80xf32>
    %cst_189 = arith.constant dense<0.000000e+00> : vector<1x80xf32>
    %213 = tpu.matmul %210, %212, %cst_189 {dimension_numbers = #tpu.dot_dimension_numbers<[1], [0], [0], [1], [0, 0, 1, 1], [], []>} : vector<1x40xf32>, vector<40x80xf32>, vector<1x80xf32> -> vector<1x80xf32>
    %214 = arith.addf %209, %213 : vector<1x80xf32>
    %c1_190 = arith.constant 1 : index
    %c0_191 = arith.constant 0 : index
    %215 = vector.load %arg17[%c1_190, %c0_191] : memref<2x80xf32, #tpu.memory_space<vmem>>, vector<1x80xf32>
    tpu.vector_store %arg17[%c1_190, %c0_191], %214 {strides = array<i32>} : memref<2x80xf32, #tpu.memory_space<vmem>>, vector<1x80xf32>,
    %c0_192 = arith.constant 0 : index
    %c0_193 = arith.constant 0 : index
    %216 = vector.load %arg17[%c0_192, %c0_193] : memref<2x80xf32, #tpu.memory_space<vmem>>, vector<2x80xf32>
    %c0_194 = arith.constant 0 : index
    %c0_195 = arith.constant 0 : index
    %217 = vector.load %arg11[%c0_194, %c0_195] : memref<1x80xf32, #tpu.memory_space<vmem>>, vector<1x80xf32>
    %218 = vector.broadcast %217 : vector<1x80xf32> to vector<2x80xf32>
    %219 = arith.addf %216, %218 : vector<2x80xf32>
    %cst_196 = arith.constant 0.000000e+00 : f32
    %220 = vector.broadcast %cst_196 : f32 to vector<2x80xf32>
    %221 = arith.maximumf %219, %220 : vector<2x80xf32>
    %c0_197 = arith.constant 0 : index
    %c0_198 = arith.constant 0 : index
    %222 = vector.load %arg12[%c0_197, %c0_198] : memref<80x30xf32, #tpu.memory_space<vmem>>, vector<80x30xf32>
    %cst_199 = arith.constant dense<0.000000e+00> : vector<2x30xf32>
    %223 = tpu.matmul %221, %222, %cst_199 {dimension_numbers = #tpu.dot_dimension_numbers<[1], [0], [0], [1], [0, 0, 1, 1], [], []>} : vector<2x80xf32>, vector<80x30xf32>, vector<2x30xf32> -> vector<2x30xf32>
    %c0_200 = arith.constant 0 : index
    %c0_201 = arith.constant 0 : index
    %224 = vector.load %arg13[%c0_200, %c0_201] : memref<1x30xf32, #tpu.memory_space<vmem>>, vector<1x30xf32>
    %225 = vector.broadcast %224 : vector<1x30xf32> to vector<2x30xf32>
    %226 = arith.addf %223, %225 : vector<2x30xf32>
    %cst_202 = arith.constant 0.000000e+00 : f32
    %227 = vector.broadcast %cst_202 : f32 to vector<2x30xf32>
    %228 = arith.maximumf %226, %227 : vector<2x30xf32>
    %c0_203 = arith.constant 0 : index
    %c0_204 = arith.constant 0 : index
    %229 = vector.load %arg14[%c0_203, %c0_204] : memref<30x128xf32, #tpu.memory_space<vmem>>, vector<30x128xf32>
    %cst_205 = arith.constant dense<0.000000e+00> : vector<2x128xf32>
    %230 = tpu.matmul %228, %229, %cst_205 {dimension_numbers = #tpu.dot_dimension_numbers<[1], [0], [0], [1], [0, 0, 1, 1], [], []>} : vector<2x30xf32>, vector<30x128xf32>, vector<2x128xf32> -> vector<2x128xf32>
    %c0_206 = arith.constant 0 : index
    %c0_207 = arith.constant 0 : index
    %231 = vector.load %arg15[%c0_206, %c0_207] : memref<1x128xf32, #tpu.memory_space<vmem>>, vector<1x128xf32>
    %232 = vector.broadcast %231 : vector<1x128xf32> to vector<2x128xf32>
    %233 = arith.addf %230, %232 : vector<2x128xf32>
    %c0_208 = arith.constant 0 : index
    %c0_209 = arith.constant 0 : index
    %234 = vector.load %arg16[%c0_208, %c0_209] : memref<2x128xf32, #tpu.memory_space<vmem>>, vector<2x128xf32>
    tpu.vector_store %arg16[%c0_208, %c0_209], %233 {strides = array<i32>} : memref<2x128xf32, #tpu.memory_space<vmem>>, vector<2x128xf32>,
    return
  }
  func.func @transform_0(%arg0: i32) -> (i32, i32, i32) {
    %c0_i32 = arith.constant 0 : i32
    %c0_i32_0 = arith.constant 0 : i32
    %c0_i32_1 = arith.constant 0 : i32
    return %arg0, %c0_i32, %c0_i32_0 : i32, i32, i32
  }
  func.func @transform_1(%arg0: i32) -> (i32, i32, i32) {
    %c0_i32 = arith.constant 0 : i32
    %c0_i32_0 = arith.constant 0 : i32
    %c0_i32_1 = arith.constant 0 : i32
    %c0_i32_2 = arith.constant 0 : i32
    return %c0_i32, %c0_i32_0, %c0_i32_1 : i32, i32, i32
  }
  func.func @transform_2(%arg0: i32) -> (i32, i32) {
    %c0_i32 = arith.constant 0 : i32
    %c0_i32_0 = arith.constant 0 : i32
    %c0_i32_1 = arith.constant 0 : i32
    return %c0_i32, %c0_i32_0 : i32, i32
  }
  func.func @transform_3(%arg0: i32) -> (i32, i32, i32) {
    %c0_i32 = arith.constant 0 : i32
    %c0_i32_0 = arith.constant 0 : i32
    %c0_i32_1 = arith.constant 0 : i32
    %c0_i32_2 = arith.constant 0 : i32
    return %c0_i32, %c0_i32_0, %c0_i32_1 : i32, i32, i32
  }
  func.func @transform_4(%arg0: i32) -> (i32, i32, i32) {
    %c0_i32 = arith.constant 0 : i32
    %c0_i32_0 = arith.constant 0 : i32
    %c0_i32_1 = arith.constant 0 : i32
    %c0_i32_2 = arith.constant 0 : i32
    return %c0_i32, %c0_i32_0, %c0_i32_1 : i32, i32, i32
  }
  func.func @transform_5(%arg0: i32) -> (i32, i32, i32) {
    %c0_i32 = arith.constant 0 : i32
    %c0_i32_0 = arith.constant 0 : i32
    %c0_i32_1 = arith.constant 0 : i32
    %c0_i32_2 = arith.constant 0 : i32
    return %c0_i32, %c0_i32_0, %c0_i32_1 : i32, i32, i32
  }
  func.func @transform_6(%arg0: i32) -> (i32, i32) {
    %c0_i32 = arith.constant 0 : i32
    %c0_i32_0 = arith.constant 0 : i32
    %c0_i32_1 = arith.constant 0 : i32
    return %c0_i32, %c0_i32_0 : i32, i32
  }
  func.func @transform_7(%arg0: i32) -> (i32, i32, i32) {
    %c0_i32 = arith.constant 0 : i32
    %c0_i32_0 = arith.constant 0 : i32
    %c0_i32_1 = arith.constant 0 : i32
    %c0_i32_2 = arith.constant 0 : i32
    return %c0_i32, %c0_i32_0, %c0_i32_1 : i32, i32, i32
  }
  func.func @transform_8(%arg0: i32) -> (i32, i32, i32) {
    %c0_i32 = arith.constant 0 : i32
    %c0_i32_0 = arith.constant 0 : i32
    %c0_i32_1 = arith.constant 0 : i32
    %c0_i32_2 = arith.constant 0 : i32
    return %c0_i32, %c0_i32_0, %c0_i32_1 : i32, i32, i32
  }
  func.func @transform_9(%arg0: i32) -> (i32, i32, i32) {
    %c0_i32 = arith.constant 0 : i32
    %c0_i32_0 = arith.constant 0 : i32
    %c0_i32_1 = arith.constant 0 : i32
    %c0_i32_2 = arith.constant 0 : i32
    return %c0_i32, %c0_i32_0, %c0_i32_1 : i32, i32, i32
  }
  func.func @transform_10(%arg0: i32) -> (i32, i32) {
    %c0_i32 = arith.constant 0 : i32
    %c0_i32_0 = arith.constant 0 : i32
    %c0_i32_1 = arith.constant 0 : i32
    return %c0_i32, %c0_i32_0 : i32, i32
  }
  func.func @transform_11(%arg0: i32) -> (i32, i32) {
    %c0_i32 = arith.constant 0 : i32
    %c0_i32_0 = arith.constant 0 : i32
    %c0_i32_1 = arith.constant 0 : i32
    return %c0_i32, %c0_i32_0 : i32, i32
  }
  func.func @transform_12(%arg0: i32) -> (i32, i32) {
    %c0_i32 = arith.constant 0 : i32
    %c0_i32_0 = arith.constant 0 : i32
    %c0_i32_1 = arith.constant 0 : i32
    return %c0_i32, %c0_i32_0 : i32, i32
  }
  func.func @transform_13(%arg0: i32) -> (i32, i32) {
    %c0_i32 = arith.constant 0 : i32
    %c0_i32_0 = arith.constant 0 : i32
    %c0_i32_1 = arith.constant 0 : i32
    return %c0_i32, %c0_i32_0 : i32, i32
  }
  func.func @transform_14(%arg0: i32) -> (i32, i32) {
    %c0_i32 = arith.constant 0 : i32
    %c0_i32_0 = arith.constant 0 : i32
    %c0_i32_1 = arith.constant 0 : i32
    return %c0_i32, %c0_i32_0 : i32, i32
  }
  func.func @transform_15(%arg0: i32) -> (i32, i32) {
    %c0_i32 = arith.constant 0 : i32
    %c0_i32_0 = arith.constant 0 : i32
    return %arg0, %c0_i32 : i32, i32
  }
}

</mosaic_0001>

<llo_original>
// kernel: projnet_forward.1
$region0: #{projnet_forward.1}
  #allocation0 [shape = 'u32[]', space=smem, size = 0x4, offset = 0x4, fixed_abs, tag = 'smem constant byte address 0x4 - core index']
  #allocation1 [shape = 'u32[144,128]{1,0:T(1,128)}', space=vmem, size = 0x12000, scoped, tag = 'internal scratch']
  #allocation2 [shape = 'f32[2,80]{1,0:T(2,128)}', space=vmem, size = 0x400, scoped, tag = 'scratch operand']
  %s0 = inlined_call_operand.vmem [shape: f32[2,28,28], index: 0, kind: input, shape index: {}]
  %s1 = inlined_call_operand.hbm [shape: f32[5,28,144], index: 1, kind: input, shape index: {}]
  %s2 = inlined_call_operand.vmem [shape: f32[1,144], index: 2, kind: input, shape index: {}]
  %s3 = inlined_call_operand.vmem [shape: f32[2,12,24], index: 3, kind: input, shape index: {}]
  %s4 = inlined_call_operand.vmem [shape: f32[2,144,72], index: 4, kind: input, shape index: {}]
  %s5 = inlined_call_operand.vmem [shape: f32[5,72,80], index: 5, kind: input, shape index: {}]
  %s6 = inlined_call_operand.vmem [shape: f32[1,80], index: 6, kind: input, shape index: {}]
  %s7 = inlined_call_operand.vmem [shape: f32[2,4,8], index: 7, kind: input, shape index: {}]
  %s8 = inlined_call_operand.vmem [shape: f32[2,80,40], index: 8, kind: input, shape index: {}]
  %s9 = inlined_call_operand.hbm [shape: f32[4,40,80], index: 9, kind: input, shape index: {}]
  %s10 = inlined_call_operand.vmem [shape: f32[1,80], index: 10, kind: input, shape index: {}]
  %s11 = inlined_call_operand.vmem [shape: f32[80,30], index: 11, kind: input, shape index: {}]
  %s12 = inlined_call_operand.vmem [shape: f32[1,30], index: 12, kind: input, shape index: {}]
  %s13 = inlined_call_operand.vmem [shape: f32[30,128], index: 13, kind: input, shape index: {}]
  %s14 = inlined_call_operand.hbm [shape: f32[1,128], index: 14, kind: input, shape index: {}]
  %s15 = inlined_call_operand.hbm [shape: f32[2,128], index: 15, kind: output, shape index: {}]
  %s16 = sld [smem:[#allocation0]]
  $region82: #{projnet_forward.1} parent=0
    _
  %s18 = ssub.s32 1, %s16
  %s19 = scalar_select 0, %s18, %s16
  $region1: #{projnet_forward.1} parent=0
    #allocation3 [shape = 'u8[163840]{0}', space=vmem, size = 0x28000, scoped, tag = 'input window, operand 1, single buffered']
    #allocation4 [shape = 's32[1]{0}', space=sflag, size = 0x4, scoped, tag = 'scoped memory for projnet_forward.1']
    #allocation5 [shape = 's32[1]{0}', space=sflag, size = 0x4, scoped, tag = 'scoped memory for projnet_forward.1']
    #allocation6 [shape = 'u8[81920]{0}', space=vmem, size = 0x14000, scoped, tag = 'input window, operand 9, single buffered']
    #allocation7 [shape = 's32[1]{0}', space=sflag, size = 0x4, scoped, tag = 'scoped memory for projnet_forward.1']
    #allocation8 [shape = 'u8[512]{0}', space=vmem, size = 0x400, scoped, tag = 'input window, operand 14, single buffered']
    #allocation9 [shape = 'u8[1024]{0}', space=vmem, size = 0x400, scoped, tag = 'output window, operand 0, single buffered']
    %20 = vsyncpa [#allocation4], 0
    %21 = vsyncpa [#allocation7], 0
    %22 = vsyncpa [#allocation5], 0
    // Predicated region
    $region2: #{projnet_forward.1} parent=1 // pred_check
      _
    $region3: #{projnet_forward.1} parent=1 // pred_check_branch
      %24 = sbr.rel (0) target = $region5
    $region4: #{projnet_forward.1} parent=1 // pred_region
      _
    $region5: #{projnet_forward.1} parent=1 // pred_fallthru
      _
    // Predicated region
    $region6: #{projnet_forward.1} parent=1 // pred_check
      _
    $region7: #{projnet_forward.1} parent=1 // pred_check_branch
      %26 = sbr.rel (0) target = $region9
    $region8: #{projnet_forward.1} parent=1 // pred_region
      %s28 = ssub.s32 5120, 5120
      %29 = vsyncadd [#allocation4], %s28
      %s30 = sshll.u32 [#allocation3], 4
      %s31 = int_to_ptr.vmem [resolvable:$true] %s30
      %36 = dma.hbm_to_vmem [thread:$0]  %s1, 5120, %s31, [#allocation4], 256, 256, 16
    $region9: #{projnet_forward.1} parent=1 // pred_fallthru
      _
    // Predicated region
    $region10: #{projnet_forward.1} parent=1 // pred_check
      _
    $region11: #{projnet_forward.1} parent=1 // pred_check_branch
      %38 = sbr.rel (0) target = $region13
    $region12: #{projnet_forward.1} parent=1 // pred_region
      _
    $region13: #{projnet_forward.1} parent=1 // pred_fallthru
      _
    // Predicated region
    $region14: #{projnet_forward.1} parent=1 // pred_check
      _
    $region15: #{projnet_forward.1} parent=1 // pred_check_branch
      %40 = sbr.rel (0) target = $region17
    $region16: #{projnet_forward.1} parent=1 // pred_region
      _
    $region17: #{projnet_forward.1} parent=1 // pred_fallthru
      _
    // Predicated region
    $region18: #{projnet_forward.1} parent=1 // pred_check
      _
    $region19: #{projnet_forward.1} parent=1 // pred_check_branch
      %42 = sbr.rel (0) target = $region21
    $region20: #{projnet_forward.1} parent=1 // pred_region
      _
    $region21: #{projnet_forward.1} parent=1 // pred_fallthru
      _
    // Predicated region
    $region22: #{projnet_forward.1} parent=1 // pred_check
      _
    $region23: #{projnet_forward.1} parent=1 // pred_check_branch
      %44 = sbr.rel (0) target = $region25
    $region24: #{projnet_forward.1} parent=1 // pred_region
      _
    $region25: #{projnet_forward.1} parent=1 // pred_fallthru
      _
    // Predicated region
    $region26: #{projnet_forward.1} parent=1 // pred_check
      _
    $region27: #{projnet_forward.1} parent=1 // pred_check_branch
      %46 = sbr.rel (0) target = $region29
    $region28: #{projnet_forward.1} parent=1 // pred_region
      _
    $region29: #{projnet_forward.1} parent=1 // pred_fallthru
      _
    // Predicated region
    $region30: #{projnet_forward.1} parent=1 // pred_check
      _
    $region31: #{projnet_forward.1} parent=1 // pred_check_branch
      %48 = sbr.rel (0) target = $region33
    $region32: #{projnet_forward.1} parent=1 // pred_region
      _
    $region33: #{projnet_forward.1} parent=1 // pred_fallthru
      _
    // Predicated region
    $region34: #{projnet_forward.1} parent=1 // pred_check
      _
    $region35: #{projnet_forward.1} parent=1 // pred_check_branch
      %50 = sbr.rel (0) target = $region37
    $region36: #{projnet_forward.1} parent=1 // pred_region
      _
    $region37: #{projnet_forward.1} parent=1 // pred_fallthru
      _
    // Predicated region
    $region38: #{projnet_forward.1} parent=1 // pred_check
      _
    $region39: #{projnet_forward.1} parent=1 // pred_check_branch
      %52 = sbr.rel (0) target = $region41
    $region40: #{projnet_forward.1} parent=1 // pred_region
      %s54 = ssub.s32 2560, 2560
      %55 = vsyncadd [#allocation7], %s54
      %s56 = sshll.u32 [#allocation6], 4
      %s57 = int_to_ptr.vmem [resolvable:$true] %s56
      %62 = dma.hbm_to_vmem [thread:$0]  %s9, 2560, %s57, [#allocation7], 128, 128, 8
    $region41: #{projnet_forward.1} parent=1 // pred_fallthru
      _
    // Predicated region
    $region42: #{projnet_forward.1} parent=1 // pred_check
      _
    $region43: #{projnet_forward.1} parent=1 // pred_check_branch
      %64 = sbr.rel (0) target = $region45
    $region44: #{projnet_forward.1} parent=1 // pred_region
      _
    $region45: #{projnet_forward.1} parent=1 // pred_fallthru
      _
    // Predicated region
    $region46: #{projnet_forward.1} parent=1 // pred_check
      _
    $region47: #{projnet_forward.1} parent=1 // pred_check_branch
      %66 = sbr.rel (0) target = $region49
    $region48: #{projnet_forward.1} parent=1 // pred_region
      _
    $region49: #{projnet_forward.1} parent=1 // pred_fallthru
      _
    // Predicated region
    $region50: #{projnet_forward.1} parent=1 // pred_check
      _
    $region51: #{projnet_forward.1} parent=1 // pred_check_branch
      %68 = sbr.rel (0) target = $region53
    $region52: #{projnet_forward.1} parent=1 // pred_region
      _
    $region53: #{projnet_forward.1} parent=1 // pred_fallthru
      _
    // Predicated region
    $region54: #{projnet_forward.1} parent=1 // pred_check
      _
    $region55: #{projnet_forward.1} parent=1 // pred_check_branch
      %70 = sbr.rel (0) target = $region57
    $region56: #{projnet_forward.1} parent=1 // pred_region
      _
    $region57: #{projnet_forward.1} parent=1 // pred_fallthru
      _
    // Predicated region
    $region58: #{projnet_forward.1} parent=1 // pred_check
      _
    $region59: #{projnet_forward.1} parent=1 // pred_check_branch
      %72 = sbr.rel (0) target = $region61
    $region60: #{projnet_forward.1} parent=1 // pred_region
      %s74 = ssub.s32 16, 16
      %75 = vsyncadd [#allocation7], %s74
      %s77 = sshll.u32 [#allocation8], 4
      %s78 = int_to_ptr.vmem [resolvable:$true] %s77
      %80 = dma.hbm_to_vmem [thread:$0]  %s14, 16, %s78, [#allocation7]
    $region61: #{projnet_forward.1} parent=1 // pred_fallthru
      _
    // Predicated region
    $region62: #{projnet_forward.1} parent=1 // pred_check
      _
    $region63: #{projnet_forward.1} parent=1 // pred_check_branch
      %82 = sbr.rel (0) target = $region65
    $region64: #{projnet_forward.1} parent=1 // pred_region
      %83 = dma.done [#allocation4], 5120
    $region65: #{projnet_forward.1} parent=1 // pred_fallthru
      _
    // Predicated region
    $region66: #{projnet_forward.1} parent=1 // pred_check
      _
    $region67: #{projnet_forward.1} parent=1 // pred_check_branch
      %85 = sbr.rel (0) target = $region69
    $region68: #{projnet_forward.1} parent=1 // pred_region
      %86 = dma.done [#allocation7], 2560
    $region69: #{projnet_forward.1} parent=1 // pred_fallthru
      _
    // Predicated region
    $region70: #{projnet_forward.1} parent=1 // pred_check
      _
    $region71: #{projnet_forward.1} parent=1 // pred_check_branch
      %88 = sbr.rel (0) target = $region73
    $region72: #{projnet_forward.1} parent=1 // pred_region
      %89 = dma.done [#allocation7], 16
    $region73: #{projnet_forward.1} parent=1 // pred_fallthru
      _
    %v90 = vld [vmem:[%s0] sm:$0xff]
    %v91 = vld [vmem:[%s0 + $0x8] sm:$0xff]
    %v92 = vld [vmem:[%s0 + $0x10] sm:$0xff]
    %v93 = vld [vmem:[%s0 + $0x18] sm:$0xf]
    %v94 = vld [vmem:[#allocation3] sm:$0xff]
    %v95 = vld [vmem:[#allocation3 + $0x8] sm:$0xff]
    %v96 = vld [vmem:[#allocation3 + $0x10] sm:$0xff]
    %v97 = vld [vmem:[#allocation3 + $0x18] sm:$0xff]
    %v98 = vld [vmem:[#allocation3 + $0x20] sm:$0xff]
    %v99 = vld [vmem:[#allocation3 + $0x28] sm:$0xff]
    %v100 = vld [vmem:[#allocation3 + $0x30] sm:$0xf]
    %v101 = vld [vmem:[#allocation3 + $0x38] sm:$0xf]
    %s102 = scalar_lea.vmem [#allocation3], 64
    %v103 = vld [vmem:[%s102] sm:$0xff]
    %v104 = vld [vmem:[%s102 + $0x8] sm:$0xff]
    %v105 = vld [vmem:[%s102 + $0x10] sm:$0xff]
    %v106 = vld [vmem:[%s102 + $0x18] sm:$0xff]
    %v107 = vld [vmem:[%s102 + $0x20] sm:$0xff]
    %v108 = vld [vmem:[%s102 + $0x28] sm:$0xff]
    %v109 = vld [vmem:[%s102 + $0x30] sm:$0xf]
    %v110 = vld [vmem:[%s102 + $0x38] sm:$0xf]
    %vm115 = vcmask 1046528
    %v116 = vrot.slane %v90, 1
    %v117 = vrot.slane %v91, 1
    %v118 = vsel %vm115, %v116, %v117
    %v119 = vrot.slane %v92, 1
    %v120 = vsel %vm115, %v117, %v119
    %v121 = vrot.slane %v93, 1
    %v122 = vsel %vm115, %v119, %v121
    %vm123 = vcmask 228352
    %v124 = vsel %vm123, %v118, 0
    %v126 = vsel %vm123, %v120, 0
    %v128 = vsel %vm123, %v122, 0
    %vm130 = vcmask 1043456
    %v132 = vsel %vm130, %v109, 0
    %v135 = vsel %vm130, %v110, 0
    %137 = vmatprep.subr.mxu0 %v104
    %138 = vmatpush1.msra.mxu0 %v103
    %139 = vmatprep.subr.mxu0 %v106
    %140 = vmatpush1.msra.mxu0 %v105
    %141 = vmatprep.subr.mxu0 %v108
    %142 = vmatpush1.msra.mxu0 %v107
    %143 = vmatprep.subr.mxu0 %v135
    %144 = vmatpush1.msra.mxu0 %v132
    %145 = vmatprep.subr.mxu0 0.0
    %146 = vmatpush1.msra.mxu0 0.0
    %147 = vmatprep.subr.mxu0 0.0
    %148 = vmatpush1.msra.mxu0 0.0
    %149 = vmatprep.subr.mxu0 0.0
    %150 = vmatpush1.msra.mxu0 0.0
    %151 = vmatprep.subr.mxu0 0.0
    %152 = vmatpush1.msra.mxu0 0.0
    %153 = vmatprep.subr.mxu0 0.0
    %154 = vmatpush1.msra.mxu0 0.0
    %155 = vmatprep.subr.mxu0 0.0
    %156 = vmatpush1.msra.mxu0 0.0
    %157 = vmatprep.subr.mxu0 0.0
    %158 = vmatpush1.msra.mxu0 0.0
    %159 = vmatprep.subr.mxu0 0.0
    %160 = vmatpush1.msra.mxu0 0.0
    %161 = vmatprep.subr.mxu0 0.0
    %162 = vmatpush1.msra.mxu0 0.0
    %163 = vmatprep.subr.mxu0 0.0
    %164 = vmatpush1.msra.mxu0 0.0
    %165 = vmatprep.subr.mxu0 0.0
    %166 = vmatpush1.msra.mxu0 0.0
    %167 = vmatprep.subr.mxu0 0.0
    %168 = vmatpush1.msra.mxu0 0.0
    %169 = vmatprep.subr.mxu0 0.0
    %170 = vmatpush1.msra.mxu0 0.0
    %171 = vmatprep.subr.mxu0 0.0
    %172 = vmatpush1.msra.mxu0 0.0
    %173 = vmatprep.subr.mxu0 0.0
    %174 = vmatpush1.msra.mxu0 0.0
    %175 = vmatprep.subr.mxu0 0.0
    %176 = vmatpush1.msra.mxu0 0.0
    %177 = vmatprep.subr.mxu0 0.0
    %178 = vmatpush1.msra.mxu0 0.0
    %179 = vmatprep.subr.mxu0 0.0
    %180 = vmatpush1.msra.mxu0 0.0
    %181 = vmatprep.subr.mxu0 0.0
    %182 = vmatpush1.msra.mxu0 0.0
    %183 = vmatprep.subr.mxu0 0.0
    %184 = vmatpush1.msra.mxu0 0.0
    %185 = vmatprep.subr.mxu0 0.0
    %186 = vmatpush1.msra.mxu0 0.0
    %187 = vmatprep.subr.mxu0 0.0
    %188 = vmatpush1.msra.mxu0 0.0
    %189 = vmatprep.subr.mxu0 0.0
    %190 = vmatpush1.msra.mxu0 0.0
    %191 = vmatprep.subr.mxu0 0.0
    %192 = vmatpush1.msra.mxu0 0.0
    %193 = vmatprep.subr.mxu0 0.0
    %194 = vmatpush1.msra.mxu0 0.0
    %195 = vmatprep.subr.mxu0 0.0
    %196 = vmatpush1.msra.mxu0 0.0
    %197 = vmatprep.subr.mxu0 0.0
    %198 = vmatpush1.msra.mxu0 0.0
    %199 = vmatprep.subr.mxu0 0.0
    %200 = vmatpush1.msra.mxu0 0.0
    %201 = vmatprep.mubr.f32.mxu0 0.0
    %202 = vmatmul.mubr.f32.gmra.mrb[0].mxu0 %v124
    %v203 = vpop.f32.mrb[0].mxu0
    %v204 = vadd.f32 0.0, %v203
    %v205 = vpop.f32.mrb[0].mxu0
    %v206 = vadd.f32 0.0, %v205
    %207 = vmatprep.mubr.f32.mxu0 0.0
    %208 = vmatmul.mubr.f32.gmra.mrb[0].mxu0 %v126
    %v209 = vpop.f32.mrb[0].mxu0
    %v210 = vadd.f32 0.0, %v209
    %v211 = vpop.f32.mrb[0].mxu0
    %v212 = vadd.f32 0.0, %v211
    %213 = vmatprep.mubr.f32.mxu0 0.0
    %214 = vmatmul.mubr.f32.gmra.mrb[0].mxu0 %v128
    %v215 = vpop.f32.mrb[0].mxu0
    %v216 = vadd.f32 0.0, %v215
    %v217 = vpop.f32.mrb[0].mxu0
    %v218 = vadd.f32 0.0, %v217
    %219 = vdwg.mxu0
    %v220 = vsel %vm123, %v90, 0
    %v222 = vsel %vm123, %v91, 0
    %v224 = vsel %vm123, %v92, 0
    %v227 = vsel %vm130, %v100, 0
    %v230 = vsel %vm130, %v101, 0
    %232 = vmatprep.subr.mxu0 %v95
    %233 = vmatpush1.msra.mxu0 %v94
    %234 = vmatprep.subr.mxu0 %v97
    %235 = vmatpush1.msra.mxu0 %v96
    %236 = vmatprep.subr.mxu0 %v99
    %237 = vmatpush1.msra.mxu0 %v98
    %238 = vmatprep.subr.mxu0 %v230
    %239 = vmatpush1.msra.mxu0 %v227
    %240 = vmatprep.subr.mxu0 0.0
    %241 = vmatpush1.msra.mxu0 0.0
    %242 = vmatprep.subr.mxu0 0.0
    %243 = vmatpush1.msra.mxu0 0.0
    %244 = vmatprep.subr.mxu0 0.0
    %245 = vmatpush1.msra.mxu0 0.0
    %246 = vmatprep.subr.mxu0 0.0
    %247 = vmatpush1.msra.mxu0 0.0
    %248 = vmatprep.subr.mxu0 0.0
    %249 = vmatpush1.msra.mxu0 0.0
    %250 = vmatprep.subr.mxu0 0.0
    %251 = vmatpush1.msra.mxu0 0.0
    %252 = vmatprep.subr.mxu0 0.0
    %253 = vmatpush1.msra.mxu0 0.0
    %254 = vmatprep.subr.mxu0 0.0
    %255 = vmatpush1.msra.mxu0 0.0
    %256 = vmatprep.subr.mxu0 0.0
    %257 = vmatpush1.msra.mxu0 0.0
    %258 = vmatprep.subr.mxu0 0.0
    %259 = vmatpush1.msra.mxu0 0.0
    %260 = vmatprep.subr.mxu0 0.0
    %261 = vmatpush1.msra.mxu0 0.0
    %262 = vmatprep.subr.mxu0 0.0
    %263 = vmatpush1.msra.mxu0 0.0
    %264 = vmatprep.subr.mxu0 0.0
    %265 = vmatpush1.msra.mxu0 0.0
    %266 = vmatprep.subr.mxu0 0.0
    %267 = vmatpush1.msra.mxu0 0.0
    %268 = vmatprep.subr.mxu0 0.0
    %269 = vmatpush1.msra.mxu0 0.0
    %270 = vmatprep.subr.mxu0 0.0
    %271 = vmatpush1.msra.mxu0 0.0
    %272 = vmatprep.subr.mxu0 0.0
    %273 = vmatpush1.msra.mxu0 0.0
    %274 = vmatprep.subr.mxu0 0.0
    %275 = vmatpush1.msra.mxu0 0.0
    %276 = vmatprep.subr.mxu0 0.0
    %277 = vmatpush1.msra.mxu0 0.0
    %278 = vmatprep.subr.mxu0 0.0
    %279 = vmatpush1.msra.mxu0 0.0
    %280 = vmatprep.subr.mxu0 0.0
    %281 = vmatpush1.msra.mxu0 0.0
    %282 = vmatprep.subr.mxu0 0.0
    %283 = vmatpush1.msra.mxu0 0.0
    %284 = vmatprep.subr.mxu0 0.0
    %285 = vmatpush1.msra.mxu0 0.0
    %286 = vmatprep.subr.mxu0 0.0
    %287 = vmatpush1.msra.mxu0 0.0
    %288 = vmatprep.subr.mxu0 0.0
    %289 = vmatpush1.msra.mxu0 0.0
    %290 = vmatprep.subr.mxu0 0.0
    %291 = vmatpush1.msra.mxu0 0.0
    %292 = vmatprep.subr.mxu0 0.0
    %293 = vmatpush1.msra.mxu0 0.0
    %294 = vmatprep.subr.mxu0 0.0
    %295 = vmatpush1.msra.mxu0 0.0
    %296 = vmatprep.mubr.f32.mxu0 0.0
    %297 = vmatmul.mubr.f32.gmra.mrb[0].mxu0 %v220
    %v298 = vpop.f32.mrb[0].mxu0
    %v299 = vadd.f32 %v204, %v298
    %v300 = vpop.f32.mrb[0].mxu0
    %v301 = vadd.f32 %v206, %v300
    %302 = vmatprep.mubr.f32.mxu0 0.0
    %303 = vmatmul.mubr.f32.gmra.mrb[0].mxu0 %v222
    %v304 = vpop.f32.mrb[0].mxu0
    %v305 = vadd.f32 %v210, %v304
    %v306 = vpop.f32.mrb[0].mxu0
    %v307 = vadd.f32 %v212, %v306
    %308 = vmatprep.mubr.f32.mxu0 0.0
    %309 = vmatmul.mubr.f32.gmra.mrb[0].mxu0 %v224
    %v310 = vpop.f32.mrb[0].mxu0
    %v311 = vadd.f32 %v216, %v310
    %v312 = vpop.f32.mrb[0].mxu0
    %v313 = vadd.f32 %v218, %v312
    %314 = vdwg.mxu0
    %s315 = scalar_lea.vmem [#allocation3], 128
    %v316 = vld [vmem:[%s315] sm:$0xff]
    %v317 = vld [vmem:[%s315 + $0x8] sm:$0xff]
    %v318 = vld [vmem:[%s315 + $0x10] sm:$0xff]
    %v319 = vld [vmem:[%s315 + $0x18] sm:$0xff]
    %v320 = vld [vmem:[%s315 + $0x20] sm:$0xff]
    %v321 = vld [vmem:[%s315 + $0x28] sm:$0xff]
    %v322 = vld [vmem:[%s315 + $0x30] sm:$0xf]
    %v323 = vld [vmem:[%s315 + $0x38] sm:$0xf]
    %vm324 = vcmask 1045504
    %v325 = vrot.slane %v90, 2
    %v326 = vrot.slane %v91, 2
    %v327 = vsel %vm324, %v325, %v326
    %v328 = vrot.slane %v92, 2
    %v329 = vsel %vm324, %v326, %v328
    %v330 = vrot.slane %v93, 2
    %v331 = vsel %vm324, %v328, %v330
    %v332 = vsel %vm123, %v327, 0
    %v334 = vsel %vm123, %v329, 0
    %v336 = vsel %vm123, %v331, 0
    %v339 = vsel %vm130, %v322, 0
    %v342 = vsel %vm130, %v323, 0
    %344 = vmatprep.subr.mxu0 %v317
    %345 = vmatpush1.msra.mxu0 %v316
    %346 = vmatprep.subr.mxu0 %v319
    %347 = vmatpush1.msra.mxu0 %v318
    %348 = vmatprep.subr.mxu0 %v321
    %349 = vmatpush1.msra.mxu0 %v320
    %350 = vmatprep.subr.mxu0 %v342
    %351 = vmatpush1.msra.mxu0 %v339
    %352 = vmatprep.subr.mxu0 0.0
    %353 = vmatpush1.msra.mxu0 0.0
    %354 = vmatprep.subr.mxu0 0.0
    %355 = vmatpush1.msra.mxu0 0.0
    %356 = vmatprep.subr.mxu0 0.0
    %357 = vmatpush1.msra.mxu0 0.0
    %358 = vmatprep.subr.mxu0 0.0
    %359 = vmatpush1.msra.mxu0 0.0
    %360 = vmatprep.subr.mxu0 0.0
    %361 = vmatpush1.msra.mxu0 0.0
    %362 = vmatprep.subr.mxu0 0.0
    %363 = vmatpush1.msra.mxu0 0.0
    %364 = vmatprep.subr.mxu0 0.0
    %365 = vmatpush1.msra.mxu0 0.0
    %366 = vmatprep.subr.mxu0 0.0
    %367 = vmatpush1.msra.mxu0 0.0
    %368 = vmatprep.subr.mxu0 0.0
    %369 = vmatpush1.msra.mxu0 0.0
    %370 = vmatprep.subr.mxu0 0.0
    %371 = vmatpush1.msra.mxu0 0.0
    %372 = vmatprep.subr.mxu0 0.0
    %373 = vmatpush1.msra.mxu0 0.0
    %374 = vmatprep.subr.mxu0 0.0
    %375 = vmatpush1.msra.mxu0 0.0
    %376 = vmatprep.subr.mxu0 0.0
    %377 = vmatpush1.msra.mxu0 0.0
    %378 = vmatprep.subr.mxu0 0.0
    %379 = vmatpush1.msra.mxu0 0.0
    %380 = vmatprep.subr.mxu0 0.0
    %381 = vmatpush1.msra.mxu0 0.0
    %382 = vmatprep.subr.mxu0 0.0
    %383 = vmatpush1.msra.mxu0 0.0
    %384 = vmatprep.subr.mxu0 0.0
    %385 = vmatpush1.msra.mxu0 0.0
    %386 = vmatprep.subr.mxu0 0.0
    %387 = vmatpush1.msra.mxu0 0.0
    %388 = vmatprep.subr.mxu0 0.0
    %389 = vmatpush1.msra.mxu0 0.0
    %390 = vmatprep.subr.mxu0 0.0
    %391 = vmatpush1.msra.mxu0 0.0
    %392 = vmatprep.subr.mxu0 0.0
    %393 = vmatpush1.msra.mxu0 0.0
    %394 = vmatprep.subr.mxu0 0.0
    %395 = vmatpush1.msra.mxu0 0.0
    %396 = vmatprep.subr.mxu0 0.0
    %397 = vmatpush1.msra.mxu0 0.0
    %398 = vmatprep.subr.mxu0 0.0
    %399 = vmatpush1.msra.mxu0 0.0
    %400 = vmatprep.subr.mxu0 0.0
    %401 = vmatpush1.msra.mxu0 0.0
    %402 = vmatprep.subr.mxu0 0.0
    %403 = vmatpush1.msra.mxu0 0.0
    %404 = vmatprep.subr.mxu0 0.0
    %405 = vmatpush1.msra.mxu0 0.0
    %406 = vmatprep.subr.mxu0 0.0
    %407 = vmatpush1.msra.mxu0 0.0
    %408 = vmatprep.mubr.f32.mxu0 0.0
    %409 = vmatmul.mubr.f32.gmra.mrb[0].mxu0 %v332
    %v410 = vpop.f32.mrb[0].mxu0
    %v411 = vadd.f32 0.0, %v410
    %v412 = vpop.f32.mrb[0].mxu0
    %v413 = vadd.f32 0.0, %v412
    %414 = vmatprep.mubr.f32.mxu0 0.0
    %415 = vmatmul.mubr.f32.gmra.mrb[0].mxu0 %v334
    %v416 = vpop.f32.mrb[0].mxu0
    %v417 = vadd.f32 0.0, %v416
    %v418 = vpop.f32.mrb[0].mxu0
    %v419 = vadd.f32 0.0, %v418
    %420 = vmatprep.mubr.f32.mxu0 0.0
    %421 = vmatmul.mubr.f32.gmra.mrb[0].mxu0 %v336
    %v422 = vpop.f32.mrb[0].mxu0
    %v423 = vadd.f32 0.0, %v422
    %v424 = vpop.f32.mrb[0].mxu0
    %v425 = vadd.f32 0.0, %v424
    %426 = vdwg.mxu0
    %v427 = vadd.f32 %v299, %v411
    %v428 = vadd.f32 %v301, %v413
    %v429 = vadd.f32 %v305, %v417
    %v430 = vadd.f32 %v307, %v419
    %v431 = vadd.f32 %v311, %v423
    %v432 = vadd.f32 %v313, %v425
    %s433 = scalar_lea.vmem [#allocation3], 192
    %v434 = vld [vmem:[%s433] sm:$0xff]
    %v435 = vld [vmem:[%s433 + $0x8] sm:$0xff]
    %v436 = vld [vmem:[%s433 + $0x10] sm:$0xff]
    %v437 = vld [vmem:[%s433 + $0x18] sm:$0xff]
    %v438 = vld [vmem:[%s433 + $0x20] sm:$0xff]
    %v439 = vld [vmem:[%s433 + $0x28] sm:$0xff]
    %v440 = vld [vmem:[%s433 + $0x30] sm:$0xf]
    %v441 = vld [vmem:[%s433 + $0x38] sm:$0xf]
    %vm442 = vcmask 1044480
    %v443 = vrot.slane %v90, 3
    %v444 = vrot.slane %v91, 3
    %v445 = vsel %vm442, %v443, %v444
    %v446 = vrot.slane %v92, 3
    %v447 = vsel %vm442, %v444, %v446
    %v448 = vrot.slane %v93, 3
    %v449 = vsel %vm442, %v446, %v448
    %v450 = vsel %vm123, %v445, 0
    %v452 = vsel %vm123, %v447, 0
    %v454 = vsel %vm123, %v449, 0
    %v457 = vsel %vm130, %v440, 0
    %v460 = vsel %vm130, %v441, 0
    %462 = vmatprep.subr.mxu0 %v435
    %463 = vmatpush1.msra.mxu0 %v434
    %464 = vmatprep.subr.mxu0 %v437
    %465 = vmatpush1.msra.mxu0 %v436
    %466 = vmatprep.subr.mxu0 %v439
    %467 = vmatpush1.msra.mxu0 %v438
    %468 = vmatprep.subr.mxu0 %v460
    %469 = vmatpush1.msra.mxu0 %v457
    %470 = vmatprep.subr.mxu0 0.0
    %471 = vmatpush1.msra.mxu0 0.0
    %472 = vmatprep.subr.mxu0 0.0
    %473 = vmatpush1.msra.mxu0 0.0
    %474 = vmatprep.subr.mxu0 0.0
    %475 = vmatpush1.msra.mxu0 0.0
    %476 = vmatprep.subr.mxu0 0.0
    %477 = vmatpush1.msra.mxu0 0.0
    %478 = vmatprep.subr.mxu0 0.0
    %479 = vmatpush1.msra.mxu0 0.0
    %480 = vmatprep.subr.mxu0 0.0
    %481 = vmatpush1.msra.mxu0 0.0
    %482 = vmatprep.subr.mxu0 0.0
    %483 = vmatpush1.msra.mxu0 0.0
    %484 = vmatprep.subr.mxu0 0.0
    %485 = vmatpush1.msra.mxu0 0.0
    %486 = vmatprep.subr.mxu0 0.0
    %487 = vmatpush1.msra.mxu0 0.0
    %488 = vmatprep.subr.mxu0 0.0
    %489 = vmatpush1.msra.mxu0 0.0
    %490 = vmatprep.subr.mxu0 0.0
    %491 = vmatpush1.msra.mxu0 0.0
    %492 = vmatprep.subr.mxu0 0.0
    %493 = vmatpush1.msra.mxu0 0.0
    %494 = vmatprep.subr.mxu0 0.0
    %495 = vmatpush1.msra.mxu0 0.0
    %496 = vmatprep.subr.mxu0 0.0
    %497 = vmatpush1.msra.mxu0 0.0
    %498 = vmatprep.subr.mxu0 0.0
    %499 = vmatpush1.msra.mxu0 0.0
    %500 = vmatprep.subr.mxu0 0.0
    %501 = vmatpush1.msra.mxu0 0.0
    %502 = vmatprep.subr.mxu0 0.0
    %503 = vmatpush1.msra.mxu0 0.0
    %504 = vmatprep.subr.mxu0 0.0
    %505 = vmatpush1.msra.mxu0 0.0
    %506 = vmatprep.subr.mxu0 0.0
    %507 = vmatpush1.msra.mxu0 0.0
    %508 = vmatprep.subr.mxu0 0.0
    %509 = vmatpush1.msra.mxu0 0.0
    %510 = vmatprep.subr.mxu0 0.0
    %511 = vmatpush1.msra.mxu0 0.0
    %512 = vmatprep.subr.mxu0 0.0
    %513 = vmatpush1.msra.mxu0 0.0
    %514 = vmatprep.subr.mxu0 0.0
    %515 = vmatpush1.msra.mxu0 0.0
    %516 = vmatprep.subr.mxu0 0.0
    %517 = vmatpush1.msra.mxu0 0.0
    %518 = vmatprep.subr.mxu0 0.0
    %519 = vmatpush1.msra.mxu0 0.0
    %520 = vmatprep.subr.mxu0 0.0
    %521 = vmatpush1.msra.mxu0 0.0
    %522 = vmatprep.subr.mxu0 0.0
    %523 = vmatpush1.msra.mxu0 0.0
    %524 = vmatprep.subr.mxu0 0.0
    %525 = vmatpush1.msra.mxu0 0.0
    %526 = vmatprep.mubr.f32.mxu0 0.0
    %527 = vmatmul.mubr.f32.gmra.mrb[0].mxu0 %v450
    %v528 = vpop.f32.mrb[0].mxu0
    %v529 = vadd.f32 0.0, %v528
    %v530 = vpop.f32.mrb[0].mxu0
    %v531 = vadd.f32 0.0, %v530
    %532 = vmatprep.mubr.f32.mxu0 0.0
    %533 = vmatmul.mubr.f32.gmra.mrb[0].mxu0 %v452
    %v534 = vpop.f32.mrb[0].mxu0
    %v535 = vadd.f32 0.0, %v534
    %v536 = vpop.f32.mrb[0].mxu0
    %v537 = vadd.f32 0.0, %v536
    %538 = vmatprep.mubr.f32.mxu0 0.0
    %539 = vmatmul.mubr.f32.gmra.mrb[0].mxu0 %v454
    %v540 = vpop.f32.mrb[0].mxu0
    %v541 = vadd.f32 0.0, %v540
    %v542 = vpop.f32.mrb[0].mxu0
    %v543 = vadd.f32 0.0, %v542
    %544 = vdwg.mxu0
    %v545 = vadd.f32 %v427, %v529
    %v546 = vadd.f32 %v428, %v531
    %v547 = vadd.f32 %v429, %v535
    %v548 = vadd.f32 %v430, %v537
    %v549 = vadd.f32 %v431, %v541
    %v550 = vadd.f32 %v432, %v543
    %s551 = scalar_lea.vmem [#allocation3], 256
    %v552 = vld [vmem:[%s551] sm:$0xff]
    %v553 = vld [vmem:[%s551 + $0x8] sm:$0xff]
    %v554 = vld [vmem:[%s551 + $0x10] sm:$0xff]
    %v555 = vld [vmem:[%s551 + $0x18] sm:$0xff]
    %v556 = vld [vmem:[%s551 + $0x20] sm:$0xff]
    %v557 = vld [vmem:[%s551 + $0x28] sm:$0xff]
    %v558 = vld [vmem:[%s551 + $0x30] sm:$0xf]
    %v559 = vld [vmem:[%s551 + $0x38] sm:$0xf]
    %v560 = vrot.slane %v90, 4
    %v561 = vrot.slane %v91, 4
    %v562 = vsel %vm130, %v560, %v561
    %v563 = vrot.slane %v92, 4
    %v564 = vsel %vm130, %v561, %v563
    %v565 = vrot.slane %v93, 4
    %v566 = vsel %vm130, %v563, %v565
    %v567 = vsel %vm123, %v562, 0
    %v569 = vsel %vm123, %v564, 0
    %v571 = vsel %vm123, %v566, 0
    %v574 = vsel %vm130, %v558, 0
    %v577 = vsel %vm130, %v559, 0
    %579 = vmatprep.subr.mxu0 %v553
    %580 = vmatpush1.msra.mxu0 %v552
    %581 = vmatprep.subr.mxu0 %v555
    %582 = vmatpush1.msra.mxu0 %v554
    %583 = vmatprep.subr.mxu0 %v557
    %584 = vmatpush1.msra.mxu0 %v556
    %585 = vmatprep.subr.mxu0 %v577
    %586 = vmatpush1.msra.mxu0 %v574
    %587 = vmatprep.subr.mxu0 0.0
    %588 = vmatpush1.msra.mxu0 0.0
    %589 = vmatprep.subr.mxu0 0.0
    %590 = vmatpush1.msra.mxu0 0.0
    %591 = vmatprep.subr.mxu0 0.0
    %592 = vmatpush1.msra.mxu0 0.0
    %593 = vmatprep.subr.mxu0 0.0
    %594 = vmatpush1.msra.mxu0 0.0
    %595 = vmatprep.subr.mxu0 0.0
    %596 = vmatpush1.msra.mxu0 0.0
    %597 = vmatprep.subr.mxu0 0.0
    %598 = vmatpush1.msra.mxu0 0.0
    %599 = vmatprep.subr.mxu0 0.0
    %600 = vmatpush1.msra.mxu0 0.0
    %601 = vmatprep.subr.mxu0 0.0
    %602 = vmatpush1.msra.mxu0 0.0
    %603 = vmatprep.subr.mxu0 0.0
    %604 = vmatpush1.msra.mxu0 0.0
    %605 = vmatprep.subr.mxu0 0.0
    %606 = vmatpush1.msra.mxu0 0.0
    %607 = vmatprep.subr.mxu0 0.0
    %608 = vmatpush1.msra.mxu0 0.0
    %609 = vmatprep.subr.mxu0 0.0
    %610 = vmatpush1.msra.mxu0 0.0
    %611 = vmatprep.subr.mxu0 0.0
    %612 = vmatpush1.msra.mxu0 0.0
    %613 = vmatprep.subr.mxu0 0.0
    %614 = vmatpush1.msra.mxu0 0.0
    %615 = vmatprep.subr.mxu0 0.0
    %616 = vmatpush1.msra.mxu0 0.0
    %617 = vmatprep.subr.mxu0 0.0
    %618 = vmatpush1.msra.mxu0 0.0
    %619 = vmatprep.subr.mxu0 0.0
    %620 = vmatpush1.msra.mxu0 0.0
    %621 = vmatprep.subr.mxu0 0.0
    %622 = vmatpush1.msra.mxu0 0.0
    %623 = vmatprep.subr.mxu0 0.0
    %624 = vmatpush1.msra.mxu0 0.0
    %625 = vmatprep.subr.mxu0 0.0
    %626 = vmatpush1.msra.mxu0 0.0
    %627 = vmatprep.subr.mxu0 0.0
    %628 = vmatpush1.msra.mxu0 0.0
    %629 = vmatprep.subr.mxu0 0.0
    %630 = vmatpush1.msra.mxu0 0.0
    %631 = vmatprep.subr.mxu0 0.0
    %632 = vmatpush1.msra.mxu0 0.0
    %633 = vmatprep.subr.mxu0 0.0
    %634 = vmatpush1.msra.mxu0 0.0
    %635 = vmatprep.subr.mxu0 0.0
    %636 = vmatpush1.msra.mxu0 0.0
    %637 = vmatprep.subr.mxu0 0.0
    %638 = vmatpush1.msra.mxu0 0.0
    %639 = vmatprep.subr.mxu0 0.0
    %640 = vmatpush1.msra.mxu0 0.0
    %641 = vmatprep.subr.mxu0 0.0
    %642 = vmatpush1.msra.mxu0 0.0
    %643 = vmatprep.mubr.f32.mxu0 0.0
    %644 = vmatmul.mubr.f32.gmra.mrb[0].mxu0 %v567
    %v645 = vpop.f32.mrb[0].mxu0
    %v646 = vadd.f32 0.0, %v645
    %v647 = vpop.f32.mrb[0].mxu0
    %v648 = vadd.f32 0.0, %v647
    %649 = vmatprep.mubr.f32.mxu0 0.0
    %650 = vmatmul.mubr.f32.gmra.mrb[0].mxu0 %v569
    %v651 = vpop.f32.mrb[0].mxu0
    %v652 = vadd.f32 0.0, %v651
    %v653 = vpop.f32.mrb[0].mxu0
    %v654 = vadd.f32 0.0, %v653
    %655 = vmatprep.mubr.f32.mxu0 0.0
    %656 = vmatmul.mubr.f32.gmra.mrb[0].mxu0 %v571
    %v657 = vpop.f32.mrb[0].mxu0
    %v658 = vadd.f32 0.0, %v657
    %v659 = vpop.f32.mrb[0].mxu0
    %v660 = vadd.f32 0.0, %v659
    %661 = vdwg.mxu0
    %v662 = vadd.f32 %v545, %v646
    %v663 = vadd.f32 %v546, %v648
    %v664 = vadd.f32 %v547, %v652
    %v665 = vadd.f32 %v548, %v654
    %v666 = vadd.f32 %v549, %v658
    %v667 = vadd.f32 %v550, %v660
    %v668 = vld [vmem:[%s2] sm:$0x3]
    %v670 = vlaneseq
    %v671 = vshrl.u32 %v670, 7
    %v672 = vsub.s32 0, %v671
    %v673 = vrot.slane %v668, %v672
    %v674 = vlaneseq
    %v675 = vshrl.u32 %v674, 7
    %v676 = vsub.s32 1, %v675
    %v677 = vrot.slane %v668, %v676
    %v680 = vadd.f32 %v662, %v673
    %v681 = vadd.f32 %v663, %v677
    %v682 = vadd.f32 %v664, %v673
    %v683 = vadd.f32 %v665, %v677
    %v684 = vadd.f32 %v666, %v673
    %v685 = vadd.f32 %v667, %v677
    %v686 = vmax.f32 %v680, 0.0
    %v687 = vmax.f32 %v681, 0.0
    %v688 = vmax.f32 %v682, 0.0
    %v689 = vmax.f32 %v683, 0.0
    %v690 = vmax.f32 %v684, 0.0
    %v691 = vmax.f32 %v685, 0.0
    %v692 = vld [vmem:[%s3] sm:$0xff]
    %v693 = vld [vmem:[%s3 + $0x8] sm:$0xf]
    %vm694 = vcmask 195584
    %v696 = vsel %vm694, %v692, 0
    %v699 = vsel %vm694, %v693, 0
    %701 = vmatprep.subr.mxu0 %v687
    %702 = vmatpush1.msra.mxu0 %v686
    %703 = vmatprep.subr.mxu0 %v689
    %704 = vmatpush1.msra.mxu0 %v688
    %705 = vmatprep.subr.mxu0 %v691
    %706 = vmatpush1.msra.mxu0 %v690
    %707 = vmatprep.subr.mxu0 0.0
    %708 = vmatpush1.msra.mxu0 0.0
    %709 = vmatprep.subr.mxu0 0.0
    %710 = vmatpush1.msra.mxu0 0.0
    %711 = vmatprep.subr.mxu0 0.0
    %712 = vmatpush1.msra.mxu0 0.0
    %713 = vmatprep.subr.mxu0 0.0
    %714 = vmatpush1.msra.mxu0 0.0
    %715 = vmatprep.subr.mxu0 0.0
    %716 = vmatpush1.msra.mxu0 0.0
    %717 = vmatprep.subr.mxu0 0.0
    %718 = vmatpush1.msra.mxu0 0.0
    %719 = vmatprep.subr.mxu0 0.0
    %720 = vmatpush1.msra.mxu0 0.0
    %721 = vmatprep.subr.mxu0 0.0
    %722 = vmatpush1.msra.mxu0 0.0
    %723 = vmatprep.subr.mxu0 0.0
    %724 = vmatpush1.msra.mxu0 0.0
    %725 = vmatprep.subr.mxu0 0.0
    %726 = vmatpush1.msra.mxu0 0.0
    %727 = vmatprep.subr.mxu0 0.0
    %728 = vmatpush1.msra.mxu0 0.0
    %729 = vmatprep.subr.mxu0 0.0
    %730 = vmatpush1.msra.mxu0 0.0
    %731 = vmatprep.subr.mxu0 0.0
    %732 = vmatpush1.msra.mxu0 0.0
    %733 = vmatprep.subr.mxu0 0.0
    %734 = vmatpush1.msra.mxu0 0.0
    %735 = vmatprep.subr.mxu0 0.0
    %736 = vmatpush1.msra.mxu0 0.0
    %737 = vmatprep.subr.mxu0 0.0
    %738 = vmatpush1.msra.mxu0 0.0
    %739 = vmatprep.subr.mxu0 0.0
    %740 = vmatpush1.msra.mxu0 0.0
    %741 = vmatprep.subr.mxu0 0.0
    %742 = vmatpush1.msra.mxu0 0.0
    %743 = vmatprep.subr.mxu0 0.0
    %744 = vmatpush1.msra.mxu0 0.0
    %745 = vmatprep.subr.mxu0 0.0
    %746 = vmatpush1.msra.mxu0 0.0
    %747 = vmatprep.subr.mxu0 0.0
    %748 = vmatpush1.msra.mxu0 0.0
    %749 = vmatprep.subr.mxu0 0.0
    %750 = vmatpush1.msra.mxu0 0.0
    %751 = vmatprep.subr.mxu0 0.0
    %752 = vmatpush1.msra.mxu0 0.0
    %753 = vmatprep.subr.mxu0 0.0
    %754 = vmatpush1.msra.mxu0 0.0
    %755 = vmatprep.subr.mxu0 0.0
    %756 = vmatpush1.msra.mxu0 0.0
    %757 = vmatprep.subr.mxu0 0.0
    %758 = vmatpush1.msra.mxu0 0.0
    %759 = vmatprep.subr.mxu0 0.0
    %760 = vmatpush1.msra.mxu0 0.0
    %761 = vmatprep.subr.mxu0 0.0
    %762 = vmatpush1.msra.mxu0 0.0
    %763 = vmatprep.subr.mxu0 0.0
    %764 = vmatpush1.msra.mxu0 0.0
    %765 = vmatprep.mubr.f32.mxu0 0.0
    %766 = vmatmul.mubr.f32.gmra.mrb[0].mxu0 %v696
    %v767 = vpop.f32.mrb[0].mxu0
    %v768 = vadd.f32 0.0, %v767
    %v769 = vpop.f32.mrb[0].mxu0
    %v770 = vadd.f32 0.0, %v769
    %771 = vmatprep.mubr.f32.mxu0 0.0
    %772 = vmatmul.mubr.f32.gmra.mrb[0].mxu0 %v699
    %v773 = vpop.f32.mrb[0].mxu0
    %v774 = vadd.f32 0.0, %v773
    %v775 = vpop.f32.mrb[0].mxu0
    %v776 = vadd.f32 0.0, %v775
    %777 = vdwg.mxu0
    %s778 = scalar_lea.vmem %s3, 16
    %v779 = vld [vmem:[%s778] sm:$0xff]
    %v780 = vld [vmem:[%s778 + $0x8] sm:$0xf]
    %v782 = vsel %vm694, %v779, 0
    %v785 = vsel %vm694, %v780, 0
    %787 = vmatprep.subr.mxu0 %v687
    %788 = vmatpush1.msra.mxu0 %v686
    %789 = vmatprep.subr.mxu0 %v689
    %790 = vmatpush1.msra.mxu0 %v688
    %791 = vmatprep.subr.mxu0 %v691
    %792 = vmatpush1.msra.mxu0 %v690
    %793 = vmatprep.subr.mxu0 0.0
    %794 = vmatpush1.msra.mxu0 0.0
    %795 = vmatprep.subr.mxu0 0.0
    %796 = vmatpush1.msra.mxu0 0.0
    %797 = vmatprep.subr.mxu0 0.0
    %798 = vmatpush1.msra.mxu0 0.0
    %799 = vmatprep.subr.mxu0 0.0
    %800 = vmatpush1.msra.mxu0 0.0
    %801 = vmatprep.subr.mxu0 0.0
    %802 = vmatpush1.msra.mxu0 0.0
    %803 = vmatprep.subr.mxu0 0.0
    %804 = vmatpush1.msra.mxu0 0.0
    %805 = vmatprep.subr.mxu0 0.0
    %806 = vmatpush1.msra.mxu0 0.0
    %807 = vmatprep.subr.mxu0 0.0
    %808 = vmatpush1.msra.mxu0 0.0
    %809 = vmatprep.subr.mxu0 0.0
    %810 = vmatpush1.msra.mxu0 0.0
    %811 = vmatprep.subr.mxu0 0.0
    %812 = vmatpush1.msra.mxu0 0.0
    %813 = vmatprep.subr.mxu0 0.0
    %814 = vmatpush1.msra.mxu0 0.0
    %815 = vmatprep.subr.mxu0 0.0
    %816 = vmatpush1.msra.mxu0 0.0
    %817 = vmatprep.subr.mxu0 0.0
    %818 = vmatpush1.msra.mxu0 0.0
    %819 = vmatprep.subr.mxu0 0.0
    %820 = vmatpush1.msra.mxu0 0.0
    %821 = vmatprep.subr.mxu0 0.0
    %822 = vmatpush1.msra.mxu0 0.0
    %823 = vmatprep.subr.mxu0 0.0
    %824 = vmatpush1.msra.mxu0 0.0
    %825 = vmatprep.subr.mxu0 0.0
    %826 = vmatpush1.msra.mxu0 0.0
    %827 = vmatprep.subr.mxu0 0.0
    %828 = vmatpush1.msra.mxu0 0.0
    %829 = vmatprep.subr.mxu0 0.0
    %830 = vmatpush1.msra.mxu0 0.0
    %831 = vmatprep.subr.mxu0 0.0
    %832 = vmatpush1.msra.mxu0 0.0
    %833 = vmatprep.subr.mxu0 0.0
    %834 = vmatpush1.msra.mxu0 0.0
    %835 = vmatprep.subr.mxu0 0.0
    %836 = vmatpush1.msra.mxu0 0.0
    %837 = vmatprep.subr.mxu0 0.0
    %838 = vmatpush1.msra.mxu0 0.0
    %839 = vmatprep.subr.mxu0 0.0
    %840 = vmatpush1.msra.mxu0 0.0
    %841 = vmatprep.subr.mxu0 0.0
    %842 = vmatpush1.msra.mxu0 0.0
    %843 = vmatprep.subr.mxu0 0.0
    %844 = vmatpush1.msra.mxu0 0.0
    %845 = vmatprep.subr.mxu0 0.0
    %846 = vmatpush1.msra.mxu0 0.0
    %847 = vmatprep.subr.mxu0 0.0
    %848 = vmatpush1.msra.mxu0 0.0
    %849 = vmatprep.subr.mxu0 0.0
    %850 = vmatpush1.msra.mxu0 0.0
    %851 = vmatprep.mubr.f32.mxu0 0.0
    %852 = vmatmul.mubr.f32.gmra.mrb[0].mxu0 %v782
    %v853 = vpop.f32.mrb[0].mxu0
    %v854 = vadd.f32 0.0, %v853
    %v855 = vpop.f32.mrb[0].mxu0
    %v856 = vadd.f32 0.0, %v855
    %857 = vmatprep.mubr.f32.mxu0 0.0
    %858 = vmatmul.mubr.f32.gmra.mrb[0].mxu0 %v785
    %v859 = vpop.f32.mrb[0].mxu0
    %v860 = vadd.f32 0.0, %v859
    %v861 = vpop.f32.mrb[0].mxu0
    %v862 = vadd.f32 0.0, %v861
    %863 = vdwg.mxu0
    %v864 = vmax.f32 %v768, %v854
    %v865 = vmax.f32 %v770, %v856
    %v866 = vmax.f32 %v774, %v860
    %v867 = vmax.f32 %v776, %v862
    %v868 = vld [vmem:[%s4] sm:$0xff]
    %v869 = vld [vmem:[%s4 + $0x8] sm:$0xff]
    %v870 = vld [vmem:[%s4 + $0x10] sm:$0xff]
    %v871 = vld [vmem:[%s4 + $0x18] sm:$0xff]
    %v872 = vld [vmem:[%s4 + $0x20] sm:$0xff]
    %v873 = vld [vmem:[%s4 + $0x28] sm:$0xff]
    %v874 = vld [vmem:[%s4 + $0x30] sm:$0xff]
    %v875 = vld [vmem:[%s4 + $0x38] sm:$0xff]
    %v876 = vld [vmem:[%s4 + $0x40] sm:$0xff]
    %v877 = vld [vmem:[%s4 + $0x48] sm:$0xff]
    %v878 = vld [vmem:[%s4 + $0x50] sm:$0xff]
    %v879 = vld [vmem:[%s4 + $0x58] sm:$0xff]
    %v880 = vld [vmem:[%s4 + $0x60] sm:$0xff]
    %v881 = vld [vmem:[%s4 + $0x68] sm:$0xff]
    %v882 = vld [vmem:[%s4 + $0x70] sm:$0xff]
    %v883 = vld [vmem:[%s4 + $0x78] sm:$0xff]
    %v884 = vld [vmem:[%s4 + $0x80] sm:$0xff]
    %v885 = vld [vmem:[%s4 + $0x88] sm:$0xff]
    %vm886 = vcmask 130048
    %v888 = vsel %vm886, %v865, 0
    %v891 = vsel %vm886, %v867, 0
    %893 = vmatprep.subr.mxu0 0.0
    %894 = vmatpush1.msra.mxu0 %v868
    %895 = vmatprep.subr.mxu0 0.0
    %896 = vmatpush1.msra.mxu0 %v869
    %897 = vmatprep.subr.mxu0 0.0
    %898 = vmatpush1.msra.mxu0 %v870
    %899 = vmatprep.subr.mxu0 0.0
    %900 = vmatpush1.msra.mxu0 %v871
    %901 = vmatprep.subr.mxu0 0.0
    %902 = vmatpush1.msra.mxu0 %v872
    %903 = vmatprep.subr.mxu0 0.0
    %904 = vmatpush1.msra.mxu0 %v873
    %905 = vmatprep.subr.mxu0 0.0
    %906 = vmatpush1.msra.mxu0 %v874
    %907 = vmatprep.subr.mxu0 0.0
    %908 = vmatpush1.msra.mxu0 %v875
    %909 = vmatprep.subr.mxu0 0.0
    %910 = vmatpush1.msra.mxu0 %v876
    %911 = vmatprep.subr.mxu0 0.0
    %912 = vmatpush1.msra.mxu0 %v877
    %913 = vmatprep.subr.mxu0 0.0
    %914 = vmatpush1.msra.mxu0 %v878
    %915 = vmatprep.subr.mxu0 0.0
    %916 = vmatpush1.msra.mxu0 %v879
    %917 = vmatprep.subr.mxu0 0.0
    %918 = vmatpush1.msra.mxu0 %v880
    %919 = vmatprep.subr.mxu0 0.0
    %920 = vmatpush1.msra.mxu0 %v881
    %921 = vmatprep.subr.mxu0 0.0
    %922 = vmatpush1.msra.mxu0 %v882
    %923 = vmatprep.subr.mxu0 0.0
    %924 = vmatpush1.msra.mxu0 %v883
    %925 = vmatprep.subr.mxu0 0.0
    %926 = vmatpush1.msra.mxu0 %v884
    %927 = vmatprep.subr.mxu0 0.0
    %928 = vmatpush1.msra.mxu0 %v885
    %929 = vmatprep.subr.mxu0 0.0
    %930 = vmatpush1.msra.mxu0 0.0
    %931 = vmatprep.subr.mxu0 0.0
    %932 = vmatpush1.msra.mxu0 0.0
    %933 = vmatprep.subr.mxu0 0.0
    %934 = vmatpush1.msra.mxu0 0.0
    %935 = vmatprep.subr.mxu0 0.0
    %936 = vmatpush1.msra.mxu0 0.0
    %937 = vmatprep.subr.mxu0 0.0
    %938 = vmatpush1.msra.mxu0 0.0
    %939 = vmatprep.subr.mxu0 0.0
    %940 = vmatpush1.msra.mxu0 0.0
    %941 = vmatprep.subr.mxu0 0.0
    %942 = vmatpush1.msra.mxu0 0.0
    %943 = vmatprep.subr.mxu0 0.0
    %944 = vmatpush1.msra.mxu0 0.0
    %945 = vmatprep.subr.mxu0 0.0
    %946 = vmatpush1.msra.mxu0 0.0
    %947 = vmatprep.subr.mxu0 0.0
    %948 = vmatpush1.msra.mxu0 0.0
    %949 = vmatprep.subr.mxu0 0.0
    %950 = vmatpush1.msra.mxu0 0.0
    %951 = vmatprep.subr.mxu0 0.0
    %952 = vmatpush1.msra.mxu0 0.0
    %953 = vmatprep.subr.mxu0 0.0
    %954 = vmatpush1.msra.mxu0 0.0
    %955 = vmatprep.subr.mxu0 0.0
    %956 = vmatpush1.msra.mxu0 0.0
    %957 = vmatprep.mubr.f32.mxu0 %v888
    %958 = vmatmul.mubr.f32.gmra.mrb[0].mxu0 %v864
    %v959 = vpop.f32.mrb[0].mxu0
    %v960 = vadd.f32 0.0, %v959
    %v961 = vpop.f32.mrb[0].mxu0
    %962 = vmatprep.mubr.f32.mxu0 %v891
    %963 = vmatmul.mubr.f32.gmra.mrb[0].mxu0 %v866
    %v964 = vpop.f32.mrb[0].mxu0
    %v965 = vadd.f32 0.0, %v964
    %v966 = vpop.f32.mrb[0].mxu0
    %967 = vdwg.mxu0
    %s968 = scalar_lea.vmem %s4, 144
    %v969 = vld [vmem:[%s968] sm:$0xff]
    %v970 = vld [vmem:[%s968 + $0x8] sm:$0xff]
    %v971 = vld [vmem:[%s968 + $0x10] sm:$0xff]
    %v972 = vld [vmem:[%s968 + $0x18] sm:$0xff]
    %v973 = vld [vmem:[%s968 + $0x20] sm:$0xff]
    %v974 = vld [vmem:[%s968 + $0x28] sm:$0xff]
    %v975 = vld [vmem:[%s968 + $0x30] sm:$0xff]
    %v976 = vld [vmem:[%s968 + $0x38] sm:$0xff]
    %v977 = vld [vmem:[%s968 + $0x40] sm:$0xff]
    %v978 = vld [vmem:[%s968 + $0x48] sm:$0xff]
    %v979 = vld [vmem:[%s968 + $0x50] sm:$0xff]
    %v980 = vld [vmem:[%s968 + $0x58] sm:$0xff]
    %v981 = vld [vmem:[%s968 + $0x60] sm:$0xff]
    %v982 = vld [vmem:[%s968 + $0x68] sm:$0xff]
    %v983 = vld [vmem:[%s968 + $0x70] sm:$0xff]
    %v984 = vld [vmem:[%s968 + $0x78] sm:$0xff]
    %v985 = vld [vmem:[%s968 + $0x80] sm:$0xff]
    %v986 = vld [vmem:[%s968 + $0x88] sm:$0xff]
    %987 = vmatprep.subr.mxu0 0.0
    %988 = vmatpush1.msra.mxu0 %v969
    %989 = vmatprep.subr.mxu0 0.0
    %990 = vmatpush1.msra.mxu0 %v970
    %991 = vmatprep.subr.mxu0 0.0
    %992 = vmatpush1.msra.mxu0 %v971
    %993 = vmatprep.subr.mxu0 0.0
    %994 = vmatpush1.msra.mxu0 %v972
    %995 = vmatprep.subr.mxu0 0.0
    %996 = vmatpush1.msra.mxu0 %v973
    %997 = vmatprep.subr.mxu0 0.0
    %998 = vmatpush1.msra.mxu0 %v974
    %999 = vmatprep.subr.mxu0 0.0
    %1000 = vmatpush1.msra.mxu0 %v975
    %1001 = vmatprep.subr.mxu0 0.0
    %1002 = vmatpush1.msra.mxu0 %v976
    %1003 = vmatprep.subr.mxu0 0.0
    %1004 = vmatpush1.msra.mxu0 %v977
    %1005 = vmatprep.subr.mxu0 0.0
    %1006 = vmatpush1.msra.mxu0 %v978
    %1007 = vmatprep.subr.mxu0 0.0
    %1008 = vmatpush1.msra.mxu0 %v979
    %1009 = vmatprep.subr.mxu0 0.0
    %1010 = vmatpush1.msra.mxu0 %v980
    %1011 = vmatprep.subr.mxu0 0.0
    %1012 = vmatpush1.msra.mxu0 %v981
    %1013 = vmatprep.subr.mxu0 0.0
    %1014 = vmatpush1.msra.mxu0 %v982
    %1015 = vmatprep.subr.mxu0 0.0
    %1016 = vmatpush1.msra.mxu0 %v983
    %1017 = vmatprep.subr.mxu0 0.0
    %1018 = vmatpush1.msra.mxu0 %v984
    %1019 = vmatprep.subr.mxu0 0.0
    %1020 = vmatpush1.msra.mxu0 %v985
    %1021 = vmatprep.subr.mxu0 0.0
    %1022 = vmatpush1.msra.mxu0 %v986
    %1023 = vmatprep.subr.mxu0 0.0
    %1024 = vmatpush1.msra.mxu0 0.0
    %1025 = vmatprep.subr.mxu0 0.0
    %1026 = vmatpush1.msra.mxu0 0.0
    %1027 = vmatprep.subr.mxu0 0.0
    %1028 = vmatpush1.msra.mxu0 0.0
    %1029 = vmatprep.subr.mxu0 0.0
    %1030 = vmatpush1.msra.mxu0 0.0
    %1031 = vmatprep.subr.mxu0 0.0
    %1032 = vmatpush1.msra.mxu0 0.0
    %1033 = vmatprep.subr.mxu0 0.0
    %1034 = vmatpush1.msra.mxu0 0.0
    %1035 = vmatprep.subr.mxu0 0.0
    %1036 = vmatpush1.msra.mxu0 0.0
    %1037 = vmatprep.subr.mxu0 0.0
    %1038 = vmatpush1.msra.mxu0 0.0
    %1039 = vmatprep.subr.mxu0 0.0
    %1040 = vmatpush1.msra.mxu0 0.0
    %1041 = vmatprep.subr.mxu0 0.0
    %1042 = vmatpush1.msra.mxu0 0.0
    %1043 = vmatprep.subr.mxu0 0.0
    %1044 = vmatpush1.msra.mxu0 0.0
    %1045 = vmatprep.subr.mxu0 0.0
    %1046 = vmatpush1.msra.mxu0 0.0
    %1047 = vmatprep.subr.mxu0 0.0
    %1048 = vmatpush1.msra.mxu0 0.0
    %1049 = vmatprep.subr.mxu0 0.0
    %1050 = vmatpush1.msra.mxu0 0.0
    %1051 = vmatprep.mubr.f32.mxu0 %v888
    %1052 = vmatmul.mubr.f32.gmra.mrb[0].mxu0 %v864
    %v1053 = vpop.f32.mrb[0].mxu0
    %v1054 = vadd.f32 0.0, %v1053
    %v1055 = vpop.f32.mrb[0].mxu0
    %1056 = vmatprep.mubr.f32.mxu0 %v891
    %1057 = vmatmul.mubr.f32.gmra.mrb[0].mxu0 %v866
    %v1058 = vpop.f32.mrb[0].mxu0
    %v1059 = vadd.f32 0.0, %v1058
    %v1060 = vpop.f32.mrb[0].mxu0
    %1061 = vdwg.mxu0
    %v1062 = vmax.f32 %v960, %v1054
    %v1063 = vmax.f32 %v965, %v1059
    %v1064 = vld [vmem:[%s5] sm:$0xff]
    %v1065 = vld [vmem:[%s5 + $0x8] sm:$0xff]
    %v1066 = vld [vmem:[%s5 + $0x10] sm:$0xff]
    %v1067 = vld [vmem:[%s5 + $0x18] sm:$0xff]
    %v1068 = vld [vmem:[%s5 + $0x20] sm:$0xff]
    %v1069 = vld [vmem:[%s5 + $0x28] sm:$0xff]
    %v1070 = vld [vmem:[%s5 + $0x30] sm:$0xff]
    %v1071 = vld [vmem:[%s5 + $0x38] sm:$0xff]
    %v1072 = vld [vmem:[%s5 + $0x40] sm:$0xff]
    %s1073 = scalar_lea.vmem %s5, 72
    %v1074 = vld [vmem:[%s1073] sm:$0xff]
    %v1075 = vld [vmem:[%s1073 + $0x8] sm:$0xff]
    %v1076 = vld [vmem:[%s1073 + $0x10] sm:$0xff]
    %v1077 = vld [vmem:[%s1073 + $0x18] sm:$0xff]
    %v1078 = vld [vmem:[%s1073 + $0x20] sm:$0xff]
    %v1079 = vld [vmem:[%s1073 + $0x28] sm:$0xff]
    %v1080 = vld [vmem:[%s1073 + $0x30] sm:$0xff]
    %v1081 = vld [vmem:[%s1073 + $0x38] sm:$0xff]
    %v1082 = vld [vmem:[%s1073 + $0x40] sm:$0xff]
    %v1085 = vrot.slane %v1062, 1
    %v1086 = vrot.slane %v1063, 1
    %v1087 = vsel %vm115, %v1085, %v1086
    %vm1088 = vcmask 588800
    %v1089 = vsel %vm1088, %v1087, 0
    %1091 = vmatprep.subr.mxu0 0.0
    %1092 = vmatpush1.msra.mxu0 %v1074
    %1093 = vmatprep.subr.mxu0 0.0
    %1094 = vmatpush1.msra.mxu0 %v1075
    %1095 = vmatprep.subr.mxu0 0.0
    %1096 = vmatpush1.msra.mxu0 %v1076
    %1097 = vmatprep.subr.mxu0 0.0
    %1098 = vmatpush1.msra.mxu0 %v1077
    %1099 = vmatprep.subr.mxu0 0.0
    %1100 = vmatpush1.msra.mxu0 %v1078
    %1101 = vmatprep.subr.mxu0 0.0
    %1102 = vmatpush1.msra.mxu0 %v1079
    %1103 = vmatprep.subr.mxu0 0.0
    %1104 = vmatpush1.msra.mxu0 %v1080
    %1105 = vmatprep.subr.mxu0 0.0
    %1106 = vmatpush1.msra.mxu0 %v1081
    %1107 = vmatprep.subr.mxu0 0.0
    %1108 = vmatpush1.msra.mxu0 %v1082
    %1109 = vmatprep.subr.mxu0 0.0
    %1110 = vmatpush1.msra.mxu0 0.0
    %1111 = vmatprep.subr.mxu0 0.0
    %1112 = vmatpush1.msra.mxu0 0.0
    %1113 = vmatprep.subr.mxu0 0.0
    %1114 = vmatpush1.msra.mxu0 0.0
    %1115 = vmatprep.subr.mxu0 0.0
    %1116 = vmatpush1.msra.mxu0 0.0
    %1117 = vmatprep.subr.mxu0 0.0
    %1118 = vmatpush1.msra.mxu0 0.0
    %1119 = vmatprep.subr.mxu0 0.0
    %1120 = vmatpush1.msra.mxu0 0.0
    %1121 = vmatprep.subr.mxu0 0.0
    %1122 = vmatpush1.msra.mxu0 0.0
    %1123 = vmatprep.subr.mxu0 0.0
    %1124 = vmatpush1.msra.mxu0 0.0
    %1125 = vmatprep.subr.mxu0 0.0
    %1126 = vmatpush1.msra.mxu0 0.0
    %1127 = vmatprep.subr.mxu0 0.0
    %1128 = vmatpush1.msra.mxu0 0.0
    %1129 = vmatprep.subr.mxu0 0.0
    %1130 = vmatpush1.msra.mxu0 0.0
    %1131 = vmatprep.subr.mxu0 0.0
    %1132 = vmatpush1.msra.mxu0 0.0
    %1133 = vmatprep.subr.mxu0 0.0
    %1134 = vmatpush1.msra.mxu0 0.0
    %1135 = vmatprep.subr.mxu0 0.0
    %1136 = vmatpush1.msra.mxu0 0.0
    %1137 = vmatprep.subr.mxu0 0.0
    %1138 = vmatpush1.msra.mxu0 0.0
    %1139 = vmatprep.subr.mxu0 0.0
    %1140 = vmatpush1.msra.mxu0 0.0
    %1141 = vmatprep.subr.mxu0 0.0
    %1142 = vmatpush1.msra.mxu0 0.0
    %1143 = vmatprep.subr.mxu0 0.0
    %1144 = vmatpush1.msra.mxu0 0.0
    %1145 = vmatprep.subr.mxu0 0.0
    %1146 = vmatpush1.msra.mxu0 0.0
    %1147 = vmatprep.subr.mxu0 0.0
    %1148 = vmatpush1.msra.mxu0 0.0
    %1149 = vmatprep.subr.mxu0 0.0
    %1150 = vmatpush1.msra.mxu0 0.0
    %1151 = vmatprep.subr.mxu0 0.0
    %1152 = vmatpush1.msra.mxu0 0.0
    %1153 = vmatprep.subr.mxu0 0.0
    %1154 = vmatpush1.msra.mxu0 0.0
    %1155 = vmatprep.mubr.f32.mxu0 0.0
    %1156 = vmatmul.mubr.f32.gmra.mrb[0].mxu0 %v1089
    %v1157 = vpop.f32.mrb[0].mxu0
    %v1158 = vadd.f32 0.0, %v1157
    %v1159 = vpop.f32.mrb[0].mxu0
    %1160 = vdwg.mxu0
    %v1161 = vsel %vm1088, %v1062, 0
    %1163 = vmatprep.subr.mxu0 0.0
    %1164 = vmatpush1.msra.mxu0 %v1064
    %1165 = vmatprep.subr.mxu0 0.0
    %1166 = vmatpush1.msra.mxu0 %v1065
    %1167 = vmatprep.subr.mxu0 0.0
    %1168 = vmatpush1.msra.mxu0 %v1066
    %1169 = vmatprep.subr.mxu0 0.0
    %1170 = vmatpush1.msra.mxu0 %v1067
    %1171 = vmatprep.subr.mxu0 0.0
    %1172 = vmatpush1.msra.mxu0 %v1068
    %1173 = vmatprep.subr.mxu0 0.0
    %1174 = vmatpush1.msra.mxu0 %v1069
    %1175 = vmatprep.subr.mxu0 0.0
    %1176 = vmatpush1.msra.mxu0 %v1070
    %1177 = vmatprep.subr.mxu0 0.0
    %1178 = vmatpush1.msra.mxu0 %v1071
    %1179 = vmatprep.subr.mxu0 0.0
    %1180 = vmatpush1.msra.mxu0 %v1072
    %1181 = vmatprep.subr.mxu0 0.0
    %1182 = vmatpush1.msra.mxu0 0.0
    %1183 = vmatprep.subr.mxu0 0.0
    %1184 = vmatpush1.msra.mxu0 0.0
    %1185 = vmatprep.subr.mxu0 0.0
    %1186 = vmatpush1.msra.mxu0 0.0
    %1187 = vmatprep.subr.mxu0 0.0
    %1188 = vmatpush1.msra.mxu0 0.0
    %1189 = vmatprep.subr.mxu0 0.0
    %1190 = vmatpush1.msra.mxu0 0.0
    %1191 = vmatprep.subr.mxu0 0.0
    %1192 = vmatpush1.msra.mxu0 0.0
    %1193 = vmatprep.subr.mxu0 0.0
    %1194 = vmatpush1.msra.mxu0 0.0
    %1195 = vmatprep.subr.mxu0 0.0
    %1196 = vmatpush1.msra.mxu0 0.0
    %1197 = vmatprep.subr.mxu0 0.0
    %1198 = vmatpush1.msra.mxu0 0.0
    %1199 = vmatprep.subr.mxu0 0.0
    %1200 = vmatpush1.msra.mxu0 0.0
    %1201 = vmatprep.subr.mxu0 0.0
    %1202 = vmatpush1.msra.mxu0 0.0
    %1203 = vmatprep.subr.mxu0 0.0
    %1204 = vmatpush1.msra.mxu0 0.0
    %1205 = vmatprep.subr.mxu0 0.0
    %1206 = vmatpush1.msra.mxu0 0.0
    %1207 = vmatprep.subr.mxu0 0.0
    %1208 = vmatpush1.msra.mxu0 0.0
    %1209 = vmatprep.subr.mxu0 0.0
    %1210 = vmatpush1.msra.mxu0 0.0
    %1211 = vmatprep.subr.mxu0 0.0
    %1212 = vmatpush1.msra.mxu0 0.0
    %1213 = vmatprep.subr.mxu0 0.0
    %1214 = vmatpush1.msra.mxu0 0.0
    %1215 = vmatprep.subr.mxu0 0.0
    %1216 = vmatpush1.msra.mxu0 0.0
    %1217 = vmatprep.subr.mxu0 0.0
    %1218 = vmatpush1.msra.mxu0 0.0
    %1219 = vmatprep.subr.mxu0 0.0
    %1220 = vmatpush1.msra.mxu0 0.0
    %1221 = vmatprep.subr.mxu0 0.0
    %1222 = vmatpush1.msra.mxu0 0.0
    %1223 = vmatprep.subr.mxu0 0.0
    %1224 = vmatpush1.msra.mxu0 0.0
    %1225 = vmatprep.subr.mxu0 0.0
    %1226 = vmatpush1.msra.mxu0 0.0
    %1227 = vmatprep.mubr.f32.mxu0 0.0
    %1228 = vmatmul.mubr.f32.gmra.mrb[0].mxu0 %v1161
    %v1229 = vpop.f32.mrb[0].mxu0
    %v1230 = vadd.f32 %v1158, %v1229
    %v1231 = vpop.f32.mrb[0].mxu0
    %1232 = vdwg.mxu0
    %s1233 = scalar_lea.vmem %s5, 144
    %v1234 = vld [vmem:[%s1233] sm:$0xff]
    %v1235 = vld [vmem:[%s1233 + $0x8] sm:$0xff]
    %v1236 = vld [vmem:[%s1233 + $0x10] sm:$0xff]
    %v1237 = vld [vmem:[%s1233 + $0x18] sm:$0xff]
    %v1238 = vld [vmem:[%s1233 + $0x20] sm:$0xff]
    %v1239 = vld [vmem:[%s1233 + $0x28] sm:$0xff]
    %v1240 = vld [vmem:[%s1233 + $0x30] sm:$0xff]
    %v1241 = vld [vmem:[%s1233 + $0x38] sm:$0xff]
    %v1242 = vld [vmem:[%s1233 + $0x40] sm:$0xff]
    %v1243 = vrot.slane %v1062, 2
    %v1244 = vrot.slane %v1063, 2
    %v1245 = vsel %vm324, %v1243, %v1244
    %v1246 = vsel %vm1088, %v1245, 0
    %1248 = vmatprep.subr.mxu0 0.0
    %1249 = vmatpush1.msra.mxu0 %v1234
    %1250 = vmatprep.subr.mxu0 0.0
    %1251 = vmatpush1.msra.mxu0 %v1235
    %1252 = vmatprep.subr.mxu0 0.0
    %1253 = vmatpush1.msra.mxu0 %v1236
    %1254 = vmatprep.subr.mxu0 0.0
    %1255 = vmatpush1.msra.mxu0 %v1237
    %1256 = vmatprep.subr.mxu0 0.0
    %1257 = vmatpush1.msra.mxu0 %v1238
    %1258 = vmatprep.subr.mxu0 0.0
    %1259 = vmatpush1.msra.mxu0 %v1239
    %1260 = vmatprep.subr.mxu0 0.0
    %1261 = vmatpush1.msra.mxu0 %v1240
    %1262 = vmatprep.subr.mxu0 0.0
    %1263 = vmatpush1.msra.mxu0 %v1241
    %1264 = vmatprep.subr.mxu0 0.0
    %1265 = vmatpush1.msra.mxu0 %v1242
    %1266 = vmatprep.subr.mxu0 0.0
    %1267 = vmatpush1.msra.mxu0 0.0
    %1268 = vmatprep.subr.mxu0 0.0
    %1269 = vmatpush1.msra.mxu0 0.0
    %1270 = vmatprep.subr.mxu0 0.0
    %1271 = vmatpush1.msra.mxu0 0.0
    %1272 = vmatprep.subr.mxu0 0.0
    %1273 = vmatpush1.msra.mxu0 0.0
    %1274 = vmatprep.subr.mxu0 0.0
    %1275 = vmatpush1.msra.mxu0 0.0
    %1276 = vmatprep.subr.mxu0 0.0
    %1277 = vmatpush1.msra.mxu0 0.0
    %1278 = vmatprep.subr.mxu0 0.0
    %1279 = vmatpush1.msra.mxu0 0.0
    %1280 = vmatprep.subr.mxu0 0.0
    %1281 = vmatpush1.msra.mxu0 0.0
    %1282 = vmatprep.subr.mxu0 0.0
    %1283 = vmatpush1.msra.mxu0 0.0
    %1284 = vmatprep.subr.mxu0 0.0
    %1285 = vmatpush1.msra.mxu0 0.0
    %1286 = vmatprep.subr.mxu0 0.0
    %1287 = vmatpush1.msra.mxu0 0.0
    %1288 = vmatprep.subr.mxu0 0.0
    %1289 = vmatpush1.msra.mxu0 0.0
    %1290 = vmatprep.subr.mxu0 0.0
    %1291 = vmatpush1.msra.mxu0 0.0
    %1292 = vmatprep.subr.mxu0 0.0
    %1293 = vmatpush1.msra.mxu0 0.0
    %1294 = vmatprep.subr.mxu0 0.0
    %1295 = vmatpush1.msra.mxu0 0.0
    %1296 = vmatprep.subr.mxu0 0.0
    %1297 = vmatpush1.msra.mxu0 0.0
    %1298 = vmatprep.subr.mxu0 0.0
    %1299 = vmatpush1.msra.mxu0 0.0
    %1300 = vmatprep.subr.mxu0 0.0
    %1301 = vmatpush1.msra.mxu0 0.0
    %1302 = vmatprep.subr.mxu0 0.0
    %1303 = vmatpush1.msra.mxu0 0.0
    %1304 = vmatprep.subr.mxu0 0.0
    %1305 = vmatpush1.msra.mxu0 0.0
    %1306 = vmatprep.subr.mxu0 0.0
    %1307 = vmatpush1.msra.mxu0 0.0
    %1308 = vmatprep.subr.mxu0 0.0
    %1309 = vmatpush1.msra.mxu0 0.0
    %1310 = vmatprep.subr.mxu0 0.0
    %1311 = vmatpush1.msra.mxu0 0.0
    %1312 = vmatprep.mubr.f32.mxu0 0.0
    %1313 = vmatmul.mubr.f32.gmra.mrb[0].mxu0 %v1246
    %v1314 = vpop.f32.mrb[0].mxu0
    %v1315 = vadd.f32 0.0, %v1314
    %v1316 = vpop.f32.mrb[0].mxu0
    %1317 = vdwg.mxu0
    %v1318 = vadd.f32 %v1230, %v1315
    %s1319 = scalar_lea.vmem %s5, 216
    %v1320 = vld [vmem:[%s1319] sm:$0xff]
    %v1321 = vld [vmem:[%s1319 + $0x8] sm:$0xff]
    %v1322 = vld [vmem:[%s1319 + $0x10] sm:$0xff]
    %v1323 = vld [vmem:[%s1319 + $0x18] sm:$0xff]
    %v1324 = vld [vmem:[%s1319 + $0x20] sm:$0xff]
    %v1325 = vld [vmem:[%s1319 + $0x28] sm:$0xff]
    %v1326 = vld [vmem:[%s1319 + $0x30] sm:$0xff]
    %v1327 = vld [vmem:[%s1319 + $0x38] sm:$0xff]
    %v1328 = vld [vmem:[%s1319 + $0x40] sm:$0xff]
    %v1329 = vrot.slane %v1062, 3
    %v1330 = vrot.slane %v1063, 3
    %v1331 = vsel %vm442, %v1329, %v1330
    %v1332 = vsel %vm1088, %v1331, 0
    %1334 = vmatprep.subr.mxu0 0.0
    %1335 = vmatpush1.msra.mxu0 %v1320
    %1336 = vmatprep.subr.mxu0 0.0
    %1337 = vmatpush1.msra.mxu0 %v1321
    %1338 = vmatprep.subr.mxu0 0.0
    %1339 = vmatpush1.msra.mxu0 %v1322
    %1340 = vmatprep.subr.mxu0 0.0
    %1341 = vmatpush1.msra.mxu0 %v1323
    %1342 = vmatprep.subr.mxu0 0.0
    %1343 = vmatpush1.msra.mxu0 %v1324
    %1344 = vmatprep.subr.mxu0 0.0
    %1345 = vmatpush1.msra.mxu0 %v1325
    %1346 = vmatprep.subr.mxu0 0.0
    %1347 = vmatpush1.msra.mxu0 %v1326
    %1348 = vmatprep.subr.mxu0 0.0
    %1349 = vmatpush1.msra.mxu0 %v1327
    %1350 = vmatprep.subr.mxu0 0.0
    %1351 = vmatpush1.msra.mxu0 %v1328
    %1352 = vmatprep.subr.mxu0 0.0
    %1353 = vmatpush1.msra.mxu0 0.0
    %1354 = vmatprep.subr.mxu0 0.0
    %1355 = vmatpush1.msra.mxu0 0.0
    %1356 = vmatprep.subr.mxu0 0.0
    %1357 = vmatpush1.msra.mxu0 0.0
    %1358 = vmatprep.subr.mxu0 0.0
    %1359 = vmatpush1.msra.mxu0 0.0
    %1360 = vmatprep.subr.mxu0 0.0
    %1361 = vmatpush1.msra.mxu0 0.0
    %1362 = vmatprep.subr.mxu0 0.0
    %1363 = vmatpush1.msra.mxu0 0.0
    %1364 = vmatprep.subr.mxu0 0.0
    %1365 = vmatpush1.msra.mxu0 0.0
    %1366 = vmatprep.subr.mxu0 0.0
    %1367 = vmatpush1.msra.mxu0 0.0
    %1368 = vmatprep.subr.mxu0 0.0
    %1369 = vmatpush1.msra.mxu0 0.0
    %1370 = vmatprep.subr.mxu0 0.0
    %1371 = vmatpush1.msra.mxu0 0.0
    %1372 = vmatprep.subr.mxu0 0.0
    %1373 = vmatpush1.msra.mxu0 0.0
    %1374 = vmatprep.subr.mxu0 0.0
    %1375 = vmatpush1.msra.mxu0 0.0
    %1376 = vmatprep.subr.mxu0 0.0
    %1377 = vmatpush1.msra.mxu0 0.0
    %1378 = vmatprep.subr.mxu0 0.0
    %1379 = vmatpush1.msra.mxu0 0.0
    %1380 = vmatprep.subr.mxu0 0.0
    %1381 = vmatpush1.msra.mxu0 0.0
    %1382 = vmatprep.subr.mxu0 0.0
    %1383 = vmatpush1.msra.mxu0 0.0
    %1384 = vmatprep.subr.mxu0 0.0
    %1385 = vmatpush1.msra.mxu0 0.0
    %1386 = vmatprep.subr.mxu0 0.0
    %1387 = vmatpush1.msra.mxu0 0.0
    %1388 = vmatprep.subr.mxu0 0.0
    %1389 = vmatpush1.msra.mxu0 0.0
    %1390 = vmatprep.subr.mxu0 0.0
    %1391 = vmatpush1.msra.mxu0 0.0
    %1392 = vmatprep.subr.mxu0 0.0
    %1393 = vmatpush1.msra.mxu0 0.0
    %1394 = vmatprep.subr.mxu0 0.0
    %1395 = vmatpush1.msra.mxu0 0.0
    %1396 = vmatprep.subr.mxu0 0.0
    %1397 = vmatpush1.msra.mxu0 0.0
    %1398 = vmatprep.mubr.f32.mxu0 0.0
    %1399 = vmatmul.mubr.f32.gmra.mrb[0].mxu0 %v1332
    %v1400 = vpop.f32.mrb[0].mxu0
    %v1401 = vadd.f32 0.0, %v1400
    %v1402 = vpop.f32.mrb[0].mxu0
    %1403 = vdwg.mxu0
    %v1404 = vadd.f32 %v1318, %v1401
    %s1405 = scalar_lea.vmem %s5, 288
    %v1406 = vld [vmem:[%s1405] sm:$0xff]
    %v1407 = vld [vmem:[%s1405 + $0x8] sm:$0xff]
    %v1408 = vld [vmem:[%s1405 + $0x10] sm:$0xff]
    %v1409 = vld [vmem:[%s1405 + $0x18] sm:$0xff]
    %v1410 = vld [vmem:[%s1405 + $0x20] sm:$0xff]
    %v1411 = vld [vmem:[%s1405 + $0x28] sm:$0xff]
    %v1412 = vld [vmem:[%s1405 + $0x30] sm:$0xff]
    %v1413 = vld [vmem:[%s1405 + $0x38] sm:$0xff]
    %v1414 = vld [vmem:[%s1405 + $0x40] sm:$0xff]
    %v1415 = vrot.slane %v1062, 4
    %v1416 = vrot.slane %v1063, 4
    %v1417 = vsel %vm130, %v1415, %v1416
    %v1418 = vsel %vm1088, %v1417, 0
    %1420 = vmatprep.subr.mxu0 0.0
    %1421 = vmatpush1.msra.mxu0 %v1406
    %1422 = vmatprep.subr.mxu0 0.0
    %1423 = vmatpush1.msra.mxu0 %v1407
    %1424 = vmatprep.subr.mxu0 0.0
    %1425 = vmatpush1.msra.mxu0 %v1408
    %1426 = vmatprep.subr.mxu0 0.0
    %1427 = vmatpush1.msra.mxu0 %v1409
    %1428 = vmatprep.subr.mxu0 0.0
    %1429 = vmatpush1.msra.mxu0 %v1410
    %1430 = vmatprep.subr.mxu0 0.0
    %1431 = vmatpush1.msra.mxu0 %v1411
    %1432 = vmatprep.subr.mxu0 0.0
    %1433 = vmatpush1.msra.mxu0 %v1412
    %1434 = vmatprep.subr.mxu0 0.0
    %1435 = vmatpush1.msra.mxu0 %v1413
    %1436 = vmatprep.subr.mxu0 0.0
    %1437 = vmatpush1.msra.mxu0 %v1414
    %1438 = vmatprep.subr.mxu0 0.0
    %1439 = vmatpush1.msra.mxu0 0.0
    %1440 = vmatprep.subr.mxu0 0.0
    %1441 = vmatpush1.msra.mxu0 0.0
    %1442 = vmatprep.subr.mxu0 0.0
    %1443 = vmatpush1.msra.mxu0 0.0
    %1444 = vmatprep.subr.mxu0 0.0
    %1445 = vmatpush1.msra.mxu0 0.0
    %1446 = vmatprep.subr.mxu0 0.0
    %1447 = vmatpush1.msra.mxu0 0.0
    %1448 = vmatprep.subr.mxu0 0.0
    %1449 = vmatpush1.msra.mxu0 0.0
    %1450 = vmatprep.subr.mxu0 0.0
    %1451 = vmatpush1.msra.mxu0 0.0
    %1452 = vmatprep.subr.mxu0 0.0
    %1453 = vmatpush1.msra.mxu0 0.0
    %1454 = vmatprep.subr.mxu0 0.0
    %1455 = vmatpush1.msra.mxu0 0.0
    %1456 = vmatprep.subr.mxu0 0.0
    %1457 = vmatpush1.msra.mxu0 0.0
    %1458 = vmatprep.subr.mxu0 0.0
    %1459 = vmatpush1.msra.mxu0 0.0
    %1460 = vmatprep.subr.mxu0 0.0
    %1461 = vmatpush1.msra.mxu0 0.0
    %1462 = vmatprep.subr.mxu0 0.0
    %1463 = vmatpush1.msra.mxu0 0.0
    %1464 = vmatprep.subr.mxu0 0.0
    %1465 = vmatpush1.msra.mxu0 0.0
    %1466 = vmatprep.subr.mxu0 0.0
    %1467 = vmatpush1.msra.mxu0 0.0
    %1468 = vmatprep.subr.mxu0 0.0
    %1469 = vmatpush1.msra.mxu0 0.0
    %1470 = vmatprep.subr.mxu0 0.0
    %1471 = vmatpush1.msra.mxu0 0.0
    %1472 = vmatprep.subr.mxu0 0.0
    %1473 = vmatpush1.msra.mxu0 0.0
    %1474 = vmatprep.subr.mxu0 0.0
    %1475 = vmatpush1.msra.mxu0 0.0
    %1476 = vmatprep.subr.mxu0 0.0
    %1477 = vmatpush1.msra.mxu0 0.0
    %1478 = vmatprep.subr.mxu0 0.0
    %1479 = vmatpush1.msra.mxu0 0.0
    %1480 = vmatprep.subr.mxu0 0.0
    %1481 = vmatpush1.msra.mxu0 0.0
    %1482 = vmatprep.subr.mxu0 0.0
    %1483 = vmatpush1.msra.mxu0 0.0
    %1484 = vmatprep.mubr.f32.mxu0 0.0
    %1485 = vmatmul.mubr.f32.gmra.mrb[0].mxu0 %v1418
    %v1486 = vpop.f32.mrb[0].mxu0
    %v1487 = vadd.f32 0.0, %v1486
    %v1488 = vpop.f32.mrb[0].mxu0
    %1489 = vdwg.mxu0
    %v1490 = vadd.f32 %v1404, %v1487
    %v1491 = vld [vmem:[%s6] sm:$0x1]
    %v1493 = vlaneseq
    %v1494 = vshrl.u32 %v1493, 7
    %v1495 = vsub.s32 0, %v1494
    %v1496 = vrot.slane %v1491, %v1495
    %v1498 = vadd.f32 %v1490, %v1496
    %v1499 = vmax.f32 %v1498, 0.0
    %v1500 = vld [vmem:[%s7] sm:$0xf]
    %vm1501 = vcmask 64512
    %v1503 = vsel %vm1501, %v1500, 0
    %1505 = vmatprep.subr.mxu0 0.0
    %1506 = vmatpush1.msra.mxu0 %v1499
    %1507 = vmatprep.subr.mxu0 0.0
    %1508 = vmatpush1.msra.mxu0 0.0
    %1509 = vmatprep.subr.mxu0 0.0
    %1510 = vmatpush1.msra.mxu0 0.0
    %1511 = vmatprep.subr.mxu0 0.0
    %1512 = vmatpush1.msra.mxu0 0.0
    %1513 = vmatprep.subr.mxu0 0.0
    %1514 = vmatpush1.msra.mxu0 0.0
    %1515 = vmatprep.subr.mxu0 0.0
    %1516 = vmatpush1.msra.mxu0 0.0
    %1517 = vmatprep.subr.mxu0 0.0
    %1518 = vmatpush1.msra.mxu0 0.0
    %1519 = vmatprep.subr.mxu0 0.0
    %1520 = vmatpush1.msra.mxu0 0.0
    %1521 = vmatprep.subr.mxu0 0.0
    %1522 = vmatpush1.msra.mxu0 0.0
    %1523 = vmatprep.subr.mxu0 0.0
    %1524 = vmatpush1.msra.mxu0 0.0
    %1525 = vmatprep.subr.mxu0 0.0
    %1526 = vmatpush1.msra.mxu0 0.0
    %1527 = vmatprep.subr.mxu0 0.0
    %1528 = vmatpush1.msra.mxu0 0.0
    %1529 = vmatprep.subr.mxu0 0.0
    %1530 = vmatpush1.msra.mxu0 0.0
    %1531 = vmatprep.subr.mxu0 0.0
    %1532 = vmatpush1.msra.mxu0 0.0
    %1533 = vmatprep.subr.mxu0 0.0
    %1534 = vmatpush1.msra.mxu0 0.0
    %1535 = vmatprep.subr.mxu0 0.0
    %1536 = vmatpush1.msra.mxu0 0.0
    %1537 = vmatprep.subr.mxu0 0.0
    %1538 = vmatpush1.msra.mxu0 0.0
    %1539 = vmatprep.subr.mxu0 0.0
    %1540 = vmatpush1.msra.mxu0 0.0
    %1541 = vmatprep.subr.mxu0 0.0
    %1542 = vmatpush1.msra.mxu0 0.0
    %1543 = vmatprep.subr.mxu0 0.0
    %1544 = vmatpush1.msra.mxu0 0.0
    %1545 = vmatprep.subr.mxu0 0.0
    %1546 = vmatpush1.msra.mxu0 0.0
    %1547 = vmatprep.subr.mxu0 0.0
    %1548 = vmatpush1.msra.mxu0 0.0
    %1549 = vmatprep.subr.mxu0 0.0
    %1550 = vmatpush1.msra.mxu0 0.0
    %1551 = vmatprep.subr.mxu0 0.0
    %1552 = vmatpush1.msra.mxu0 0.0
    %1553 = vmatprep.subr.mxu0 0.0
    %1554 = vmatpush1.msra.mxu0 0.0
    %1555 = vmatprep.subr.mxu0 0.0
    %1556 = vmatpush1.msra.mxu0 0.0
    %1557 = vmatprep.subr.mxu0 0.0
    %1558 = vmatpush1.msra.mxu0 0.0
    %1559 = vmatprep.subr.mxu0 0.0
    %1560 = vmatpush1.msra.mxu0 0.0
    %1561 = vmatprep.subr.mxu0 0.0
    %1562 = vmatpush1.msra.mxu0 0.0
    %1563 = vmatprep.subr.mxu0 0.0
    %1564 = vmatpush1.msra.mxu0 0.0
    %1565 = vmatprep.subr.mxu0 0.0
    %1566 = vmatpush1.msra.mxu0 0.0
    %1567 = vmatprep.subr.mxu0 0.0
    %1568 = vmatpush1.msra.mxu0 0.0
    %1569 = vmatprep.mubr.f32.mxu0 0.0
    %1570 = vmatmul.mubr.f32.gmra.mrb[0].mxu0 %v1503
    %v1571 = vpop.f32.mrb[0].mxu0
    %v1572 = vadd.f32 0.0, %v1571
    %v1573 = vpop.f32.mrb[0].mxu0
    %1574 = vdwg.mxu0
    %s1575 = scalar_lea.vmem %s7, 4
    %v1576 = vld [vmem:[%s1575] sm:$0xf]
    %v1578 = vsel %vm1501, %v1576, 0
    %1580 = vmatprep.subr.mxu0 0.0
    %1581 = vmatpush1.msra.mxu0 %v1499
    %1582 = vmatprep.subr.mxu0 0.0
    %1583 = vmatpush1.msra.mxu0 0.0
    %1584 = vmatprep.subr.mxu0 0.0
    %1585 = vmatpush1.msra.mxu0 0.0
    %1586 = vmatprep.subr.mxu0 0.0
    %1587 = vmatpush1.msra.mxu0 0.0
    %1588 = vmatprep.subr.mxu0 0.0
    %1589 = vmatpush1.msra.mxu0 0.0
    %1590 = vmatprep.subr.mxu0 0.0
    %1591 = vmatpush1.msra.mxu0 0.0
    %1592 = vmatprep.subr.mxu0 0.0
    %1593 = vmatpush1.msra.mxu0 0.0
    %1594 = vmatprep.subr.mxu0 0.0
    %1595 = vmatpush1.msra.mxu0 0.0
    %1596 = vmatprep.subr.mxu0 0.0
    %1597 = vmatpush1.msra.mxu0 0.0
    %1598 = vmatprep.subr.mxu0 0.0
    %1599 = vmatpush1.msra.mxu0 0.0
    %1600 = vmatprep.subr.mxu0 0.0
    %1601 = vmatpush1.msra.mxu0 0.0
    %1602 = vmatprep.subr.mxu0 0.0
    %1603 = vmatpush1.msra.mxu0 0.0
    %1604 = vmatprep.subr.mxu0 0.0
    %1605 = vmatpush1.msra.mxu0 0.0
    %1606 = vmatprep.subr.mxu0 0.0
    %1607 = vmatpush1.msra.mxu0 0.0
    %1608 = vmatprep.subr.mxu0 0.0
    %1609 = vmatpush1.msra.mxu0 0.0
    %1610 = vmatprep.subr.mxu0 0.0
    %1611 = vmatpush1.msra.mxu0 0.0
    %1612 = vmatprep.subr.mxu0 0.0
    %1613 = vmatpush1.msra.mxu0 0.0
    %1614 = vmatprep.subr.mxu0 0.0
    %1615 = vmatpush1.msra.mxu0 0.0
    %1616 = vmatprep.subr.mxu0 0.0
    %1617 = vmatpush1.msra.mxu0 0.0
    %1618 = vmatprep.subr.mxu0 0.0
    %1619 = vmatpush1.msra.mxu0 0.0
    %1620 = vmatprep.subr.mxu0 0.0
    %1621 = vmatpush1.msra.mxu0 0.0
    %1622 = vmatprep.subr.mxu0 0.0
    %1623 = vmatpush1.msra.mxu0 0.0
    %1624 = vmatprep.subr.mxu0 0.0
    %1625 = vmatpush1.msra.mxu0 0.0
    %1626 = vmatprep.subr.mxu0 0.0
    %1627 = vmatpush1.msra.mxu0 0.0
    %1628 = vmatprep.subr.mxu0 0.0
    %1629 = vmatpush1.msra.mxu0 0.0
    %1630 = vmatprep.subr.mxu0 0.0
    %1631 = vmatpush1.msra.mxu0 0.0
    %1632 = vmatprep.subr.mxu0 0.0
    %1633 = vmatpush1.msra.mxu0 0.0
    %1634 = vmatprep.subr.mxu0 0.0
    %1635 = vmatpush1.msra.mxu0 0.0
    %1636 = vmatprep.subr.mxu0 0.0
    %1637 = vmatpush1.msra.mxu0 0.0
    %1638 = vmatprep.subr.mxu0 0.0
    %1639 = vmatpush1.msra.mxu0 0.0
    %1640 = vmatprep.subr.mxu0 0.0
    %1641 = vmatpush1.msra.mxu0 0.0
    %1642 = vmatprep.subr.mxu0 0.0
    %1643 = vmatpush1.msra.mxu0 0.0
    %1644 = vmatprep.mubr.f32.mxu0 0.0
    %1645 = vmatmul.mubr.f32.gmra.mrb[0].mxu0 %v1578
    %v1646 = vpop.f32.mrb[0].mxu0
    %v1647 = vadd.f32 0.0, %v1646
    %v1648 = vpop.f32.mrb[0].mxu0
    %1649 = vdwg.mxu0
    %v1650 = vmax.f32 %v1572, %v1647
    %v1651 = vld [vmem:[%s8] sm:$0xff]
    %v1652 = vld [vmem:[%s8 + $0x8] sm:$0xff]
    %v1653 = vld [vmem:[%s8 + $0x10] sm:$0xff]
    %v1654 = vld [vmem:[%s8 + $0x18] sm:$0xff]
    %v1655 = vld [vmem:[%s8 + $0x20] sm:$0xff]
    %v1656 = vld [vmem:[%s8 + $0x28] sm:$0xff]
    %v1657 = vld [vmem:[%s8 + $0x30] sm:$0xff]
    %v1658 = vld [vmem:[%s8 + $0x38] sm:$0xff]
    %v1659 = vld [vmem:[%s8 + $0x40] sm:$0xff]
    %v1660 = vld [vmem:[%s8 + $0x48] sm:$0xff]
    %vm1661 = vcmask 654336
    %v1663 = vsel %vm1661, %v1650, 0
    %1665 = vmatprep.subr.mxu0 0.0
    %1666 = vmatpush1.msra.mxu0 %v1651
    %1667 = vmatprep.subr.mxu0 0.0
    %1668 = vmatpush1.msra.mxu0 %v1652
    %1669 = vmatprep.subr.mxu0 0.0
    %1670 = vmatpush1.msra.mxu0 %v1653
    %1671 = vmatprep.subr.mxu0 0.0
    %1672 = vmatpush1.msra.mxu0 %v1654
    %1673 = vmatprep.subr.mxu0 0.0
    %1674 = vmatpush1.msra.mxu0 %v1655
    %1675 = vmatprep.subr.mxu0 0.0
    %1676 = vmatpush1.msra.mxu0 %v1656
    %1677 = vmatprep.subr.mxu0 0.0
    %1678 = vmatpush1.msra.mxu0 %v1657
    %1679 = vmatprep.subr.mxu0 0.0
    %1680 = vmatpush1.msra.mxu0 %v1658
    %1681 = vmatprep.subr.mxu0 0.0
    %1682 = vmatpush1.msra.mxu0 %v1659
    %1683 = vmatprep.subr.mxu0 0.0
    %1684 = vmatpush1.msra.mxu0 %v1660
    %1685 = vmatprep.subr.mxu0 0.0
    %1686 = vmatpush1.msra.mxu0 0.0
    %1687 = vmatprep.subr.mxu0 0.0
    %1688 = vmatpush1.msra.mxu0 0.0
    %1689 = vmatprep.subr.mxu0 0.0
    %1690 = vmatpush1.msra.mxu0 0.0
    %1691 = vmatprep.subr.mxu0 0.0
    %1692 = vmatpush1.msra.mxu0 0.0
    %1693 = vmatprep.subr.mxu0 0.0
    %1694 = vmatpush1.msra.mxu0 0.0
    %1695 = vmatprep.subr.mxu0 0.0
    %1696 = vmatpush1.msra.mxu0 0.0
    %1697 = vmatprep.subr.mxu0 0.0
    %1698 = vmatpush1.msra.mxu0 0.0
    %1699 = vmatprep.subr.mxu0 0.0
    %1700 = vmatpush1.msra.mxu0 0.0
    %1701 = vmatprep.subr.mxu0 0.0
    %1702 = vmatpush1.msra.mxu0 0.0
    %1703 = vmatprep.subr.mxu0 0.0
    %1704 = vmatpush1.msra.mxu0 0.0
    %1705 = vmatprep.subr.mxu0 0.0
    %1706 = vmatpush1.msra.mxu0 0.0
    %1707 = vmatprep.subr.mxu0 0.0
    %1708 = vmatpush1.msra.mxu0 0.0
    %1709 = vmatprep.subr.mxu0 0.0
    %1710 = vmatpush1.msra.mxu0 0.0
    %1711 = vmatprep.subr.mxu0 0.0
    %1712 = vmatpush1.msra.mxu0 0.0
    %1713 = vmatprep.subr.mxu0 0.0
    %1714 = vmatpush1.msra.mxu0 0.0
    %1715 = vmatprep.subr.mxu0 0.0
    %1716 = vmatpush1.msra.mxu0 0.0
    %1717 = vmatprep.subr.mxu0 0.0
    %1718 = vmatpush1.msra.mxu0 0.0
    %1719 = vmatprep.subr.mxu0 0.0
    %1720 = vmatpush1.msra.mxu0 0.0
    %1721 = vmatprep.subr.mxu0 0.0
    %1722 = vmatpush1.msra.mxu0 0.0
    %1723 = vmatprep.subr.mxu0 0.0
    %1724 = vmatpush1.msra.mxu0 0.0
    %1725 = vmatprep.subr.mxu0 0.0
    %1726 = vmatpush1.msra.mxu0 0.0
    %1727 = vmatprep.subr.mxu0 0.0
    %1728 = vmatpush1.msra.mxu0 0.0
    %1729 = vmatprep.mubr.f32.mxu0 0.0
    %1730 = vmatmul.mubr.f32.gmra.mrb[0].mxu0 %v1663
    %v1731 = vpop.f32.mrb[0].mxu0
    %v1732 = vadd.f32 0.0, %v1731
    %v1733 = vpop.f32.mrb[0].mxu0
    %1734 = vdwg.mxu0
    %s1735 = scalar_lea.vmem %s8, 80
    %v1736 = vld [vmem:[%s1735] sm:$0xff]
    %v1737 = vld [vmem:[%s1735 + $0x8] sm:$0xff]
    %v1738 = vld [vmem:[%s1735 + $0x10] sm:$0xff]
    %v1739 = vld [vmem:[%s1735 + $0x18] sm:$0xff]
    %v1740 = vld [vmem:[%s1735 + $0x20] sm:$0xff]
    %v1741 = vld [vmem:[%s1735 + $0x28] sm:$0xff]
    %v1742 = vld [vmem:[%s1735 + $0x30] sm:$0xff]
    %v1743 = vld [vmem:[%s1735 + $0x38] sm:$0xff]
    %v1744 = vld [vmem:[%s1735 + $0x40] sm:$0xff]
    %v1745 = vld [vmem:[%s1735 + $0x48] sm:$0xff]
    %1746 = vmatprep.subr.mxu0 0.0
    %1747 = vmatpush1.msra.mxu0 %v1736
    %1748 = vmatprep.subr.mxu0 0.0
    %1749 = vmatpush1.msra.mxu0 %v1737
    %1750 = vmatprep.subr.mxu0 0.0
    %1751 = vmatpush1.msra.mxu0 %v1738
    %1752 = vmatprep.subr.mxu0 0.0
    %1753 = vmatpush1.msra.mxu0 %v1739
    %1754 = vmatprep.subr.mxu0 0.0
    %1755 = vmatpush1.msra.mxu0 %v1740
    %1756 = vmatprep.subr.mxu0 0.0
    %1757 = vmatpush1.msra.mxu0 %v1741
    %1758 = vmatprep.subr.mxu0 0.0
    %1759 = vmatpush1.msra.mxu0 %v1742
    %1760 = vmatprep.subr.mxu0 0.0
    %1761 = vmatpush1.msra.mxu0 %v1743
    %1762 = vmatprep.subr.mxu0 0.0
    %1763 = vmatpush1.msra.mxu0 %v1744
    %1764 = vmatprep.subr.mxu0 0.0
    %1765 = vmatpush1.msra.mxu0 %v1745
    %1766 = vmatprep.subr.mxu0 0.0
    %1767 = vmatpush1.msra.mxu0 0.0
    %1768 = vmatprep.subr.mxu0 0.0
    %1769 = vmatpush1.msra.mxu0 0.0
    %1770 = vmatprep.subr.mxu0 0.0
    %1771 = vmatpush1.msra.mxu0 0.0
    %1772 = vmatprep.subr.mxu0 0.0
    %1773 = vmatpush1.msra.mxu0 0.0
    %1774 = vmatprep.subr.mxu0 0.0
    %1775 = vmatpush1.msra.mxu0 0.0
    %1776 = vmatprep.subr.mxu0 0.0
    %1777 = vmatpush1.msra.mxu0 0.0
    %1778 = vmatprep.subr.mxu0 0.0
    %1779 = vmatpush1.msra.mxu0 0.0
    %1780 = vmatprep.subr.mxu0 0.0
    %1781 = vmatpush1.msra.mxu0 0.0
    %1782 = vmatprep.subr.mxu0 0.0
    %1783 = vmatpush1.msra.mxu0 0.0
    %1784 = vmatprep.subr.mxu0 0.0
    %1785 = vmatpush1.msra.mxu0 0.0
    %1786 = vmatprep.subr.mxu0 0.0
    %1787 = vmatpush1.msra.mxu0 0.0
    %1788 = vmatprep.subr.mxu0 0.0
    %1789 = vmatpush1.msra.mxu0 0.0
    %1790 = vmatprep.subr.mxu0 0.0
    %1791 = vmatpush1.msra.mxu0 0.0
    %1792 = vmatprep.subr.mxu0 0.0
    %1793 = vmatpush1.msra.mxu0 0.0
    %1794 = vmatprep.subr.mxu0 0.0
    %1795 = vmatpush1.msra.mxu0 0.0
    %1796 = vmatprep.subr.mxu0 0.0
    %1797 = vmatpush1.msra.mxu0 0.0
    %1798 = vmatprep.subr.mxu0 0.0
    %1799 = vmatpush1.msra.mxu0 0.0
    %1800 = vmatprep.subr.mxu0 0.0
    %1801 = vmatpush1.msra.mxu0 0.0
    %1802 = vmatprep.subr.mxu0 0.0
    %1803 = vmatpush1.msra.mxu0 0.0
    %1804 = vmatprep.subr.mxu0 0.0
    %1805 = vmatpush1.msra.mxu0 0.0
    %1806 = vmatprep.subr.mxu0 0.0
    %1807 = vmatpush1.msra.mxu0 0.0
    %1808 = vmatprep.subr.mxu0 0.0
    %1809 = vmatpush1.msra.mxu0 0.0
    %1810 = vmatprep.mubr.f32.mxu0 0.0
    %1811 = vmatmul.mubr.f32.gmra.mrb[0].mxu0 %v1663
    %v1812 = vpop.f32.mrb[0].mxu0
    %v1813 = vadd.f32 0.0, %v1812
    %v1814 = vpop.f32.mrb[0].mxu0
    %1815 = vdwg.mxu0
    %v1816 = vmax.f32 %v1732, %v1813
    %v1817 = vld [vmem:[#allocation6] sm:$0xff]
    %v1818 = vld [vmem:[#allocation6 + $0x8] sm:$0xff]
    %v1819 = vld [vmem:[#allocation6 + $0x10] sm:$0xff]
    %v1820 = vld [vmem:[#allocation6 + $0x18] sm:$0xff]
    %v1821 = vld [vmem:[#allocation6 + $0x20] sm:$0xff]
    %s1822 = scalar_lea.vmem [#allocation6], 40
    %v1823 = vld [vmem:[%s1822] sm:$0xff]
    %v1824 = vld [vmem:[%s1822 + $0x8] sm:$0xff]
    %v1825 = vld [vmem:[%s1822 + $0x10] sm:$0xff]
    %v1826 = vld [vmem:[%s1822 + $0x18] sm:$0xff]
    %v1827 = vld [vmem:[%s1822 + $0x20] sm:$0xff]
    %v1829 = vrot.slane %v1816, 1
    %vm1830 = vcmask 326656
    %v1831 = vsel %vm1830, %v1829, 0
    %1833 = vmatprep.subr.mxu0 0.0
    %1834 = vmatpush1.msra.mxu0 %v1823
    %1835 = vmatprep.subr.mxu0 0.0
    %1836 = vmatpush1.msra.mxu0 %v1824
    %1837 = vmatprep.subr.mxu0 0.0
    %1838 = vmatpush1.msra.mxu0 %v1825
    %1839 = vmatprep.subr.mxu0 0.0
    %1840 = vmatpush1.msra.mxu0 %v1826
    %1841 = vmatprep.subr.mxu0 0.0
    %1842 = vmatpush1.msra.mxu0 %v1827
    %1843 = vmatprep.subr.mxu0 0.0
    %1844 = vmatpush1.msra.mxu0 0.0
    %1845 = vmatprep.subr.mxu0 0.0
    %1846 = vmatpush1.msra.mxu0 0.0
    %1847 = vmatprep.subr.mxu0 0.0
    %1848 = vmatpush1.msra.mxu0 0.0
    %1849 = vmatprep.subr.mxu0 0.0
    %1850 = vmatpush1.msra.mxu0 0.0
    %1851 = vmatprep.subr.mxu0 0.0
    %1852 = vmatpush1.msra.mxu0 0.0
    %1853 = vmatprep.subr.mxu0 0.0
    %1854 = vmatpush1.msra.mxu0 0.0
    %1855 = vmatprep.subr.mxu0 0.0
    %1856 = vmatpush1.msra.mxu0 0.0
    %1857 = vmatprep.subr.mxu0 0.0
    %1858 = vmatpush1.msra.mxu0 0.0
    %1859 = vmatprep.subr.mxu0 0.0
    %1860 = vmatpush1.msra.mxu0 0.0
    %1861 = vmatprep.subr.mxu0 0.0
    %1862 = vmatpush1.msra.mxu0 0.0
    %1863 = vmatprep.subr.mxu0 0.0
    %1864 = vmatpush1.msra.mxu0 0.0
    %1865 = vmatprep.subr.mxu0 0.0
    %1866 = vmatpush1.msra.mxu0 0.0
    %1867 = vmatprep.subr.mxu0 0.0
    %1868 = vmatpush1.msra.mxu0 0.0
    %1869 = vmatprep.subr.mxu0 0.0
    %1870 = vmatpush1.msra.mxu0 0.0
    %1871 = vmatprep.subr.mxu0 0.0
    %1872 = vmatpush1.msra.mxu0 0.0
    %1873 = vmatprep.subr.mxu0 0.0
    %1874 = vmatpush1.msra.mxu0 0.0
    %1875 = vmatprep.subr.mxu0 0.0
    %1876 = vmatpush1.msra.mxu0 0.0
    %1877 = vmatprep.subr.mxu0 0.0
    %1878 = vmatpush1.msra.mxu0 0.0
    %1879 = vmatprep.subr.mxu0 0.0
    %1880 = vmatpush1.msra.mxu0 0.0
    %1881 = vmatprep.subr.mxu0 0.0
    %1882 = vmatpush1.msra.mxu0 0.0
    %1883 = vmatprep.subr.mxu0 0.0
    %1884 = vmatpush1.msra.mxu0 0.0
    %1885 = vmatprep.subr.mxu0 0.0
    %1886 = vmatpush1.msra.mxu0 0.0
    %1887 = vmatprep.subr.mxu0 0.0
    %1888 = vmatpush1.msra.mxu0 0.0
    %1889 = vmatprep.subr.mxu0 0.0
    %1890 = vmatpush1.msra.mxu0 0.0
    %1891 = vmatprep.subr.mxu0 0.0
    %1892 = vmatpush1.msra.mxu0 0.0
    %1893 = vmatprep.subr.mxu0 0.0
    %1894 = vmatpush1.msra.mxu0 0.0
    %1895 = vmatprep.subr.mxu0 0.0
    %1896 = vmatpush1.msra.mxu0 0.0
    %1897 = vmatprep.mubr.f32.mxu0 0.0
    %1898 = vmatmul.mubr.f32.gmra.mrb[0].mxu0 %v1831
    %v1899 = vpop.f32.mrb[0].mxu0
    %v1900 = vadd.f32 0.0, %v1899
    %v1901 = vpop.f32.mrb[0].mxu0
    %1902 = vdwg.mxu0
    %v1903 = vsel %vm1830, %v1816, 0
    %1905 = vmatprep.subr.mxu0 0.0
    %1906 = vmatpush1.msra.mxu0 %v1817
    %1907 = vmatprep.subr.mxu0 0.0
    %1908 = vmatpush1.msra.mxu0 %v1818
    %1909 = vmatprep.subr.mxu0 0.0
    %1910 = vmatpush1.msra.mxu0 %v1819
    %1911 = vmatprep.subr.mxu0 0.0
    %1912 = vmatpush1.msra.mxu0 %v1820
    %1913 = vmatprep.subr.mxu0 0.0
    %1914 = vmatpush1.msra.mxu0 %v1821
    %1915 = vmatprep.subr.mxu0 0.0
    %1916 = vmatpush1.msra.mxu0 0.0
    %1917 = vmatprep.subr.mxu0 0.0
    %1918 = vmatpush1.msra.mxu0 0.0
    %1919 = vmatprep.subr.mxu0 0.0
    %1920 = vmatpush1.msra.mxu0 0.0
    %1921 = vmatprep.subr.mxu0 0.0
    %1922 = vmatpush1.msra.mxu0 0.0
    %1923 = vmatprep.subr.mxu0 0.0
    %1924 = vmatpush1.msra.mxu0 0.0
    %1925 = vmatprep.subr.mxu0 0.0
    %1926 = vmatpush1.msra.mxu0 0.0
    %1927 = vmatprep.subr.mxu0 0.0
    %1928 = vmatpush1.msra.mxu0 0.0
    %1929 = vmatprep.subr.mxu0 0.0
    %1930 = vmatpush1.msra.mxu0 0.0
    %1931 = vmatprep.subr.mxu0 0.0
    %1932 = vmatpush1.msra.mxu0 0.0
    %1933 = vmatprep.subr.mxu0 0.0
    %1934 = vmatpush1.msra.mxu0 0.0
    %1935 = vmatprep.subr.mxu0 0.0
    %1936 = vmatpush1.msra.mxu0 0.0
    %1937 = vmatprep.subr.mxu0 0.0
    %1938 = vmatpush1.msra.mxu0 0.0
    %1939 = vmatprep.subr.mxu0 0.0
    %1940 = vmatpush1.msra.mxu0 0.0
    %1941 = vmatprep.subr.mxu0 0.0
    %1942 = vmatpush1.msra.mxu0 0.0
    %1943 = vmatprep.subr.mxu0 0.0
    %1944 = vmatpush1.msra.mxu0 0.0
    %1945 = vmatprep.subr.mxu0 0.0
    %1946 = vmatpush1.msra.mxu0 0.0
    %1947 = vmatprep.subr.mxu0 0.0
    %1948 = vmatpush1.msra.mxu0 0.0
    %1949 = vmatprep.subr.mxu0 0.0
    %1950 = vmatpush1.msra.mxu0 0.0
    %1951 = vmatprep.subr.mxu0 0.0
    %1952 = vmatpush1.msra.mxu0 0.0
    %1953 = vmatprep.subr.mxu0 0.0
    %1954 = vmatpush1.msra.mxu0 0.0
    %1955 = vmatprep.subr.mxu0 0.0
    %1956 = vmatpush1.msra.mxu0 0.0
    %1957 = vmatprep.subr.mxu0 0.0
    %1958 = vmatpush1.msra.mxu0 0.0
    %1959 = vmatprep.subr.mxu0 0.0
    %1960 = vmatpush1.msra.mxu0 0.0
    %1961 = vmatprep.subr.mxu0 0.0
    %1962 = vmatpush1.msra.mxu0 0.0
    %1963 = vmatprep.subr.mxu0 0.0
    %1964 = vmatpush1.msra.mxu0 0.0
    %1965 = vmatprep.subr.mxu0 0.0
    %1966 = vmatpush1.msra.mxu0 0.0
    %1967 = vmatprep.subr.mxu0 0.0
    %1968 = vmatpush1.msra.mxu0 0.0
    %1969 = vmatprep.mubr.f32.mxu0 0.0
    %1970 = vmatmul.mubr.f32.gmra.mrb[0].mxu0 %v1903
    %v1971 = vpop.f32.mrb[0].mxu0
    %v1972 = vadd.f32 %v1900, %v1971
    %v1973 = vpop.f32.mrb[0].mxu0
    %1974 = vdwg.mxu0
    %s1975 = scalar_lea.vmem [#allocation6], 80
    %v1976 = vld [vmem:[%s1975] sm:$0xff]
    %v1977 = vld [vmem:[%s1975 + $0x8] sm:$0xff]
    %v1978 = vld [vmem:[%s1975 + $0x10] sm:$0xff]
    %v1979 = vld [vmem:[%s1975 + $0x18] sm:$0xff]
    %v1980 = vld [vmem:[%s1975 + $0x20] sm:$0xff]
    %v1981 = vrot.slane %v1816, 2
    %v1982 = vsel %vm1830, %v1981, 0
    %1984 = vmatprep.subr.mxu0 0.0
    %1985 = vmatpush1.msra.mxu0 %v1976
    %1986 = vmatprep.subr.mxu0 0.0
    %1987 = vmatpush1.msra.mxu0 %v1977
    %1988 = vmatprep.subr.mxu0 0.0
    %1989 = vmatpush1.msra.mxu0 %v1978
    %1990 = vmatprep.subr.mxu0 0.0
    %1991 = vmatpush1.msra.mxu0 %v1979
    %1992 = vmatprep.subr.mxu0 0.0
    %1993 = vmatpush1.msra.mxu0 %v1980
    %1994 = vmatprep.subr.mxu0 0.0
    %1995 = vmatpush1.msra.mxu0 0.0
    %1996 = vmatprep.subr.mxu0 0.0
    %1997 = vmatpush1.msra.mxu0 0.0
    %1998 = vmatprep.subr.mxu0 0.0
    %1999 = vmatpush1.msra.mxu0 0.0
    %2000 = vmatprep.subr.mxu0 0.0
    %2001 = vmatpush1.msra.mxu0 0.0
    %2002 = vmatprep.subr.mxu0 0.0
    %2003 = vmatpush1.msra.mxu0 0.0
    %2004 = vmatprep.subr.mxu0 0.0
    %2005 = vmatpush1.msra.mxu0 0.0
    %2006 = vmatprep.subr.mxu0 0.0
    %2007 = vmatpush1.msra.mxu0 0.0
    %2008 = vmatprep.subr.mxu0 0.0
    %2009 = vmatpush1.msra.mxu0 0.0
    %2010 = vmatprep.subr.mxu0 0.0
    %2011 = vmatpush1.msra.mxu0 0.0
    %2012 = vmatprep.subr.mxu0 0.0
    %2013 = vmatpush1.msra.mxu0 0.0
    %2014 = vmatprep.subr.mxu0 0.0
    %2015 = vmatpush1.msra.mxu0 0.0
    %2016 = vmatprep.subr.mxu0 0.0
    %2017 = vmatpush1.msra.mxu0 0.0
    %2018 = vmatprep.subr.mxu0 0.0
    %2019 = vmatpush1.msra.mxu0 0.0
    %2020 = vmatprep.subr.mxu0 0.0
    %2021 = vmatpush1.msra.mxu0 0.0
    %2022 = vmatprep.subr.mxu0 0.0
    %2023 = vmatpush1.msra.mxu0 0.0
    %2024 = vmatprep.subr.mxu0 0.0
    %2025 = vmatpush1.msra.mxu0 0.0
    %2026 = vmatprep.subr.mxu0 0.0
    %2027 = vmatpush1.msra.mxu0 0.0
    %2028 = vmatprep.subr.mxu0 0.0
    %2029 = vmatpush1.msra.mxu0 0.0
    %2030 = vmatprep.subr.mxu0 0.0
    %2031 = vmatpush1.msra.mxu0 0.0
    %2032 = vmatprep.subr.mxu0 0.0
    %2033 = vmatpush1.msra.mxu0 0.0
    %2034 = vmatprep.subr.mxu0 0.0
    %2035 = vmatpush1.msra.mxu0 0.0
    %2036 = vmatprep.subr.mxu0 0.0
    %2037 = vmatpush1.msra.mxu0 0.0
    %2038 = vmatprep.subr.mxu0 0.0
    %2039 = vmatpush1.msra.mxu0 0.0
    %2040 = vmatprep.subr.mxu0 0.0
    %2041 = vmatpush1.msra.mxu0 0.0
    %2042 = vmatprep.subr.mxu0 0.0
    %2043 = vmatpush1.msra.mxu0 0.0
    %2044 = vmatprep.subr.mxu0 0.0
    %2045 = vmatpush1.msra.mxu0 0.0
    %2046 = vmatprep.subr.mxu0 0.0
    %2047 = vmatpush1.msra.mxu0 0.0
    %2048 = vmatprep.mubr.f32.mxu0 0.0
    %2049 = vmatmul.mubr.f32.gmra.mrb[0].mxu0 %v1982
    %v2050 = vpop.f32.mrb[0].mxu0
    %v2051 = vadd.f32 0.0, %v2050
    %v2052 = vpop.f32.mrb[0].mxu0
    %2053 = vdwg.mxu0
    %v2054 = vadd.f32 %v1972, %v2051
    %s2055 = scalar_lea.vmem [#allocation6], 120
    %v2056 = vld [vmem:[%s2055] sm:$0xff]
    %v2057 = vld [vmem:[%s2055 + $0x8] sm:$0xff]
    %v2058 = vld [vmem:[%s2055 + $0x10] sm:$0xff]
    %v2059 = vld [vmem:[%s2055 + $0x18] sm:$0xff]
    %v2060 = vld [vmem:[%s2055 + $0x20] sm:$0xff]
    %v2061 = vrot.slane %v1816, 3
    %v2062 = vsel %vm1830, %v2061, 0
    %2064 = vmatprep.subr.mxu0 0.0
    %2065 = vmatpush1.msra.mxu0 %v2056
    %2066 = vmatprep.subr.mxu0 0.0
    %2067 = vmatpush1.msra.mxu0 %v2057
    %2068 = vmatprep.subr.mxu0 0.0
    %2069 = vmatpush1.msra.mxu0 %v2058
    %2070 = vmatprep.subr.mxu0 0.0
    %2071 = vmatpush1.msra.mxu0 %v2059
    %2072 = vmatprep.subr.mxu0 0.0
    %2073 = vmatpush1.msra.mxu0 %v2060
    %2074 = vmatprep.subr.mxu0 0.0
    %2075 = vmatpush1.msra.mxu0 0.0
    %2076 = vmatprep.subr.mxu0 0.0
    %2077 = vmatpush1.msra.mxu0 0.0
    %2078 = vmatprep.subr.mxu0 0.0
    %2079 = vmatpush1.msra.mxu0 0.0
    %2080 = vmatprep.subr.mxu0 0.0
    %2081 = vmatpush1.msra.mxu0 0.0
    %2082 = vmatprep.subr.mxu0 0.0
    %2083 = vmatpush1.msra.mxu0 0.0
    %2084 = vmatprep.subr.mxu0 0.0
    %2085 = vmatpush1.msra.mxu0 0.0
    %2086 = vmatprep.subr.mxu0 0.0
    %2087 = vmatpush1.msra.mxu0 0.0
    %2088 = vmatprep.subr.mxu0 0.0
    %2089 = vmatpush1.msra.mxu0 0.0
    %2090 = vmatprep.subr.mxu0 0.0
    %2091 = vmatpush1.msra.mxu0 0.0
    %2092 = vmatprep.subr.mxu0 0.0
    %2093 = vmatpush1.msra.mxu0 0.0
    %2094 = vmatprep.subr.mxu0 0.0
    %2095 = vmatpush1.msra.mxu0 0.0
    %2096 = vmatprep.subr.mxu0 0.0
    %2097 = vmatpush1.msra.mxu0 0.0
    %2098 = vmatprep.subr.mxu0 0.0
    %2099 = vmatpush1.msra.mxu0 0.0
    %2100 = vmatprep.subr.mxu0 0.0
    %2101 = vmatpush1.msra.mxu0 0.0
    %2102 = vmatprep.subr.mxu0 0.0
    %2103 = vmatpush1.msra.mxu0 0.0
    %2104 = vmatprep.subr.mxu0 0.0
    %2105 = vmatpush1.msra.mxu0 0.0
    %2106 = vmatprep.subr.mxu0 0.0
    %2107 = vmatpush1.msra.mxu0 0.0
    %2108 = vmatprep.subr.mxu0 0.0
    %2109 = vmatpush1.msra.mxu0 0.0
    %2110 = vmatprep.subr.mxu0 0.0
    %2111 = vmatpush1.msra.mxu0 0.0
    %2112 = vmatprep.subr.mxu0 0.0
    %2113 = vmatpush1.msra.mxu0 0.0
    %2114 = vmatprep.subr.mxu0 0.0
    %2115 = vmatpush1.msra.mxu0 0.0
    %2116 = vmatprep.subr.mxu0 0.0
    %2117 = vmatpush1.msra.mxu0 0.0
    %2118 = vmatprep.subr.mxu0 0.0
    %2119 = vmatpush1.msra.mxu0 0.0
    %2120 = vmatprep.subr.mxu0 0.0
    %2121 = vmatpush1.msra.mxu0 0.0
    %2122 = vmatprep.subr.mxu0 0.0
    %2123 = vmatpush1.msra.mxu0 0.0
    %2124 = vmatprep.subr.mxu0 0.0
    %2125 = vmatpush1.msra.mxu0 0.0
    %2126 = vmatprep.subr.mxu0 0.0
    %2127 = vmatpush1.msra.mxu0 0.0
    %2128 = vmatprep.mubr.f32.mxu0 0.0
    %2129 = vmatmul.mubr.f32.gmra.mrb[0].mxu0 %v2062
    %v2130 = vpop.f32.mrb[0].mxu0
    %v2131 = vadd.f32 0.0, %v2130
    %v2132 = vpop.f32.mrb[0].mxu0
    %2133 = vdwg.mxu0
    %v2134 = vadd.f32 %v2054, %v2131
    %vm2135 = vcmask 647168
    %2136 = vst.msk [vmem:[#allocation2] sm:$0x1] %vm2135, %v2134
    %s2137 = scalar_lea.vmem %s0, 32
    %v2138 = vld [vmem:[%s2137] sm:$0xff]
    %v2139 = vld [vmem:[%s2137 + $0x8] sm:$0xff]
    %v2140 = vld [vmem:[%s2137 + $0x10] sm:$0xff]
    %v2141 = vld [vmem:[%s2137 + $0x18] sm:$0xf]
    %v2142 = vld [vmem:[#allocation3] sm:$0xff]
    %v2143 = vld [vmem:[#allocation3 + $0x8] sm:$0xff]
    %v2144 = vld [vmem:[#allocation3 + $0x10] sm:$0xff]
    %v2145 = vld [vmem:[#allocation3 + $0x18] sm:$0xff]
    %v2146 = vld [vmem:[#allocation3 + $0x20] sm:$0xff]
    %v2147 = vld [vmem:[#allocation3 + $0x28] sm:$0xff]
    %v2148 = vld [vmem:[#allocation3 + $0x30] sm:$0xf]
    %v2149 = vld [vmem:[#allocation3 + $0x38] sm:$0xf]
    %v2150 = vld [vmem:[%s102] sm:$0xff]
    %v2151 = vld [vmem:[%s102 + $0x8] sm:$0xff]
    %v2152 = vld [vmem:[%s102 + $0x10] sm:$0xff]
    %v2153 = vld [vmem:[%s102 + $0x18] sm:$0xff]
    %v2154 = vld [vmem:[%s102 + $0x20] sm:$0xff]
    %v2155 = vld [vmem:[%s102 + $0x28] sm:$0xff]
    %v2156 = vld [vmem:[%s102 + $0x30] sm:$0xf]
    %v2157 = vld [vmem:[%s102 + $0x38] sm:$0xf]
    %v2162 = vrot.slane %v2138, 1
    %v2163 = vrot.slane %v2139, 1
    %v2164 = vsel %vm115, %v2162, %v2163
    %v2165 = vrot.slane %v2140, 1
    %v2166 = vsel %vm115, %v2163, %v2165
    %v2167 = vrot.slane %v2141, 1
    %v2168 = vsel %vm115, %v2165, %v2167
    %v2169 = vsel %vm123, %v2164, 0
    %v2171 = vsel %vm123, %v2166, 0
    %v2173 = vsel %vm123, %v2168, 0
    %v2176 = vsel %vm130, %v2156, 0
    %v2179 = vsel %vm130, %v2157, 0
    %2181 = vmatprep.subr.mxu0 %v2151
    %2182 = vmatpush1.msra.mxu0 %v2150
    %2183 = vmatprep.subr.mxu0 %v2153
    %2184 = vmatpush1.msra.mxu0 %v2152
    %2185 = vmatprep.subr.mxu0 %v2155
    %2186 = vmatpush1.msra.mxu0 %v2154
    %2187 = vmatprep.subr.mxu0 %v2179
    %2188 = vmatpush1.msra.mxu0 %v2176
    %2189 = vmatprep.subr.mxu0 0.0
    %2190 = vmatpush1.msra.mxu0 0.0
    %2191 = vmatprep.subr.mxu0 0.0
    %2192 = vmatpush1.msra.mxu0 0.0
    %2193 = vmatprep.subr.mxu0 0.0
    %2194 = vmatpush1.msra.mxu0 0.0
    %2195 = vmatprep.subr.mxu0 0.0
    %2196 = vmatpush1.msra.mxu0 0.0
    %2197 = vmatprep.subr.mxu0 0.0
    %2198 = vmatpush1.msra.mxu0 0.0
    %2199 = vmatprep.subr.mxu0 0.0
    %2200 = vmatpush1.msra.mxu0 0.0
    %2201 = vmatprep.subr.mxu0 0.0
    %2202 = vmatpush1.msra.mxu0 0.0
    %2203 = vmatprep.subr.mxu0 0.0
    %2204 = vmatpush1.msra.mxu0 0.0
    %2205 = vmatprep.subr.mxu0 0.0
    %2206 = vmatpush1.msra.mxu0 0.0
    %2207 = vmatprep.subr.mxu0 0.0
    %2208 = vmatpush1.msra.mxu0 0.0
    %2209 = vmatprep.subr.mxu0 0.0
    %2210 = vmatpush1.msra.mxu0 0.0
    %2211 = vmatprep.subr.mxu0 0.0
    %2212 = vmatpush1.msra.mxu0 0.0
    %2213 = vmatprep.subr.mxu0 0.0
    %2214 = vmatpush1.msra.mxu0 0.0
    %2215 = vmatprep.subr.mxu0 0.0
    %2216 = vmatpush1.msra.mxu0 0.0
    %2217 = vmatprep.subr.mxu0 0.0
    %2218 = vmatpush1.msra.mxu0 0.0
    %2219 = vmatprep.subr.mxu0 0.0
    %2220 = vmatpush1.msra.mxu0 0.0
    %2221 = vmatprep.subr.mxu0 0.0
    %2222 = vmatpush1.msra.mxu0 0.0
    %2223 = vmatprep.subr.mxu0 0.0
    %2224 = vmatpush1.msra.mxu0 0.0
    %2225 = vmatprep.subr.mxu0 0.0
    %2226 = vmatpush1.msra.mxu0 0.0
    %2227 = vmatprep.subr.mxu0 0.0
    %2228 = vmatpush1.msra.mxu0 0.0
    %2229 = vmatprep.subr.mxu0 0.0
    %2230 = vmatpush1.msra.mxu0 0.0
    %2231 = vmatprep.subr.mxu0 0.0
    %2232 = vmatpush1.msra.mxu0 0.0
    %2233 = vmatprep.subr.mxu0 0.0
    %2234 = vmatpush1.msra.mxu0 0.0
    %2235 = vmatprep.subr.mxu0 0.0
    %2236 = vmatpush1.msra.mxu0 0.0
    %2237 = vmatprep.subr.mxu0 0.0
    %2238 = vmatpush1.msra.mxu0 0.0
    %2239 = vmatprep.subr.mxu0 0.0
    %2240 = vmatpush1.msra.mxu0 0.0
    %2241 = vmatprep.subr.mxu0 0.0
    %2242 = vmatpush1.msra.mxu0 0.0
    %2243 = vmatprep.subr.mxu0 0.0
    %2244 = vmatpush1.msra.mxu0 0.0
    %2245 = vmatprep.mubr.f32.mxu0 0.0
    %2246 = vmatmul.mubr.f32.gmra.mrb[0].mxu0 %v2169
    %v2247 = vpop.f32.mrb[0].mxu0
    %v2248 = vadd.f32 0.0, %v2247
    %v2249 = vpop.f32.mrb[0].mxu0
    %v2250 = vadd.f32 0.0, %v2249
    %2251 = vmatprep.mubr.f32.mxu0 0.0
    %2252 = vmatmul.mubr.f32.gmra.mrb[0].mxu0 %v2171
    %v2253 = vpop.f32.mrb[0].mxu0
    %v2254 = vadd.f32 0.0, %v2253
    %v2255 = vpop.f32.mrb[0].mxu0
    %v2256 = vadd.f32 0.0, %v2255
    %2257 = vmatprep.mubr.f32.mxu0 0.0
    %2258 = vmatmul.mubr.f32.gmra.mrb[0].mxu0 %v2173
    %v2259 = vpop.f32.mrb[0].mxu0
    %v2260 = vadd.f32 0.0, %v2259
    %v2261 = vpop.f32.mrb[0].mxu0
    %v2262 = vadd.f32 0.0, %v2261
    %2263 = vdwg.mxu0
    %v2264 = vsel %vm123, %v2138, 0
    %v2266 = vsel %vm123, %v2139, 0
    %v2268 = vsel %vm123, %v2140, 0
    %v2271 = vsel %vm130, %v2148, 0
    %v2274 = vsel %vm130, %v2149, 0
    %2276 = vmatprep.subr.mxu0 %v2143
    %2277 = vmatpush1.msra.mxu0 %v2142
    %2278 = vmatprep.subr.mxu0 %v2145
    %2279 = vmatpush1.msra.mxu0 %v2144
    %2280 = vmatprep.subr.mxu0 %v2147
    %2281 = vmatpush1.msra.mxu0 %v2146
    %2282 = vmatprep.subr.mxu0 %v2274
    %2283 = vmatpush1.msra.mxu0 %v2271
    %2284 = vmatprep.subr.mxu0 0.0
    %2285 = vmatpush1.msra.mxu0 0.0
    %2286 = vmatprep.subr.mxu0 0.0
    %2287 = vmatpush1.msra.mxu0 0.0
    %2288 = vmatprep.subr.mxu0 0.0
    %2289 = vmatpush1.msra.mxu0 0.0
    %2290 = vmatprep.subr.mxu0 0.0
    %2291 = vmatpush1.msra.mxu0 0.0
    %2292 = vmatprep.subr.mxu0 0.0
    %2293 = vmatpush1.msra.mxu0 0.0
    %2294 = vmatprep.subr.mxu0 0.0
    %2295 = vmatpush1.msra.mxu0 0.0
    %2296 = vmatprep.subr.mxu0 0.0
    %2297 = vmatpush1.msra.mxu0 0.0
    %2298 = vmatprep.subr.mxu0 0.0
    %2299 = vmatpush1.msra.mxu0 0.0
    %2300 = vmatprep.subr.mxu0 0.0
    %2301 = vmatpush1.msra.mxu0 0.0
    %2302 = vmatprep.subr.mxu0 0.0
    %2303 = vmatpush1.msra.mxu0 0.0
    %2304 = vmatprep.subr.mxu0 0.0
    %2305 = vmatpush1.msra.mxu0 0.0
    %2306 = vmatprep.subr.mxu0 0.0
    %2307 = vmatpush1.msra.mxu0 0.0
    %2308 = vmatprep.subr.mxu0 0.0
    %2309 = vmatpush1.msra.mxu0 0.0
    %2310 = vmatprep.subr.mxu0 0.0
    %2311 = vmatpush1.msra.mxu0 0.0
    %2312 = vmatprep.subr.mxu0 0.0
    %2313 = vmatpush1.msra.mxu0 0.0
    %2314 = vmatprep.subr.mxu0 0.0
    %2315 = vmatpush1.msra.mxu0 0.0
    %2316 = vmatprep.subr.mxu0 0.0
    %2317 = vmatpush1.msra.mxu0 0.0
    %2318 = vmatprep.subr.mxu0 0.0
    %2319 = vmatpush1.msra.mxu0 0.0
    %2320 = vmatprep.subr.mxu0 0.0
    %2321 = vmatpush1.msra.mxu0 0.0
    %2322 = vmatprep.subr.mxu0 0.0
    %2323 = vmatpush1.msra.mxu0 0.0
    %2324 = vmatprep.subr.mxu0 0.0
    %2325 = vmatpush1.msra.mxu0 0.0
    %2326 = vmatprep.subr.mxu0 0.0
    %2327 = vmatpush1.msra.mxu0 0.0
    %2328 = vmatprep.subr.mxu0 0.0
    %2329 = vmatpush1.msra.mxu0 0.0
    %2330 = vmatprep.subr.mxu0 0.0
    %2331 = vmatpush1.msra.mxu0 0.0
    %2332 = vmatprep.subr.mxu0 0.0
    %2333 = vmatpush1.msra.mxu0 0.0
    %2334 = vmatprep.subr.mxu0 0.0
    %2335 = vmatpush1.msra.mxu0 0.0
    %2336 = vmatprep.subr.mxu0 0.0
    %2337 = vmatpush1.msra.mxu0 0.0
    %2338 = vmatprep.subr.mxu0 0.0
    %2339 = vmatpush1.msra.mxu0 0.0
    %2340 = vmatprep.mubr.f32.mxu0 0.0
    %2341 = vmatmul.mubr.f32.gmra.mrb[0].mxu0 %v2264
    %v2342 = vpop.f32.mrb[0].mxu0
    %v2343 = vadd.f32 %v2248, %v2342
    %v2344 = vpop.f32.mrb[0].mxu0
    %v2345 = vadd.f32 %v2250, %v2344
    %2346 = vmatprep.mubr.f32.mxu0 0.0
    %2347 = vmatmul.mubr.f32.gmra.mrb[0].mxu0 %v2266
    %v2348 = vpop.f32.mrb[0].mxu0
    %v2349 = vadd.f32 %v2254, %v2348
    %v2350 = vpop.f32.mrb[0].mxu0
    %v2351 = vadd.f32 %v2256, %v2350
    %2352 = vmatprep.mubr.f32.mxu0 0.0
    %2353 = vmatmul.mubr.f32.gmra.mrb[0].mxu0 %v2268
    %v2354 = vpop.f32.mrb[0].mxu0
    %v2355 = vadd.f32 %v2260, %v2354
    %v2356 = vpop.f32.mrb[0].mxu0
    %v2357 = vadd.f32 %v2262, %v2356
    %2358 = vdwg.mxu0
    %v2359 = vld [vmem:[%s315] sm:$0xff]
    %v2360 = vld [vmem:[%s315 + $0x8] sm:$0xff]
    %v2361 = vld [vmem:[%s315 + $0x10] sm:$0xff]
    %v2362 = vld [vmem:[%s315 + $0x18] sm:$0xff]
    %v2363 = vld [vmem:[%s315 + $0x20] sm:$0xff]
    %v2364 = vld [vmem:[%s315 + $0x28] sm:$0xff]
    %v2365 = vld [vmem:[%s315 + $0x30] sm:$0xf]
    %v2366 = vld [vmem:[%s315 + $0x38] sm:$0xf]
    %v2367 = vrot.slane %v2138, 2
    %v2368 = vrot.slane %v2139, 2
    %v2369 = vsel %vm324, %v2367, %v2368
    %v2370 = vrot.slane %v2140, 2
    %v2371 = vsel %vm324, %v2368, %v2370
    %v2372 = vrot.slane %v2141, 2
    %v2373 = vsel %vm324, %v2370, %v2372
    %v2374 = vsel %vm123, %v2369, 0
    %v2376 = vsel %vm123, %v2371, 0
    %v2378 = vsel %vm123, %v2373, 0
    %v2381 = vsel %vm130, %v2365, 0
    %v2384 = vsel %vm130, %v2366, 0
    %2386 = vmatprep.subr.mxu0 %v2360
    %2387 = vmatpush1.msra.mxu0 %v2359
    %2388 = vmatprep.subr.mxu0 %v2362
    %2389 = vmatpush1.msra.mxu0 %v2361
    %2390 = vmatprep.subr.mxu0 %v2364
    %2391 = vmatpush1.msra.mxu0 %v2363
    %2392 = vmatprep.subr.mxu0 %v2384
    %2393 = vmatpush1.msra.mxu0 %v2381
    %2394 = vmatprep.subr.mxu0 0.0
    %2395 = vmatpush1.msra.mxu0 0.0
    %2396 = vmatprep.subr.mxu0 0.0
    %2397 = vmatpush1.msra.mxu0 0.0
    %2398 = vmatprep.subr.mxu0 0.0
    %2399 = vmatpush1.msra.mxu0 0.0
    %2400 = vmatprep.subr.mxu0 0.0
    %2401 = vmatpush1.msra.mxu0 0.0
    %2402 = vmatprep.subr.mxu0 0.0
    %2403 = vmatpush1.msra.mxu0 0.0
    %2404 = vmatprep.subr.mxu0 0.0
    %2405 = vmatpush1.msra.mxu0 0.0
    %2406 = vmatprep.subr.mxu0 0.0
    %2407 = vmatpush1.msra.mxu0 0.0
    %2408 = vmatprep.subr.mxu0 0.0
    %2409 = vmatpush1.msra.mxu0 0.0
    %2410 = vmatprep.subr.mxu0 0.0
    %2411 = vmatpush1.msra.mxu0 0.0
    %2412 = vmatprep.subr.mxu0 0.0
    %2413 = vmatpush1.msra.mxu0 0.0
    %2414 = vmatprep.subr.mxu0 0.0
    %2415 = vmatpush1.msra.mxu0 0.0
    %2416 = vmatprep.subr.mxu0 0.0
    %2417 = vmatpush1.msra.mxu0 0.0
    %2418 = vmatprep.subr.mxu0 0.0
    %2419 = vmatpush1.msra.mxu0 0.0
    %2420 = vmatprep.subr.mxu0 0.0
    %2421 = vmatpush1.msra.mxu0 0.0
    %2422 = vmatprep.subr.mxu0 0.0
    %2423 = vmatpush1.msra.mxu0 0.0
    %2424 = vmatprep.subr.mxu0 0.0
    %2425 = vmatpush1.msra.mxu0 0.0
    %2426 = vmatprep.subr.mxu0 0.0
    %2427 = vmatpush1.msra.mxu0 0.0
    %2428 = vmatprep.subr.mxu0 0.0
    %2429 = vmatpush1.msra.mxu0 0.0
    %2430 = vmatprep.subr.mxu0 0.0
    %2431 = vmatpush1.msra.mxu0 0.0
    %2432 = vmatprep.subr.mxu0 0.0
    %2433 = vmatpush1.msra.mxu0 0.0
    %2434 = vmatprep.subr.mxu0 0.0
    %2435 = vmatpush1.msra.mxu0 0.0
    %2436 = vmatprep.subr.mxu0 0.0
    %2437 = vmatpush1.msra.mxu0 0.0
    %2438 = vmatprep.subr.mxu0 0.0
    %2439 = vmatpush1.msra.mxu0 0.0
    %2440 = vmatprep.subr.mxu0 0.0
    %2441 = vmatpush1.msra.mxu0 0.0
    %2442 = vmatprep.subr.mxu0 0.0
    %2443 = vmatpush1.msra.mxu0 0.0
    %2444 = vmatprep.subr.mxu0 0.0
    %2445 = vmatpush1.msra.mxu0 0.0
    %2446 = vmatprep.subr.mxu0 0.0
    %2447 = vmatpush1.msra.mxu0 0.0
    %2448 = vmatprep.subr.mxu0 0.0
    %2449 = vmatpush1.msra.mxu0 0.0
    %2450 = vmatprep.mubr.f32.mxu0 0.0
    %2451 = vmatmul.mubr.f32.gmra.mrb[0].mxu0 %v2374
    %v2452 = vpop.f32.mrb[0].mxu0
    %v2453 = vadd.f32 0.0, %v2452
    %v2454 = vpop.f32.mrb[0].mxu0
    %v2455 = vadd.f32 0.0, %v2454
    %2456 = vmatprep.mubr.f32.mxu0 0.0
    %2457 = vmatmul.mubr.f32.gmra.mrb[0].mxu0 %v2376
    %v2458 = vpop.f32.mrb[0].mxu0
    %v2459 = vadd.f32 0.0, %v2458
    %v2460 = vpop.f32.mrb[0].mxu0
    %v2461 = vadd.f32 0.0, %v2460
    %2462 = vmatprep.mubr.f32.mxu0 0.0
    %2463 = vmatmul.mubr.f32.gmra.mrb[0].mxu0 %v2378
    %v2464 = vpop.f32.mrb[0].mxu0
    %v2465 = vadd.f32 0.0, %v2464
    %v2466 = vpop.f32.mrb[0].mxu0
    %v2467 = vadd.f32 0.0, %v2466
    %2468 = vdwg.mxu0
    %v2469 = vadd.f32 %v2343, %v2453
    %v2470 = vadd.f32 %v2345, %v2455
    %v2471 = vadd.f32 %v2349, %v2459
    %v2472 = vadd.f32 %v2351, %v2461
    %v2473 = vadd.f32 %v2355, %v2465
    %v2474 = vadd.f32 %v2357, %v2467
    %v2475 = vld [vmem:[%s433] sm:$0xff]
    %v2476 = vld [vmem:[%s433 + $0x8] sm:$0xff]
    %v2477 = vld [vmem:[%s433 + $0x10] sm:$0xff]
    %v2478 = vld [vmem:[%s433 + $0x18] sm:$0xff]
    %v2479 = vld [vmem:[%s433 + $0x20] sm:$0xff]
    %v2480 = vld [vmem:[%s433 + $0x28] sm:$0xff]
    %v2481 = vld [vmem:[%s433 + $0x30] sm:$0xf]
    %v2482 = vld [vmem:[%s433 + $0x38] sm:$0xf]
    %v2483 = vrot.slane %v2138, 3
    %v2484 = vrot.slane %v2139, 3
    %v2485 = vsel %vm442, %v2483, %v2484
    %v2486 = vrot.slane %v2140, 3
    %v2487 = vsel %vm442, %v2484, %v2486
    %v2488 = vrot.slane %v2141, 3
    %v2489 = vsel %vm442, %v2486, %v2488
    %v2490 = vsel %vm123, %v2485, 0
    %v2492 = vsel %vm123, %v2487, 0
    %v2494 = vsel %vm123, %v2489, 0
    %v2497 = vsel %vm130, %v2481, 0
    %v2500 = vsel %vm130, %v2482, 0
    %2502 = vmatprep.subr.mxu0 %v2476
    %2503 = vmatpush1.msra.mxu0 %v2475
    %2504 = vmatprep.subr.mxu0 %v2478
    %2505 = vmatpush1.msra.mxu0 %v2477
    %2506 = vmatprep.subr.mxu0 %v2480
    %2507 = vmatpush1.msra.mxu0 %v2479
    %2508 = vmatprep.subr.mxu0 %v2500
    %2509 = vmatpush1.msra.mxu0 %v2497
    %2510 = vmatprep.subr.mxu0 0.0
    %2511 = vmatpush1.msra.mxu0 0.0
    %2512 = vmatprep.subr.mxu0 0.0
    %2513 = vmatpush1.msra.mxu0 0.0
    %2514 = vmatprep.subr.mxu0 0.0
    %2515 = vmatpush1.msra.mxu0 0.0
    %2516 = vmatprep.subr.mxu0 0.0
    %2517 = vmatpush1.msra.mxu0 0.0
    %2518 = vmatprep.subr.mxu0 0.0
    %2519 = vmatpush1.msra.mxu0 0.0
    %2520 = vmatprep.subr.mxu0 0.0
    %2521 = vmatpush1.msra.mxu0 0.0
    %2522 = vmatprep.subr.mxu0 0.0
    %2523 = vmatpush1.msra.mxu0 0.0
    %2524 = vmatprep.subr.mxu0 0.0
    %2525 = vmatpush1.msra.mxu0 0.0
    %2526 = vmatprep.subr.mxu0 0.0
    %2527 = vmatpush1.msra.mxu0 0.0
    %2528 = vmatprep.subr.mxu0 0.0
    %2529 = vmatpush1.msra.mxu0 0.0
    %2530 = vmatprep.subr.mxu0 0.0
    %2531 = vmatpush1.msra.mxu0 0.0
    %2532 = vmatprep.subr.mxu0 0.0
    %2533 = vmatpush1.msra.mxu0 0.0
    %2534 = vmatprep.subr.mxu0 0.0
    %2535 = vmatpush1.msra.mxu0 0.0
    %2536 = vmatprep.subr.mxu0 0.0
    %2537 = vmatpush1.msra.mxu0 0.0
    %2538 = vmatprep.subr.mxu0 0.0
    %2539 = vmatpush1.msra.mxu0 0.0
    %2540 = vmatprep.subr.mxu0 0.0
    %2541 = vmatpush1.msra.mxu0 0.0
    %2542 = vmatprep.subr.mxu0 0.0
    %2543 = vmatpush1.msra.mxu0 0.0
    %2544 = vmatprep.subr.mxu0 0.0
    %2545 = vmatpush1.msra.mxu0 0.0
    %2546 = vmatprep.subr.mxu0 0.0
    %2547 = vmatpush1.msra.mxu0 0.0
    %2548 = vmatprep.subr.mxu0 0.0
    %2549 = vmatpush1.msra.mxu0 0.0
    %2550 = vmatprep.subr.mxu0 0.0
    %2551 = vmatpush1.msra.mxu0 0.0
    %2552 = vmatprep.subr.mxu0 0.0
    %2553 = vmatpush1.msra.mxu0 0.0
    %2554 = vmatprep.subr.mxu0 0.0
    %2555 = vmatpush1.msra.mxu0 0.0
    %2556 = vmatprep.subr.mxu0 0.0
    %2557 = vmatpush1.msra.mxu0 0.0
    %2558 = vmatprep.subr.mxu0 0.0
    %2559 = vmatpush1.msra.mxu0 0.0
    %2560 = vmatprep.subr.mxu0 0.0
    %2561 = vmatpush1.msra.mxu0 0.0
    %2562 = vmatprep.subr.mxu0 0.0
    %2563 = vmatpush1.msra.mxu0 0.0
    %2564 = vmatprep.subr.mxu0 0.0
    %2565 = vmatpush1.msra.mxu0 0.0
    %2566 = vmatprep.mubr.f32.mxu0 0.0
    %2567 = vmatmul.mubr.f32.gmra.mrb[0].mxu0 %v2490
    %v2568 = vpop.f32.mrb[0].mxu0
    %v2569 = vadd.f32 0.0, %v2568
    %v2570 = vpop.f32.mrb[0].mxu0
    %v2571 = vadd.f32 0.0, %v2570
    %2572 = vmatprep.mubr.f32.mxu0 0.0
    %2573 = vmatmul.mubr.f32.gmra.mrb[0].mxu0 %v2492
    %v2574 = vpop.f32.mrb[0].mxu0
    %v2575 = vadd.f32 0.0, %v2574
    %v2576 = vpop.f32.mrb[0].mxu0
    %v2577 = vadd.f32 0.0, %v2576
    %2578 = vmatprep.mubr.f32.mxu0 0.0
    %2579 = vmatmul.mubr.f32.gmra.mrb[0].mxu0 %v2494
    %v2580 = vpop.f32.mrb[0].mxu0
    %v2581 = vadd.f32 0.0, %v2580
    %v2582 = vpop.f32.mrb[0].mxu0
    %v2583 = vadd.f32 0.0, %v2582
    %2584 = vdwg.mxu0
    %v2585 = vadd.f32 %v2469, %v2569
    %v2586 = vadd.f32 %v2470, %v2571
    %v2587 = vadd.f32 %v2471, %v2575
    %v2588 = vadd.f32 %v2472, %v2577
    %v2589 = vadd.f32 %v2473, %v2581
    %v2590 = vadd.f32 %v2474, %v2583
    %v2591 = vld [vmem:[%s551] sm:$0xff]
    %v2592 = vld [vmem:[%s551 + $0x8] sm:$0xff]
    %v2593 = vld [vmem:[%s551 + $0x10] sm:$0xff]
    %v2594 = vld [vmem:[%s551 + $0x18] sm:$0xff]
    %v2595 = vld [vmem:[%s551 + $0x20] sm:$0xff]
    %v2596 = vld [vmem:[%s551 + $0x28] sm:$0xff]
    %v2597 = vld [vmem:[%s551 + $0x30] sm:$0xf]
    %v2598 = vld [vmem:[%s551 + $0x38] sm:$0xf]
    %v2599 = vrot.slane %v2138, 4
    %v2600 = vrot.slane %v2139, 4
    %v2601 = vsel %vm130, %v2599, %v2600
    %v2602 = vrot.slane %v2140, 4
    %v2603 = vsel %vm130, %v2600, %v2602
    %v2604 = vrot.slane %v2141, 4
    %v2605 = vsel %vm130, %v2602, %v2604
    %v2606 = vsel %vm123, %v2601, 0
    %v2608 = vsel %vm123, %v2603, 0
    %v2610 = vsel %vm123, %v2605, 0
    %v2613 = vsel %vm130, %v2597, 0
    %v2616 = vsel %vm130, %v2598, 0
    %2618 = vmatprep.subr.mxu0 %v2592
    %2619 = vmatpush1.msra.mxu0 %v2591
    %2620 = vmatprep.subr.mxu0 %v2594
    %2621 = vmatpush1.msra.mxu0 %v2593
    %2622 = vmatprep.subr.mxu0 %v2596
    %2623 = vmatpush1.msra.mxu0 %v2595
    %2624 = vmatprep.subr.mxu0 %v2616
    %2625 = vmatpush1.msra.mxu0 %v2613
    %2626 = vmatprep.subr.mxu0 0.0
    %2627 = vmatpush1.msra.mxu0 0.0
    %2628 = vmatprep.subr.mxu0 0.0
    %2629 = vmatpush1.msra.mxu0 0.0
    %2630 = vmatprep.subr.mxu0 0.0
    %2631 = vmatpush1.msra.mxu0 0.0
    %2632 = vmatprep.subr.mxu0 0.0
    %2633 = vmatpush1.msra.mxu0 0.0
    %2634 = vmatprep.subr.mxu0 0.0
    %2635 = vmatpush1.msra.mxu0 0.0
    %2636 = vmatprep.subr.mxu0 0.0
    %2637 = vmatpush1.msra.mxu0 0.0
    %2638 = vmatprep.subr.mxu0 0.0
    %2639 = vmatpush1.msra.mxu0 0.0
    %2640 = vmatprep.subr.mxu0 0.0
    %2641 = vmatpush1.msra.mxu0 0.0
    %2642 = vmatprep.subr.mxu0 0.0
    %2643 = vmatpush1.msra.mxu0 0.0
    %2644 = vmatprep.subr.mxu0 0.0
    %2645 = vmatpush1.msra.mxu0 0.0
    %2646 = vmatprep.subr.mxu0 0.0
    %2647 = vmatpush1.msra.mxu0 0.0
    %2648 = vmatprep.subr.mxu0 0.0
    %2649 = vmatpush1.msra.mxu0 0.0
    %2650 = vmatprep.subr.mxu0 0.0
    %2651 = vmatpush1.msra.mxu0 0.0
    %2652 = vmatprep.subr.mxu0 0.0
    %2653 = vmatpush1.msra.mxu0 0.0
    %2654 = vmatprep.subr.mxu0 0.0
    %2655 = vmatpush1.msra.mxu0 0.0
    %2656 = vmatprep.subr.mxu0 0.0
    %2657 = vmatpush1.msra.mxu0 0.0
    %2658 = vmatprep.subr.mxu0 0.0
    %2659 = vmatpush1.msra.mxu0 0.0
    %2660 = vmatprep.subr.mxu0 0.0
    %2661 = vmatpush1.msra.mxu0 0.0
    %2662 = vmatprep.subr.mxu0 0.0
    %2663 = vmatpush1.msra.mxu0 0.0
    %2664 = vmatprep.subr.mxu0 0.0
    %2665 = vmatpush1.msra.mxu0 0.0
    %2666 = vmatprep.subr.mxu0 0.0
    %2667 = vmatpush1.msra.mxu0 0.0
    %2668 = vmatprep.subr.mxu0 0.0
    %2669 = vmatpush1.msra.mxu0 0.0
    %2670 = vmatprep.subr.mxu0 0.0
    %2671 = vmatpush1.msra.mxu0 0.0
    %2672 = vmatprep.subr.mxu0 0.0
    %2673 = vmatpush1.msra.mxu0 0.0
    %2674 = vmatprep.subr.mxu0 0.0
    %2675 = vmatpush1.msra.mxu0 0.0
    %2676 = vmatprep.subr.mxu0 0.0
    %2677 = vmatpush1.msra.mxu0 0.0
    %2678 = vmatprep.subr.mxu0 0.0
    %2679 = vmatpush1.msra.mxu0 0.0
    %2680 = vmatprep.subr.mxu0 0.0
    %2681 = vmatpush1.msra.mxu0 0.0
    %2682 = vmatprep.mubr.f32.mxu0 0.0
    %2683 = vmatmul.mubr.f32.gmra.mrb[0].mxu0 %v2606
    %v2684 = vpop.f32.mrb[0].mxu0
    %v2685 = vadd.f32 0.0, %v2684
    %v2686 = vpop.f32.mrb[0].mxu0
    %v2687 = vadd.f32 0.0, %v2686
    %2688 = vmatprep.mubr.f32.mxu0 0.0
    %2689 = vmatmul.mubr.f32.gmra.mrb[0].mxu0 %v2608
    %v2690 = vpop.f32.mrb[0].mxu0
    %v2691 = vadd.f32 0.0, %v2690
    %v2692 = vpop.f32.mrb[0].mxu0
    %v2693 = vadd.f32 0.0, %v2692
    %2694 = vmatprep.mubr.f32.mxu0 0.0
    %2695 = vmatmul.mubr.f32.gmra.mrb[0].mxu0 %v2610
    %v2696 = vpop.f32.mrb[0].mxu0
    %v2697 = vadd.f32 0.0, %v2696
    %v2698 = vpop.f32.mrb[0].mxu0
    %v2699 = vadd.f32 0.0, %v2698
    %2700 = vdwg.mxu0
    %v2701 = vadd.f32 %v2585, %v2685
    %v2702 = vadd.f32 %v2586, %v2687
    %v2703 = vadd.f32 %v2587, %v2691
    %v2704 = vadd.f32 %v2588, %v2693
    %v2705 = vadd.f32 %v2589, %v2697
    %v2706 = vadd.f32 %v2590, %v2699
    %v2707 = vld [vmem:[%s2] sm:$0x3]
    %v2709 = vlaneseq
    %v2710 = vshrl.u32 %v2709, 7
    %v2711 = vsub.s32 0, %v2710
    %v2712 = vrot.slane %v2707, %v2711
    %v2713 = vlaneseq
    %v2714 = vshrl.u32 %v2713, 7
    %v2715 = vsub.s32 1, %v2714
    %v2716 = vrot.slane %v2707, %v2715
    %v2719 = vadd.f32 %v2701, %v2712
    %v2720 = vadd.f32 %v2702, %v2716
    %v2721 = vadd.f32 %v2703, %v2712
    %v2722 = vadd.f32 %v2704, %v2716
    %v2723 = vadd.f32 %v2705, %v2712
    %v2724 = vadd.f32 %v2706, %v2716
    %v2725 = vmax.f32 %v2719, 0.0
    %v2726 = vmax.f32 %v2720, 0.0
    %v2727 = vmax.f32 %v2721, 0.0
    %v2728 = vmax.f32 %v2722, 0.0
    %v2729 = vmax.f32 %v2723, 0.0
    %v2730 = vmax.f32 %v2724, 0.0
    %v2731 = vld [vmem:[%s3] sm:$0xff]
    %v2732 = vld [vmem:[%s3 + $0x8] sm:$0xf]
    %v2734 = vsel %vm694, %v2731, 0
    %v2737 = vsel %vm694, %v2732, 0
    %2739 = vmatprep.subr.mxu0 %v2726
    %2740 = vmatpush1.msra.mxu0 %v2725
    %2741 = vmatprep.subr.mxu0 %v2728
    %2742 = vmatpush1.msra.mxu0 %v2727
    %2743 = vmatprep.subr.mxu0 %v2730
    %2744 = vmatpush1.msra.mxu0 %v2729
    %2745 = vmatprep.subr.mxu0 0.0
    %2746 = vmatpush1.msra.mxu0 0.0
    %2747 = vmatprep.subr.mxu0 0.0
    %2748 = vmatpush1.msra.mxu0 0.0
    %2749 = vmatprep.subr.mxu0 0.0
    %2750 = vmatpush1.msra.mxu0 0.0
    %2751 = vmatprep.subr.mxu0 0.0
    %2752 = vmatpush1.msra.mxu0 0.0
    %2753 = vmatprep.subr.mxu0 0.0
    %2754 = vmatpush1.msra.mxu0 0.0
    %2755 = vmatprep.subr.mxu0 0.0
    %2756 = vmatpush1.msra.mxu0 0.0
    %2757 = vmatprep.subr.mxu0 0.0
    %2758 = vmatpush1.msra.mxu0 0.0
    %2759 = vmatprep.subr.mxu0 0.0
    %2760 = vmatpush1.msra.mxu0 0.0
    %2761 = vmatprep.subr.mxu0 0.0
    %2762 = vmatpush1.msra.mxu0 0.0
    %2763 = vmatprep.subr.mxu0 0.0
    %2764 = vmatpush1.msra.mxu0 0.0
    %2765 = vmatprep.subr.mxu0 0.0
    %2766 = vmatpush1.msra.mxu0 0.0
    %2767 = vmatprep.subr.mxu0 0.0
    %2768 = vmatpush1.msra.mxu0 0.0
    %2769 = vmatprep.subr.mxu0 0.0
    %2770 = vmatpush1.msra.mxu0 0.0
    %2771 = vmatprep.subr.mxu0 0.0
    %2772 = vmatpush1.msra.mxu0 0.0
    %2773 = vmatprep.subr.mxu0 0.0
    %2774 = vmatpush1.msra.mxu0 0.0
    %2775 = vmatprep.subr.mxu0 0.0
    %2776 = vmatpush1.msra.mxu0 0.0
    %2777 = vmatprep.subr.mxu0 0.0
    %2778 = vmatpush1.msra.mxu0 0.0
    %2779 = vmatprep.subr.mxu0 0.0
    %2780 = vmatpush1.msra.mxu0 0.0
    %2781 = vmatprep.subr.mxu0 0.0
    %2782 = vmatpush1.msra.mxu0 0.0
    %2783 = vmatprep.subr.mxu0 0.0
    %2784 = vmatpush1.msra.mxu0 0.0
    %2785 = vmatprep.subr.mxu0 0.0
    %2786 = vmatpush1.msra.mxu0 0.0
    %2787 = vmatprep.subr.mxu0 0.0
    %2788 = vmatpush1.msra.mxu0 0.0
    %2789 = vmatprep.subr.mxu0 0.0
    %2790 = vmatpush1.msra.mxu0 0.0
    %2791 = vmatprep.subr.mxu0 0.0
    %2792 = vmatpush1.msra.mxu0 0.0
    %2793 = vmatprep.subr.mxu0 0.0
    %2794 = vmatpush1.msra.mxu0 0.0
    %2795 = vmatprep.subr.mxu0 0.0
    %2796 = vmatpush1.msra.mxu0 0.0
    %2797 = vmatprep.subr.mxu0 0.0
    %2798 = vmatpush1.msra.mxu0 0.0
    %2799 = vmatprep.subr.mxu0 0.0
    %2800 = vmatpush1.msra.mxu0 0.0
    %2801 = vmatprep.subr.mxu0 0.0
    %2802 = vmatpush1.msra.mxu0 0.0
    %2803 = vmatprep.mubr.f32.mxu0 0.0
    %2804 = vmatmul.mubr.f32.gmra.mrb[0].mxu0 %v2734
    %v2805 = vpop.f32.mrb[0].mxu0
    %v2806 = vadd.f32 0.0, %v2805
    %v2807 = vpop.f32.mrb[0].mxu0
    %v2808 = vadd.f32 0.0, %v2807
    %2809 = vmatprep.mubr.f32.mxu0 0.0
    %2810 = vmatmul.mubr.f32.gmra.mrb[0].mxu0 %v2737
    %v2811 = vpop.f32.mrb[0].mxu0
    %v2812 = vadd.f32 0.0, %v2811
    %v2813 = vpop.f32.mrb[0].mxu0
    %v2814 = vadd.f32 0.0, %v2813
    %2815 = vdwg.mxu0
    %v2816 = vld [vmem:[%s778] sm:$0xff]
    %v2817 = vld [vmem:[%s778 + $0x8] sm:$0xf]
    %v2819 = vsel %vm694, %v2816, 0
    %v2822 = vsel %vm694, %v2817, 0
    %2824 = vmatprep.subr.mxu0 %v2726
    %2825 = vmatpush1.msra.mxu0 %v2725
    %2826 = vmatprep.subr.mxu0 %v2728
    %2827 = vmatpush1.msra.mxu0 %v2727
    %2828 = vmatprep.subr.mxu0 %v2730
    %2829 = vmatpush1.msra.mxu0 %v2729
    %2830 = vmatprep.subr.mxu0 0.0
    %2831 = vmatpush1.msra.mxu0 0.0
    %2832 = vmatprep.subr.mxu0 0.0
    %2833 = vmatpush1.msra.mxu0 0.0
    %2834 = vmatprep.subr.mxu0 0.0
    %2835 = vmatpush1.msra.mxu0 0.0
    %2836 = vmatprep.subr.mxu0 0.0
    %2837 = vmatpush1.msra.mxu0 0.0
    %2838 = vmatprep.subr.mxu0 0.0
    %2839 = vmatpush1.msra.mxu0 0.0
    %2840 = vmatprep.subr.mxu0 0.0
    %2841 = vmatpush1.msra.mxu0 0.0
    %2842 = vmatprep.subr.mxu0 0.0
    %2843 = vmatpush1.msra.mxu0 0.0
    %2844 = vmatprep.subr.mxu0 0.0
    %2845 = vmatpush1.msra.mxu0 0.0
    %2846 = vmatprep.subr.mxu0 0.0
    %2847 = vmatpush1.msra.mxu0 0.0
    %2848 = vmatprep.subr.mxu0 0.0
    %2849 = vmatpush1.msra.mxu0 0.0
    %2850 = vmatprep.subr.mxu0 0.0
    %2851 = vmatpush1.msra.mxu0 0.0
    %2852 = vmatprep.subr.mxu0 0.0
    %2853 = vmatpush1.msra.mxu0 0.0
    %2854 = vmatprep.subr.mxu0 0.0
    %2855 = vmatpush1.msra.mxu0 0.0
    %2856 = vmatprep.subr.mxu0 0.0
    %2857 = vmatpush1.msra.mxu0 0.0
    %2858 = vmatprep.subr.mxu0 0.0
    %2859 = vmatpush1.msra.mxu0 0.0
    %2860 = vmatprep.subr.mxu0 0.0
    %2861 = vmatpush1.msra.mxu0 0.0
    %2862 = vmatprep.subr.mxu0 0.0
    %2863 = vmatpush1.msra.mxu0 0.0
    %2864 = vmatprep.subr.mxu0 0.0
    %2865 = vmatpush1.msra.mxu0 0.0
    %2866 = vmatprep.subr.mxu0 0.0
    %2867 = vmatpush1.msra.mxu0 0.0
    %2868 = vmatprep.subr.mxu0 0.0
    %2869 = vmatpush1.msra.mxu0 0.0
    %2870 = vmatprep.subr.mxu0 0.0
    %2871 = vmatpush1.msra.mxu0 0.0
    %2872 = vmatprep.subr.mxu0 0.0
    %2873 = vmatpush1.msra.mxu0 0.0
    %2874 = vmatprep.subr.mxu0 0.0
    %2875 = vmatpush1.msra.mxu0 0.0
    %2876 = vmatprep.subr.mxu0 0.0
    %2877 = vmatpush1.msra.mxu0 0.0
    %2878 = vmatprep.subr.mxu0 0.0
    %2879 = vmatpush1.msra.mxu0 0.0
    %2880 = vmatprep.subr.mxu0 0.0
    %2881 = vmatpush1.msra.mxu0 0.0
    %2882 = vmatprep.subr.mxu0 0.0
    %2883 = vmatpush1.msra.mxu0 0.0
    %2884 = vmatprep.subr.mxu0 0.0
    %2885 = vmatpush1.msra.mxu0 0.0
    %2886 = vmatprep.subr.mxu0 0.0
    %2887 = vmatpush1.msra.mxu0 0.0
    %2888 = vmatprep.mubr.f32.mxu0 0.0
    %2889 = vmatmul.mubr.f32.gmra.mrb[0].mxu0 %v2819
    %v2890 = vpop.f32.mrb[0].mxu0
    %v2891 = vadd.f32 0.0, %v2890
    %v2892 = vpop.f32.mrb[0].mxu0
    %v2893 = vadd.f32 0.0, %v2892
    %2894 = vmatprep.mubr.f32.mxu0 0.0
    %2895 = vmatmul.mubr.f32.gmra.mrb[0].mxu0 %v2822
    %v2896 = vpop.f32.mrb[0].mxu0
    %v2897 = vadd.f32 0.0, %v2896
    %v2898 = vpop.f32.mrb[0].mxu0
    %v2899 = vadd.f32 0.0, %v2898
    %2900 = vdwg.mxu0
    %v2901 = vmax.f32 %v2806, %v2891
    %v2902 = vmax.f32 %v2808, %v2893
    %v2903 = vmax.f32 %v2812, %v2897
    %v2904 = vmax.f32 %v2814, %v2899
    %v2905 = vld [vmem:[%s4] sm:$0xff]
    %v2906 = vld [vmem:[%s4 + $0x8] sm:$0xff]
    %v2907 = vld [vmem:[%s4 + $0x10] sm:$0xff]
    %v2908 = vld [vmem:[%s4 + $0x18] sm:$0xff]
    %v2909 = vld [vmem:[%s4 + $0x20] sm:$0xff]
    %v2910 = vld [vmem:[%s4 + $0x28] sm:$0xff]
    %v2911 = vld [vmem:[%s4 + $0x30] sm:$0xff]
    %v2912 = vld [vmem:[%s4 + $0x38] sm:$0xff]
    %v2913 = vld [vmem:[%s4 + $0x40] sm:$0xff]
    %v2914 = vld [vmem:[%s4 + $0x48] sm:$0xff]
    %v2915 = vld [vmem:[%s4 + $0x50] sm:$0xff]
    %v2916 = vld [vmem:[%s4 + $0x58] sm:$0xff]
    %v2917 = vld [vmem:[%s4 + $0x60] sm:$0xff]
    %v2918 = vld [vmem:[%s4 + $0x68] sm:$0xff]
    %v2919 = vld [vmem:[%s4 + $0x70] sm:$0xff]
    %v2920 = vld [vmem:[%s4 + $0x78] sm:$0xff]
    %v2921 = vld [vmem:[%s4 + $0x80] sm:$0xff]
    %v2922 = vld [vmem:[%s4 + $0x88] sm:$0xff]
    %v2924 = vsel %vm886, %v2902, 0
    %v2927 = vsel %vm886, %v2904, 0
    %2929 = vmatprep.subr.mxu0 0.0
    %2930 = vmatpush1.msra.mxu0 %v2905
    %2931 = vmatprep.subr.mxu0 0.0
    %2932 = vmatpush1.msra.mxu0 %v2906
    %2933 = vmatprep.subr.mxu0 0.0
    %2934 = vmatpush1.msra.mxu0 %v2907
    %2935 = vmatprep.subr.mxu0 0.0
    %2936 = vmatpush1.msra.mxu0 %v2908
    %2937 = vmatprep.subr.mxu0 0.0
    %2938 = vmatpush1.msra.mxu0 %v2909
    %2939 = vmatprep.subr.mxu0 0.0
    %2940 = vmatpush1.msra.mxu0 %v2910
    %2941 = vmatprep.subr.mxu0 0.0
    %2942 = vmatpush1.msra.mxu0 %v2911
    %2943 = vmatprep.subr.mxu0 0.0
    %2944 = vmatpush1.msra.mxu0 %v2912
    %2945 = vmatprep.subr.mxu0 0.0
    %2946 = vmatpush1.msra.mxu0 %v2913
    %2947 = vmatprep.subr.mxu0 0.0
    %2948 = vmatpush1.msra.mxu0 %v2914
    %2949 = vmatprep.subr.mxu0 0.0
    %2950 = vmatpush1.msra.mxu0 %v2915
    %2951 = vmatprep.subr.mxu0 0.0
    %2952 = vmatpush1.msra.mxu0 %v2916
    %2953 = vmatprep.subr.mxu0 0.0
    %2954 = vmatpush1.msra.mxu0 %v2917
    %2955 = vmatprep.subr.mxu0 0.0
    %2956 = vmatpush1.msra.mxu0 %v2918
    %2957 = vmatprep.subr.mxu0 0.0
    %2958 = vmatpush1.msra.mxu0 %v2919
    %2959 = vmatprep.subr.mxu0 0.0
    %2960 = vmatpush1.msra.mxu0 %v2920
    %2961 = vmatprep.subr.mxu0 0.0
    %2962 = vmatpush1.msra.mxu0 %v2921
    %2963 = vmatprep.subr.mxu0 0.0
    %2964 = vmatpush1.msra.mxu0 %v2922
    %2965 = vmatprep.subr.mxu0 0.0
    %2966 = vmatpush1.msra.mxu0 0.0
    %2967 = vmatprep.subr.mxu0 0.0
    %2968 = vmatpush1.msra.mxu0 0.0
    %2969 = vmatprep.subr.mxu0 0.0
    %2970 = vmatpush1.msra.mxu0 0.0
    %2971 = vmatprep.subr.mxu0 0.0
    %2972 = vmatpush1.msra.mxu0 0.0
    %2973 = vmatprep.subr.mxu0 0.0
    %2974 = vmatpush1.msra.mxu0 0.0
    %2975 = vmatprep.subr.mxu0 0.0
    %2976 = vmatpush1.msra.mxu0 0.0
    %2977 = vmatprep.subr.mxu0 0.0
    %2978 = vmatpush1.msra.mxu0 0.0
    %2979 = vmatprep.subr.mxu0 0.0
    %2980 = vmatpush1.msra.mxu0 0.0
    %2981 = vmatprep.subr.mxu0 0.0
    %2982 = vmatpush1.msra.mxu0 0.0
    %2983 = vmatprep.subr.mxu0 0.0
    %2984 = vmatpush1.msra.mxu0 0.0
    %2985 = vmatprep.subr.mxu0 0.0
    %2986 = vmatpush1.msra.mxu0 0.0
    %2987 = vmatprep.subr.mxu0 0.0
    %2988 = vmatpush1.msra.mxu0 0.0
    %2989 = vmatprep.subr.mxu0 0.0
    %2990 = vmatpush1.msra.mxu0 0.0
    %2991 = vmatprep.subr.mxu0 0.0
    %2992 = vmatpush1.msra.mxu0 0.0
    %2993 = vmatprep.mubr.f32.mxu0 %v2924
    %2994 = vmatmul.mubr.f32.gmra.mrb[0].mxu0 %v2901
    %v2995 = vpop.f32.mrb[0].mxu0
    %v2996 = vadd.f32 0.0, %v2995
    %v2997 = vpop.f32.mrb[0].mxu0
    %2998 = vmatprep.mubr.f32.mxu0 %v2927
    %2999 = vmatmul.mubr.f32.gmra.mrb[0].mxu0 %v2903
    %v3000 = vpop.f32.mrb[0].mxu0
    %v3001 = vadd.f32 0.0, %v3000
    %v3002 = vpop.f32.mrb[0].mxu0
    %3003 = vdwg.mxu0
    %v3004 = vld [vmem:[%s968] sm:$0xff]
    %v3005 = vld [vmem:[%s968 + $0x8] sm:$0xff]
    %v3006 = vld [vmem:[%s968 + $0x10] sm:$0xff]
    %v3007 = vld [vmem:[%s968 + $0x18] sm:$0xff]
    %v3008 = vld [vmem:[%s968 + $0x20] sm:$0xff]
    %v3009 = vld [vmem:[%s968 + $0x28] sm:$0xff]
    %v3010 = vld [vmem:[%s968 + $0x30] sm:$0xff]
    %v3011 = vld [vmem:[%s968 + $0x38] sm:$0xff]
    %v3012 = vld [vmem:[%s968 + $0x40] sm:$0xff]
    %v3013 = vld [vmem:[%s968 + $0x48] sm:$0xff]
    %v3014 = vld [vmem:[%s968 + $0x50] sm:$0xff]
    %v3015 = vld [vmem:[%s968 + $0x58] sm:$0xff]
    %v3016 = vld [vmem:[%s968 + $0x60] sm:$0xff]
    %v3017 = vld [vmem:[%s968 + $0x68] sm:$0xff]
    %v3018 = vld [vmem:[%s968 + $0x70] sm:$0xff]
    %v3019 = vld [vmem:[%s968 + $0x78] sm:$0xff]
    %v3020 = vld [vmem:[%s968 + $0x80] sm:$0xff]
    %v3021 = vld [vmem:[%s968 + $0x88] sm:$0xff]
    %3022 = vmatprep.subr.mxu0 0.0
    %3023 = vmatpush1.msra.mxu0 %v3004
    %3024 = vmatprep.subr.mxu0 0.0
    %3025 = vmatpush1.msra.mxu0 %v3005
    %3026 = vmatprep.subr.mxu0 0.0
    %3027 = vmatpush1.msra.mxu0 %v3006
    %3028 = vmatprep.subr.mxu0 0.0
    %3029 = vmatpush1.msra.mxu0 %v3007
    %3030 = vmatprep.subr.mxu0 0.0
    %3031 = vmatpush1.msra.mxu0 %v3008
    %3032 = vmatprep.subr.mxu0 0.0
    %3033 = vmatpush1.msra.mxu0 %v3009
    %3034 = vmatprep.subr.mxu0 0.0
    %3035 = vmatpush1.msra.mxu0 %v3010
    %3036 = vmatprep.subr.mxu0 0.0
    %3037 = vmatpush1.msra.mxu0 %v3011
    %3038 = vmatprep.subr.mxu0 0.0
    %3039 = vmatpush1.msra.mxu0 %v3012
    %3040 = vmatprep.subr.mxu0 0.0
    %3041 = vmatpush1.msra.mxu0 %v3013
    %3042 = vmatprep.subr.mxu0 0.0
    %3043 = vmatpush1.msra.mxu0 %v3014
    %3044 = vmatprep.subr.mxu0 0.0
    %3045 = vmatpush1.msra.mxu0 %v3015
    %3046 = vmatprep.subr.mxu0 0.0
    %3047 = vmatpush1.msra.mxu0 %v3016
    %3048 = vmatprep.subr.mxu0 0.0
    %3049 = vmatpush1.msra.mxu0 %v3017
    %3050 = vmatprep.subr.mxu0 0.0
    %3051 = vmatpush1.msra.mxu0 %v3018
    %3052 = vmatprep.subr.mxu0 0.0
    %3053 = vmatpush1.msra.mxu0 %v3019
    %3054 = vmatprep.subr.mxu0 0.0
    %3055 = vmatpush1.msra.mxu0 %v3020
    %3056 = vmatprep.subr.mxu0 0.0
    %3057 = vmatpush1.msra.mxu0 %v3021
    %3058 = vmatprep.subr.mxu0 0.0
    %3059 = vmatpush1.msra.mxu0 0.0
    %3060 = vmatprep.subr.mxu0 0.0
    %3061 = vmatpush1.msra.mxu0 0.0
    %3062 = vmatprep.subr.mxu0 0.0
    %3063 = vmatpush1.msra.mxu0 0.0
    %3064 = vmatprep.subr.mxu0 0.0
    %3065 = vmatpush1.msra.mxu0 0.0
    %3066 = vmatprep.subr.mxu0 0.0
    %3067 = vmatpush1.msra.mxu0 0.0
    %3068 = vmatprep.subr.mxu0 0.0
    %3069 = vmatpush1.msra.mxu0 0.0
    %3070 = vmatprep.subr.mxu0 0.0
    %3071 = vmatpush1.msra.mxu0 0.0
    %3072 = vmatprep.subr.mxu0 0.0
    %3073 = vmatpush1.msra.mxu0 0.0
    %3074 = vmatprep.subr.mxu0 0.0
    %3075 = vmatpush1.msra.mxu0 0.0
    %3076 = vmatprep.subr.mxu0 0.0
    %3077 = vmatpush1.msra.mxu0 0.0
    %3078 = vmatprep.subr.mxu0 0.0
    %3079 = vmatpush1.msra.mxu0 0.0
    %3080 = vmatprep.subr.mxu0 0.0
    %3081 = vmatpush1.msra.mxu0 0.0
    %3082 = vmatprep.subr.mxu0 0.0
    %3083 = vmatpush1.msra.mxu0 0.0
    %3084 = vmatprep.subr.mxu0 0.0
    %3085 = vmatpush1.msra.mxu0 0.0
    %3086 = vmatprep.mubr.f32.mxu0 %v2924
    %3087 = vmatmul.mubr.f32.gmra.mrb[0].mxu0 %v2901
    %v3088 = vpop.f32.mrb[0].mxu0
    %v3089 = vadd.f32 0.0, %v3088
    %v3090 = vpop.f32.mrb[0].mxu0
    %3091 = vmatprep.mubr.f32.mxu0 %v2927
    %3092 = vmatmul.mubr.f32.gmra.mrb[0].mxu0 %v2903
    %v3093 = vpop.f32.mrb[0].mxu0
    %v3094 = vadd.f32 0.0, %v3093
    %v3095 = vpop.f32.mrb[0].mxu0
    %3096 = vdwg.mxu0
    %v3097 = vmax.f32 %v2996, %v3089
    %v3098 = vmax.f32 %v3001, %v3094
    %v3099 = vld [vmem:[%s5] sm:$0xff]
    %v3100 = vld [vmem:[%s5 + $0x8] sm:$0xff]
    %v3101 = vld [vmem:[%s5 + $0x10] sm:$0xff]
    %v3102 = vld [vmem:[%s5 + $0x18] sm:$0xff]
    %v3103 = vld [vmem:[%s5 + $0x20] sm:$0xff]
    %v3104 = vld [vmem:[%s5 + $0x28] sm:$0xff]
    %v3105 = vld [vmem:[%s5 + $0x30] sm:$0xff]
    %v3106 = vld [vmem:[%s5 + $0x38] sm:$0xff]
    %v3107 = vld [vmem:[%s5 + $0x40] sm:$0xff]
    %v3108 = vld [vmem:[%s1073] sm:$0xff]
    %v3109 = vld [vmem:[%s1073 + $0x8] sm:$0xff]
    %v3110 = vld [vmem:[%s1073 + $0x10] sm:$0xff]
    %v3111 = vld [vmem:[%s1073 + $0x18] sm:$0xff]
    %v3112 = vld [vmem:[%s1073 + $0x20] sm:$0xff]
    %v3113 = vld [vmem:[%s1073 + $0x28] sm:$0xff]
    %v3114 = vld [vmem:[%s1073 + $0x30] sm:$0xff]
    %v3115 = vld [vmem:[%s1073 + $0x38] sm:$0xff]
    %v3116 = vld [vmem:[%s1073 + $0x40] sm:$0xff]
    %v3119 = vrot.slane %v3097, 1
    %v3120 = vrot.slane %v3098, 1
    %v3121 = vsel %vm115, %v3119, %v3120
    %v3122 = vsel %vm1088, %v3121, 0
    %3124 = vmatprep.subr.mxu0 0.0
    %3125 = vmatpush1.msra.mxu0 %v3108
    %3126 = vmatprep.subr.mxu0 0.0
    %3127 = vmatpush1.msra.mxu0 %v3109
    %3128 = vmatprep.subr.mxu0 0.0
    %3129 = vmatpush1.msra.mxu0 %v3110
    %3130 = vmatprep.subr.mxu0 0.0
    %3131 = vmatpush1.msra.mxu0 %v3111
    %3132 = vmatprep.subr.mxu0 0.0
    %3133 = vmatpush1.msra.mxu0 %v3112
    %3134 = vmatprep.subr.mxu0 0.0
    %3135 = vmatpush1.msra.mxu0 %v3113
    %3136 = vmatprep.subr.mxu0 0.0
    %3137 = vmatpush1.msra.mxu0 %v3114
    %3138 = vmatprep.subr.mxu0 0.0
    %3139 = vmatpush1.msra.mxu0 %v3115
    %3140 = vmatprep.subr.mxu0 0.0
    %3141 = vmatpush1.msra.mxu0 %v3116
    %3142 = vmatprep.subr.mxu0 0.0
    %3143 = vmatpush1.msra.mxu0 0.0
    %3144 = vmatprep.subr.mxu0 0.0
    %3145 = vmatpush1.msra.mxu0 0.0
    %3146 = vmatprep.subr.mxu0 0.0
    %3147 = vmatpush1.msra.mxu0 0.0
    %3148 = vmatprep.subr.mxu0 0.0
    %3149 = vmatpush1.msra.mxu0 0.0
    %3150 = vmatprep.subr.mxu0 0.0
    %3151 = vmatpush1.msra.mxu0 0.0
    %3152 = vmatprep.subr.mxu0 0.0
    %3153 = vmatpush1.msra.mxu0 0.0
    %3154 = vmatprep.subr.mxu0 0.0
    %3155 = vmatpush1.msra.mxu0 0.0
    %3156 = vmatprep.subr.mxu0 0.0
    %3157 = vmatpush1.msra.mxu0 0.0
    %3158 = vmatprep.subr.mxu0 0.0
    %3159 = vmatpush1.msra.mxu0 0.0
    %3160 = vmatprep.subr.mxu0 0.0
    %3161 = vmatpush1.msra.mxu0 0.0
    %3162 = vmatprep.subr.mxu0 0.0
    %3163 = vmatpush1.msra.mxu0 0.0
    %3164 = vmatprep.subr.mxu0 0.0
    %3165 = vmatpush1.msra.mxu0 0.0
    %3166 = vmatprep.subr.mxu0 0.0
    %3167 = vmatpush1.msra.mxu0 0.0
    %3168 = vmatprep.subr.mxu0 0.0
    %3169 = vmatpush1.msra.mxu0 0.0
    %3170 = vmatprep.subr.mxu0 0.0
    %3171 = vmatpush1.msra.mxu0 0.0
    %3172 = vmatprep.subr.mxu0 0.0
    %3173 = vmatpush1.msra.mxu0 0.0
    %3174 = vmatprep.subr.mxu0 0.0
    %3175 = vmatpush1.msra.mxu0 0.0
    %3176 = vmatprep.subr.mxu0 0.0
    %3177 = vmatpush1.msra.mxu0 0.0
    %3178 = vmatprep.subr.mxu0 0.0
    %3179 = vmatpush1.msra.mxu0 0.0
    %3180 = vmatprep.subr.mxu0 0.0
    %3181 = vmatpush1.msra.mxu0 0.0
    %3182 = vmatprep.subr.mxu0 0.0
    %3183 = vmatpush1.msra.mxu0 0.0
    %3184 = vmatprep.subr.mxu0 0.0
    %3185 = vmatpush1.msra.mxu0 0.0
    %3186 = vmatprep.subr.mxu0 0.0
    %3187 = vmatpush1.msra.mxu0 0.0
    %3188 = vmatprep.mubr.f32.mxu0 0.0
    %3189 = vmatmul.mubr.f32.gmra.mrb[0].mxu0 %v3122
    %v3190 = vpop.f32.mrb[0].mxu0
    %v3191 = vadd.f32 0.0, %v3190
    %v3192 = vpop.f32.mrb[0].mxu0
    %3193 = vdwg.mxu0
    %v3194 = vsel %vm1088, %v3097, 0
    %3196 = vmatprep.subr.mxu0 0.0
    %3197 = vmatpush1.msra.mxu0 %v3099
    %3198 = vmatprep.subr.mxu0 0.0
    %3199 = vmatpush1.msra.mxu0 %v3100
    %3200 = vmatprep.subr.mxu0 0.0
    %3201 = vmatpush1.msra.mxu0 %v3101
    %3202 = vmatprep.subr.mxu0 0.0
    %3203 = vmatpush1.msra.mxu0 %v3102
    %3204 = vmatprep.subr.mxu0 0.0
    %3205 = vmatpush1.msra.mxu0 %v3103
    %3206 = vmatprep.subr.mxu0 0.0
    %3207 = vmatpush1.msra.mxu0 %v3104
    %3208 = vmatprep.subr.mxu0 0.0
    %3209 = vmatpush1.msra.mxu0 %v3105
    %3210 = vmatprep.subr.mxu0 0.0
    %3211 = vmatpush1.msra.mxu0 %v3106
    %3212 = vmatprep.subr.mxu0 0.0
    %3213 = vmatpush1.msra.mxu0 %v3107
    %3214 = vmatprep.subr.mxu0 0.0
    %3215 = vmatpush1.msra.mxu0 0.0
    %3216 = vmatprep.subr.mxu0 0.0
    %3217 = vmatpush1.msra.mxu0 0.0
    %3218 = vmatprep.subr.mxu0 0.0
    %3219 = vmatpush1.msra.mxu0 0.0
    %3220 = vmatprep.subr.mxu0 0.0
    %3221 = vmatpush1.msra.mxu0 0.0
    %3222 = vmatprep.subr.mxu0 0.0
    %3223 = vmatpush1.msra.mxu0 0.0
    %3224 = vmatprep.subr.mxu0 0.0
    %3225 = vmatpush1.msra.mxu0 0.0
    %3226 = vmatprep.subr.mxu0 0.0
    %3227 = vmatpush1.msra.mxu0 0.0
    %3228 = vmatprep.subr.mxu0 0.0
    %3229 = vmatpush1.msra.mxu0 0.0
    %3230 = vmatprep.subr.mxu0 0.0
    %3231 = vmatpush1.msra.mxu0 0.0
    %3232 = vmatprep.subr.mxu0 0.0
    %3233 = vmatpush1.msra.mxu0 0.0
    %3234 = vmatprep.subr.mxu0 0.0
    %3235 = vmatpush1.msra.mxu0 0.0
    %3236 = vmatprep.subr.mxu0 0.0
    %3237 = vmatpush1.msra.mxu0 0.0
    %3238 = vmatprep.subr.mxu0 0.0
    %3239 = vmatpush1.msra.mxu0 0.0
    %3240 = vmatprep.subr.mxu0 0.0
    %3241 = vmatpush1.msra.mxu0 0.0
    %3242 = vmatprep.subr.mxu0 0.0
    %3243 = vmatpush1.msra.mxu0 0.0
    %3244 = vmatprep.subr.mxu0 0.0
    %3245 = vmatpush1.msra.mxu0 0.0
    %3246 = vmatprep.subr.mxu0 0.0
    %3247 = vmatpush1.msra.mxu0 0.0
    %3248 = vmatprep.subr.mxu0 0.0
    %3249 = vmatpush1.msra.mxu0 0.0
    %3250 = vmatprep.subr.mxu0 0.0
    %3251 = vmatpush1.msra.mxu0 0.0
    %3252 = vmatprep.subr.mxu0 0.0
    %3253 = vmatpush1.msra.mxu0 0.0
    %3254 = vmatprep.subr.mxu0 0.0
    %3255 = vmatpush1.msra.mxu0 0.0
    %3256 = vmatprep.subr.mxu0 0.0
    %3257 = vmatpush1.msra.mxu0 0.0
    %3258 = vmatprep.subr.mxu0 0.0
    %3259 = vmatpush1.msra.mxu0 0.0
    %3260 = vmatprep.mubr.f32.mxu0 0.0
    %3261 = vmatmul.mubr.f32.gmra.mrb[0].mxu0 %v3194
    %v3262 = vpop.f32.mrb[0].mxu0
    %v3263 = vadd.f32 %v3191, %v3262
    %v3264 = vpop.f32.mrb[0].mxu0
    %3265 = vdwg.mxu0
    %v3266 = vld [vmem:[%s1233] sm:$0xff]
    %v3267 = vld [vmem:[%s1233 + $0x8] sm:$0xff]
    %v3268 = vld [vmem:[%s1233 + $0x10] sm:$0xff]
    %v3269 = vld [vmem:[%s1233 + $0x18] sm:$0xff]
    %v3270 = vld [vmem:[%s1233 + $0x20] sm:$0xff]
    %v3271 = vld [vmem:[%s1233 + $0x28] sm:$0xff]
    %v3272 = vld [vmem:[%s1233 + $0x30] sm:$0xff]
    %v3273 = vld [vmem:[%s1233 + $0x38] sm:$0xff]
    %v3274 = vld [vmem:[%s1233 + $0x40] sm:$0xff]
    %v3275 = vrot.slane %v3097, 2
    %v3276 = vrot.slane %v3098, 2
    %v3277 = vsel %vm324, %v3275, %v3276
    %v3278 = vsel %vm1088, %v3277, 0
    %3280 = vmatprep.subr.mxu0 0.0
    %3281 = vmatpush1.msra.mxu0 %v3266
    %3282 = vmatprep.subr.mxu0 0.0
    %3283 = vmatpush1.msra.mxu0 %v3267
    %3284 = vmatprep.subr.mxu0 0.0
    %3285 = vmatpush1.msra.mxu0 %v3268
    %3286 = vmatprep.subr.mxu0 0.0
    %3287 = vmatpush1.msra.mxu0 %v3269
    %3288 = vmatprep.subr.mxu0 0.0
    %3289 = vmatpush1.msra.mxu0 %v3270
    %3290 = vmatprep.subr.mxu0 0.0
    %3291 = vmatpush1.msra.mxu0 %v3271
    %3292 = vmatprep.subr.mxu0 0.0
    %3293 = vmatpush1.msra.mxu0 %v3272
    %3294 = vmatprep.subr.mxu0 0.0
    %3295 = vmatpush1.msra.mxu0 %v3273
    %3296 = vmatprep.subr.mxu0 0.0
    %3297 = vmatpush1.msra.mxu0 %v3274
    %3298 = vmatprep.subr.mxu0 0.0
    %3299 = vmatpush1.msra.mxu0 0.0
    %3300 = vmatprep.subr.mxu0 0.0
    %3301 = vmatpush1.msra.mxu0 0.0
    %3302 = vmatprep.subr.mxu0 0.0
    %3303 = vmatpush1.msra.mxu0 0.0
    %3304 = vmatprep.subr.mxu0 0.0
    %3305 = vmatpush1.msra.mxu0 0.0
    %3306 = vmatprep.subr.mxu0 0.0
    %3307 = vmatpush1.msra.mxu0 0.0
    %3308 = vmatprep.subr.mxu0 0.0
    %3309 = vmatpush1.msra.mxu0 0.0
    %3310 = vmatprep.subr.mxu0 0.0
    %3311 = vmatpush1.msra.mxu0 0.0
    %3312 = vmatprep.subr.mxu0 0.0
    %3313 = vmatpush1.msra.mxu0 0.0
    %3314 = vmatprep.subr.mxu0 0.0
    %3315 = vmatpush1.msra.mxu0 0.0
    %3316 = vmatprep.subr.mxu0 0.0
    %3317 = vmatpush1.msra.mxu0 0.0
    %3318 = vmatprep.subr.mxu0 0.0
    %3319 = vmatpush1.msra.mxu0 0.0
    %3320 = vmatprep.subr.mxu0 0.0
    %3321 = vmatpush1.msra.mxu0 0.0
    %3322 = vmatprep.subr.mxu0 0.0
    %3323 = vmatpush1.msra.mxu0 0.0
    %3324 = vmatprep.subr.mxu0 0.0
    %3325 = vmatpush1.msra.mxu0 0.0
    %3326 = vmatprep.subr.mxu0 0.0
    %3327 = vmatpush1.msra.mxu0 0.0
    %3328 = vmatprep.subr.mxu0 0.0
    %3329 = vmatpush1.msra.mxu0 0.0
    %3330 = vmatprep.subr.mxu0 0.0
    %3331 = vmatpush1.msra.mxu0 0.0
    %3332 = vmatprep.subr.mxu0 0.0
    %3333 = vmatpush1.msra.mxu0 0.0
    %3334 = vmatprep.subr.mxu0 0.0
    %3335 = vmatpush1.msra.mxu0 0.0
    %3336 = vmatprep.subr.mxu0 0.0
    %3337 = vmatpush1.msra.mxu0 0.0
    %3338 = vmatprep.subr.mxu0 0.0
    %3339 = vmatpush1.msra.mxu0 0.0
    %3340 = vmatprep.subr.mxu0 0.0
    %3341 = vmatpush1.msra.mxu0 0.0
    %3342 = vmatprep.subr.mxu0 0.0
    %3343 = vmatpush1.msra.mxu0 0.0
    %3344 = vmatprep.mubr.f32.mxu0 0.0
    %3345 = vmatmul.mubr.f32.gmra.mrb[0].mxu0 %v3278
    %v3346 = vpop.f32.mrb[0].mxu0
    %v3347 = vadd.f32 0.0, %v3346
    %v3348 = vpop.f32.mrb[0].mxu0
    %3349 = vdwg.mxu0
    %v3350 = vadd.f32 %v3263, %v3347
    %v3351 = vld [vmem:[%s1319] sm:$0xff]
    %v3352 = vld [vmem:[%s1319 + $0x8] sm:$0xff]
    %v3353 = vld [vmem:[%s1319 + $0x10] sm:$0xff]
    %v3354 = vld [vmem:[%s1319 + $0x18] sm:$0xff]
    %v3355 = vld [vmem:[%s1319 + $0x20] sm:$0xff]
    %v3356 = vld [vmem:[%s1319 + $0x28] sm:$0xff]
    %v3357 = vld [vmem:[%s1319 + $0x30] sm:$0xff]
    %v3358 = vld [vmem:[%s1319 + $0x38] sm:$0xff]
    %v3359 = vld [vmem:[%s1319 + $0x40] sm:$0xff]
    %v3360 = vrot.slane %v3097, 3
    %v3361 = vrot.slane %v3098, 3
    %v3362 = vsel %vm442, %v3360, %v3361
    %v3363 = vsel %vm1088, %v3362, 0
    %3365 = vmatprep.subr.mxu0 0.0
    %3366 = vmatpush1.msra.mxu0 %v3351
    %3367 = vmatprep.subr.mxu0 0.0
    %3368 = vmatpush1.msra.mxu0 %v3352
    %3369 = vmatprep.subr.mxu0 0.0
    %3370 = vmatpush1.msra.mxu0 %v3353
    %3371 = vmatprep.subr.mxu0 0.0
    %3372 = vmatpush1.msra.mxu0 %v3354
    %3373 = vmatprep.subr.mxu0 0.0
    %3374 = vmatpush1.msra.mxu0 %v3355
    %3375 = vmatprep.subr.mxu0 0.0
    %3376 = vmatpush1.msra.mxu0 %v3356
    %3377 = vmatprep.subr.mxu0 0.0
    %3378 = vmatpush1.msra.mxu0 %v3357
    %3379 = vmatprep.subr.mxu0 0.0
    %3380 = vmatpush1.msra.mxu0 %v3358
    %3381 = vmatprep.subr.mxu0 0.0
    %3382 = vmatpush1.msra.mxu0 %v3359
    %3383 = vmatprep.subr.mxu0 0.0
    %3384 = vmatpush1.msra.mxu0 0.0
    %3385 = vmatprep.subr.mxu0 0.0
    %3386 = vmatpush1.msra.mxu0 0.0
    %3387 = vmatprep.subr.mxu0 0.0
    %3388 = vmatpush1.msra.mxu0 0.0
    %3389 = vmatprep.subr.mxu0 0.0
    %3390 = vmatpush1.msra.mxu0 0.0
    %3391 = vmatprep.subr.mxu0 0.0
    %3392 = vmatpush1.msra.mxu0 0.0
    %3393 = vmatprep.subr.mxu0 0.0
    %3394 = vmatpush1.msra.mxu0 0.0
    %3395 = vmatprep.subr.mxu0 0.0
    %3396 = vmatpush1.msra.mxu0 0.0
    %3397 = vmatprep.subr.mxu0 0.0
    %3398 = vmatpush1.msra.mxu0 0.0
    %3399 = vmatprep.subr.mxu0 0.0
    %3400 = vmatpush1.msra.mxu0 0.0
    %3401 = vmatprep.subr.mxu0 0.0
    %3402 = vmatpush1.msra.mxu0 0.0
    %3403 = vmatprep.subr.mxu0 0.0
    %3404 = vmatpush1.msra.mxu0 0.0
    %3405 = vmatprep.subr.mxu0 0.0
    %3406 = vmatpush1.msra.mxu0 0.0
    %3407 = vmatprep.subr.mxu0 0.0
    %3408 = vmatpush1.msra.mxu0 0.0
    %3409 = vmatprep.subr.mxu0 0.0
    %3410 = vmatpush1.msra.mxu0 0.0
    %3411 = vmatprep.subr.mxu0 0.0
    %3412 = vmatpush1.msra.mxu0 0.0
    %3413 = vmatprep.subr.mxu0 0.0
    %3414 = vmatpush1.msra.mxu0 0.0
    %3415 = vmatprep.subr.mxu0 0.0
    %3416 = vmatpush1.msra.mxu0 0.0
    %3417 = vmatprep.subr.mxu0 0.0
    %3418 = vmatpush1.msra.mxu0 0.0
    %3419 = vmatprep.subr.mxu0 0.0
    %3420 = vmatpush1.msra.mxu0 0.0
    %3421 = vmatprep.subr.mxu0 0.0
    %3422 = vmatpush1.msra.mxu0 0.0
    %3423 = vmatprep.subr.mxu0 0.0
    %3424 = vmatpush1.msra.mxu0 0.0
    %3425 = vmatprep.subr.mxu0 0.0
    %3426 = vmatpush1.msra.mxu0 0.0
    %3427 = vmatprep.subr.mxu0 0.0
    %3428 = vmatpush1.msra.mxu0 0.0
    %3429 = vmatprep.mubr.f32.mxu0 0.0
    %3430 = vmatmul.mubr.f32.gmra.mrb[0].mxu0 %v3363
    %v3431 = vpop.f32.mrb[0].mxu0
    %v3432 = vadd.f32 0.0, %v3431
    %v3433 = vpop.f32.mrb[0].mxu0
    %3434 = vdwg.mxu0
    %v3435 = vadd.f32 %v3350, %v3432
    %v3436 = vld [vmem:[%s1405] sm:$0xff]
    %v3437 = vld [vmem:[%s1405 + $0x8] sm:$0xff]
    %v3438 = vld [vmem:[%s1405 + $0x10] sm:$0xff]
    %v3439 = vld [vmem:[%s1405 + $0x18] sm:$0xff]
    %v3440 = vld [vmem:[%s1405 + $0x20] sm:$0xff]
    %v3441 = vld [vmem:[%s1405 + $0x28] sm:$0xff]
    %v3442 = vld [vmem:[%s1405 + $0x30] sm:$0xff]
    %v3443 = vld [vmem:[%s1405 + $0x38] sm:$0xff]
    %v3444 = vld [vmem:[%s1405 + $0x40] sm:$0xff]
    %v3445 = vrot.slane %v3097, 4
    %v3446 = vrot.slane %v3098, 4
    %v3447 = vsel %vm130, %v3445, %v3446
    %v3448 = vsel %vm1088, %v3447, 0
    %3450 = vmatprep.subr.mxu0 0.0
    %3451 = vmatpush1.msra.mxu0 %v3436
    %3452 = vmatprep.subr.mxu0 0.0
    %3453 = vmatpush1.msra.mxu0 %v3437
    %3454 = vmatprep.subr.mxu0 0.0
    %3455 = vmatpush1.msra.mxu0 %v3438
    %3456 = vmatprep.subr.mxu0 0.0
    %3457 = vmatpush1.msra.mxu0 %v3439
    %3458 = vmatprep.subr.mxu0 0.0
    %3459 = vmatpush1.msra.mxu0 %v3440
    %3460 = vmatprep.subr.mxu0 0.0
    %3461 = vmatpush1.msra.mxu0 %v3441
    %3462 = vmatprep.subr.mxu0 0.0
    %3463 = vmatpush1.msra.mxu0 %v3442
    %3464 = vmatprep.subr.mxu0 0.0
    %3465 = vmatpush1.msra.mxu0 %v3443
    %3466 = vmatprep.subr.mxu0 0.0
    %3467 = vmatpush1.msra.mxu0 %v3444
    %3468 = vmatprep.subr.mxu0 0.0
    %3469 = vmatpush1.msra.mxu0 0.0
    %3470 = vmatprep.subr.mxu0 0.0
    %3471 = vmatpush1.msra.mxu0 0.0
    %3472 = vmatprep.subr.mxu0 0.0
    %3473 = vmatpush1.msra.mxu0 0.0
    %3474 = vmatprep.subr.mxu0 0.0
    %3475 = vmatpush1.msra.mxu0 0.0
    %3476 = vmatprep.subr.mxu0 0.0
    %3477 = vmatpush1.msra.mxu0 0.0
    %3478 = vmatprep.subr.mxu0 0.0
    %3479 = vmatpush1.msra.mxu0 0.0
    %3480 = vmatprep.subr.mxu0 0.0
    %3481 = vmatpush1.msra.mxu0 0.0
    %3482 = vmatprep.subr.mxu0 0.0
    %3483 = vmatpush1.msra.mxu0 0.0
    %3484 = vmatprep.subr.mxu0 0.0
    %3485 = vmatpush1.msra.mxu0 0.0
    %3486 = vmatprep.subr.mxu0 0.0
    %3487 = vmatpush1.msra.mxu0 0.0
    %3488 = vmatprep.subr.mxu0 0.0
    %3489 = vmatpush1.msra.mxu0 0.0
    %3490 = vmatprep.subr.mxu0 0.0
    %3491 = vmatpush1.msra.mxu0 0.0
    %3492 = vmatprep.subr.mxu0 0.0
    %3493 = vmatpush1.msra.mxu0 0.0
    %3494 = vmatprep.subr.mxu0 0.0
    %3495 = vmatpush1.msra.mxu0 0.0
    %3496 = vmatprep.subr.mxu0 0.0
    %3497 = vmatpush1.msra.mxu0 0.0
    %3498 = vmatprep.subr.mxu0 0.0
    %3499 = vmatpush1.msra.mxu0 0.0
    %3500 = vmatprep.subr.mxu0 0.0
    %3501 = vmatpush1.msra.mxu0 0.0
    %3502 = vmatprep.subr.mxu0 0.0
    %3503 = vmatpush1.msra.mxu0 0.0
    %3504 = vmatprep.subr.mxu0 0.0
    %3505 = vmatpush1.msra.mxu0 0.0
    %3506 = vmatprep.subr.mxu0 0.0
    %3507 = vmatpush1.msra.mxu0 0.0
    %3508 = vmatprep.subr.mxu0 0.0
    %3509 = vmatpush1.msra.mxu0 0.0
    %3510 = vmatprep.subr.mxu0 0.0
    %3511 = vmatpush1.msra.mxu0 0.0
    %3512 = vmatprep.subr.mxu0 0.0
    %3513 = vmatpush1.msra.mxu0 0.0
    %3514 = vmatprep.mubr.f32.mxu0 0.0
    %3515 = vmatmul.mubr.f32.gmra.mrb[0].mxu0 %v3448
    %v3516 = vpop.f32.mrb[0].mxu0
    %v3517 = vadd.f32 0.0, %v3516
    %v3518 = vpop.f32.mrb[0].mxu0
    %3519 = vdwg.mxu0
    %v3520 = vadd.f32 %v3435, %v3517
    %v3521 = vld [vmem:[%s6] sm:$0x1]
    %v3523 = vlaneseq
    %v3524 = vshrl.u32 %v3523, 7
    %v3525 = vsub.s32 0, %v3524
    %v3526 = vrot.slane %v3521, %v3525
    %v3528 = vadd.f32 %v3520, %v3526
    %v3529 = vmax.f32 %v3528, 0.0
    %v3530 = vld [vmem:[%s7] sm:$0xf]
    %v3532 = vsel %vm1501, %v3530, 0
    %3534 = vmatprep.subr.mxu0 0.0
    %3535 = vmatpush1.msra.mxu0 %v3529
    %3536 = vmatprep.subr.mxu0 0.0
    %3537 = vmatpush1.msra.mxu0 0.0
    %3538 = vmatprep.subr.mxu0 0.0
    %3539 = vmatpush1.msra.mxu0 0.0
    %3540 = vmatprep.subr.mxu0 0.0
    %3541 = vmatpush1.msra.mxu0 0.0
    %3542 = vmatprep.subr.mxu0 0.0
    %3543 = vmatpush1.msra.mxu0 0.0
    %3544 = vmatprep.subr.mxu0 0.0
    %3545 = vmatpush1.msra.mxu0 0.0
    %3546 = vmatprep.subr.mxu0 0.0
    %3547 = vmatpush1.msra.mxu0 0.0
    %3548 = vmatprep.subr.mxu0 0.0
    %3549 = vmatpush1.msra.mxu0 0.0
    %3550 = vmatprep.subr.mxu0 0.0
    %3551 = vmatpush1.msra.mxu0 0.0
    %3552 = vmatprep.subr.mxu0 0.0
    %3553 = vmatpush1.msra.mxu0 0.0
    %3554 = vmatprep.subr.mxu0 0.0
    %3555 = vmatpush1.msra.mxu0 0.0
    %3556 = vmatprep.subr.mxu0 0.0
    %3557 = vmatpush1.msra.mxu0 0.0
    %3558 = vmatprep.subr.mxu0 0.0
    %3559 = vmatpush1.msra.mxu0 0.0
    %3560 = vmatprep.subr.mxu0 0.0
    %3561 = vmatpush1.msra.mxu0 0.0
    %3562 = vmatprep.subr.mxu0 0.0
    %3563 = vmatpush1.msra.mxu0 0.0
    %3564 = vmatprep.subr.mxu0 0.0
    %3565 = vmatpush1.msra.mxu0 0.0
    %3566 = vmatprep.subr.mxu0 0.0
    %3567 = vmatpush1.msra.mxu0 0.0
    %3568 = vmatprep.subr.mxu0 0.0
    %3569 = vmatpush1.msra.mxu0 0.0
    %3570 = vmatprep.subr.mxu0 0.0
    %3571 = vmatpush1.msra.mxu0 0.0
    %3572 = vmatprep.subr.mxu0 0.0
    %3573 = vmatpush1.msra.mxu0 0.0
    %3574 = vmatprep.subr.mxu0 0.0
    %3575 = vmatpush1.msra.mxu0 0.0
    %3576 = vmatprep.subr.mxu0 0.0
    %3577 = vmatpush1.msra.mxu0 0.0
    %3578 = vmatprep.subr.mxu0 0.0
    %3579 = vmatpush1.msra.mxu0 0.0
    %3580 = vmatprep.subr.mxu0 0.0
    %3581 = vmatpush1.msra.mxu0 0.0
    %3582 = vmatprep.subr.mxu0 0.0
    %3583 = vmatpush1.msra.mxu0 0.0
    %3584 = vmatprep.subr.mxu0 0.0
    %3585 = vmatpush1.msra.mxu0 0.0
    %3586 = vmatprep.subr.mxu0 0.0
    %3587 = vmatpush1.msra.mxu0 0.0
    %3588 = vmatprep.subr.mxu0 0.0
    %3589 = vmatpush1.msra.mxu0 0.0
    %3590 = vmatprep.subr.mxu0 0.0
    %3591 = vmatpush1.msra.mxu0 0.0
    %3592 = vmatprep.subr.mxu0 0.0
    %3593 = vmatpush1.msra.mxu0 0.0
    %3594 = vmatprep.subr.mxu0 0.0
    %3595 = vmatpush1.msra.mxu0 0.0
    %3596 = vmatprep.subr.mxu0 0.0
    %3597 = vmatpush1.msra.mxu0 0.0
    %3598 = vmatprep.mubr.f32.mxu0 0.0
    %3599 = vmatmul.mubr.f32.gmra.mrb[0].mxu0 %v3532
    %v3600 = vpop.f32.mrb[0].mxu0
    %v3601 = vadd.f32 0.0, %v3600
    %v3602 = vpop.f32.mrb[0].mxu0
    %3603 = vdwg.mxu0
    %v3604 = vld [vmem:[%s1575] sm:$0xf]
    %v3606 = vsel %vm1501, %v3604, 0
    %3608 = vmatprep.subr.mxu0 0.0
    %3609 = vmatpush1.msra.mxu0 %v3529
    %3610 = vmatprep.subr.mxu0 0.0
    %3611 = vmatpush1.msra.mxu0 0.0
    %3612 = vmatprep.subr.mxu0 0.0
    %3613 = vmatpush1.msra.mxu0 0.0
    %3614 = vmatprep.subr.mxu0 0.0
    %3615 = vmatpush1.msra.mxu0 0.0
    %3616 = vmatprep.subr.mxu0 0.0
    %3617 = vmatpush1.msra.mxu0 0.0
    %3618 = vmatprep.subr.mxu0 0.0
    %3619 = vmatpush1.msra.mxu0 0.0
    %3620 = vmatprep.subr.mxu0 0.0
    %3621 = vmatpush1.msra.mxu0 0.0
    %3622 = vmatprep.subr.mxu0 0.0
    %3623 = vmatpush1.msra.mxu0 0.0
    %3624 = vmatprep.subr.mxu0 0.0
    %3625 = vmatpush1.msra.mxu0 0.0
    %3626 = vmatprep.subr.mxu0 0.0
    %3627 = vmatpush1.msra.mxu0 0.0
    %3628 = vmatprep.subr.mxu0 0.0
    %3629 = vmatpush1.msra.mxu0 0.0
    %3630 = vmatprep.subr.mxu0 0.0
    %3631 = vmatpush1.msra.mxu0 0.0
    %3632 = vmatprep.subr.mxu0 0.0
    %3633 = vmatpush1.msra.mxu0 0.0
    %3634 = vmatprep.subr.mxu0 0.0
    %3635 = vmatpush1.msra.mxu0 0.0
    %3636 = vmatprep.subr.mxu0 0.0
    %3637 = vmatpush1.msra.mxu0 0.0
    %3638 = vmatprep.subr.mxu0 0.0
    %3639 = vmatpush1.msra.mxu0 0.0
    %3640 = vmatprep.subr.mxu0 0.0
    %3641 = vmatpush1.msra.mxu0 0.0
    %3642 = vmatprep.subr.mxu0 0.0
    %3643 = vmatpush1.msra.mxu0 0.0
    %3644 = vmatprep.subr.mxu0 0.0
    %3645 = vmatpush1.msra.mxu0 0.0
    %3646 = vmatprep.subr.mxu0 0.0
    %3647 = vmatpush1.msra.mxu0 0.0
    %3648 = vmatprep.subr.mxu0 0.0
    %3649 = vmatpush1.msra.mxu0 0.0
    %3650 = vmatprep.subr.mxu0 0.0
    %3651 = vmatpush1.msra.mxu0 0.0
    %3652 = vmatprep.subr.mxu0 0.0
    %3653 = vmatpush1.msra.mxu0 0.0
    %3654 = vmatprep.subr.mxu0 0.0
    %3655 = vmatpush1.msra.mxu0 0.0
    %3656 = vmatprep.subr.mxu0 0.0
    %3657 = vmatpush1.msra.mxu0 0.0
    %3658 = vmatprep.subr.mxu0 0.0
    %3659 = vmatpush1.msra.mxu0 0.0
    %3660 = vmatprep.subr.mxu0 0.0
    %3661 = vmatpush1.msra.mxu0 0.0
    %3662 = vmatprep.subr.mxu0 0.0
    %3663 = vmatpush1.msra.mxu0 0.0
    %3664 = vmatprep.subr.mxu0 0.0
    %3665 = vmatpush1.msra.mxu0 0.0
    %3666 = vmatprep.subr.mxu0 0.0
    %3667 = vmatpush1.msra.mxu0 0.0
    %3668 = vmatprep.subr.mxu0 0.0
    %3669 = vmatpush1.msra.mxu0 0.0
    %3670 = vmatprep.subr.mxu0 0.0
    %3671 = vmatpush1.msra.mxu0 0.0
    %3672 = vmatprep.mubr.f32.mxu0 0.0
    %3673 = vmatmul.mubr.f32.gmra.mrb[0].mxu0 %v3606
    %v3674 = vpop.f32.mrb[0].mxu0
    %v3675 = vadd.f32 0.0, %v3674
    %v3676 = vpop.f32.mrb[0].mxu0
    %3677 = vdwg.mxu0
    %v3678 = vmax.f32 %v3601, %v3675
    %v3679 = vld [vmem:[%s8] sm:$0xff]
    %v3680 = vld [vmem:[%s8 + $0x8] sm:$0xff]
    %v3681 = vld [vmem:[%s8 + $0x10] sm:$0xff]
    %v3682 = vld [vmem:[%s8 + $0x18] sm:$0xff]
    %v3683 = vld [vmem:[%s8 + $0x20] sm:$0xff]
    %v3684 = vld [vmem:[%s8 + $0x28] sm:$0xff]
    %v3685 = vld [vmem:[%s8 + $0x30] sm:$0xff]
    %v3686 = vld [vmem:[%s8 + $0x38] sm:$0xff]
    %v3687 = vld [vmem:[%s8 + $0x40] sm:$0xff]
    %v3688 = vld [vmem:[%s8 + $0x48] sm:$0xff]
    %v3690 = vsel %vm1661, %v3678, 0
    %3692 = vmatprep.subr.mxu0 0.0
    %3693 = vmatpush1.msra.mxu0 %v3679
    %3694 = vmatprep.subr.mxu0 0.0
    %3695 = vmatpush1.msra.mxu0 %v3680
    %3696 = vmatprep.subr.mxu0 0.0
    %3697 = vmatpush1.msra.mxu0 %v3681
    %3698 = vmatprep.subr.mxu0 0.0
    %3699 = vmatpush1.msra.mxu0 %v3682
    %3700 = vmatprep.subr.mxu0 0.0
    %3701 = vmatpush1.msra.mxu0 %v3683
    %3702 = vmatprep.subr.mxu0 0.0
    %3703 = vmatpush1.msra.mxu0 %v3684
    %3704 = vmatprep.subr.mxu0 0.0
    %3705 = vmatpush1.msra.mxu0 %v3685
    %3706 = vmatprep.subr.mxu0 0.0
    %3707 = vmatpush1.msra.mxu0 %v3686
    %3708 = vmatprep.subr.mxu0 0.0
    %3709 = vmatpush1.msra.mxu0 %v3687
    %3710 = vmatprep.subr.mxu0 0.0
    %3711 = vmatpush1.msra.mxu0 %v3688
    %3712 = vmatprep.subr.mxu0 0.0
    %3713 = vmatpush1.msra.mxu0 0.0
    %3714 = vmatprep.subr.mxu0 0.0
    %3715 = vmatpush1.msra.mxu0 0.0
    %3716 = vmatprep.subr.mxu0 0.0
    %3717 = vmatpush1.msra.mxu0 0.0
    %3718 = vmatprep.subr.mxu0 0.0
    %3719 = vmatpush1.msra.mxu0 0.0
    %3720 = vmatprep.subr.mxu0 0.0
    %3721 = vmatpush1.msra.mxu0 0.0
    %3722 = vmatprep.subr.mxu0 0.0
    %3723 = vmatpush1.msra.mxu0 0.0
    %3724 = vmatprep.subr.mxu0 0.0
    %3725 = vmatpush1.msra.mxu0 0.0
    %3726 = vmatprep.subr.mxu0 0.0
    %3727 = vmatpush1.msra.mxu0 0.0
    %3728 = vmatprep.subr.mxu0 0.0
    %3729 = vmatpush1.msra.mxu0 0.0
    %3730 = vmatprep.subr.mxu0 0.0
    %3731 = vmatpush1.msra.mxu0 0.0
    %3732 = vmatprep.subr.mxu0 0.0
    %3733 = vmatpush1.msra.mxu0 0.0
    %3734 = vmatprep.subr.mxu0 0.0
    %3735 = vmatpush1.msra.mxu0 0.0
    %3736 = vmatprep.subr.mxu0 0.0
    %3737 = vmatpush1.msra.mxu0 0.0
    %3738 = vmatprep.subr.mxu0 0.0
    %3739 = vmatpush1.msra.mxu0 0.0
    %3740 = vmatprep.subr.mxu0 0.0
    %3741 = vmatpush1.msra.mxu0 0.0
    %3742 = vmatprep.subr.mxu0 0.0
    %3743 = vmatpush1.msra.mxu0 0.0
    %3744 = vmatprep.subr.mxu0 0.0
    %3745 = vmatpush1.msra.mxu0 0.0
    %3746 = vmatprep.subr.mxu0 0.0
    %3747 = vmatpush1.msra.mxu0 0.0
    %3748 = vmatprep.subr.mxu0 0.0
    %3749 = vmatpush1.msra.mxu0 0.0
    %3750 = vmatprep.subr.mxu0 0.0
    %3751 = vmatpush1.msra.mxu0 0.0
    %3752 = vmatprep.subr.mxu0 0.0
    %3753 = vmatpush1.msra.mxu0 0.0
    %3754 = vmatprep.subr.mxu0 0.0
    %3755 = vmatpush1.msra.mxu0 0.0
    %3756 = vmatprep.mubr.f32.mxu0 0.0
    %3757 = vmatmul.mubr.f32.gmra.mrb[0].mxu0 %v3690
    %v3758 = vpop.f32.mrb[0].mxu0
    %v3759 = vadd.f32 0.0, %v3758
    %v3760 = vpop.f32.mrb[0].mxu0
    %3761 = vdwg.mxu0
    %v3762 = vld [vmem:[%s1735] sm:$0xff]
    %v3763 = vld [vmem:[%s1735 + $0x8] sm:$0xff]
    %v3764 = vld [vmem:[%s1735 + $0x10] sm:$0xff]
    %v3765 = vld [vmem:[%s1735 + $0x18] sm:$0xff]
    %v3766 = vld [vmem:[%s1735 + $0x20] sm:$0xff]
    %v3767 = vld [vmem:[%s1735 + $0x28] sm:$0xff]
    %v3768 = vld [vmem:[%s1735 + $0x30] sm:$0xff]
    %v3769 = vld [vmem:[%s1735 + $0x38] sm:$0xff]
    %v3770 = vld [vmem:[%s1735 + $0x40] sm:$0xff]
    %v3771 = vld [vmem:[%s1735 + $0x48] sm:$0xff]
    %3772 = vmatprep.subr.mxu0 0.0
    %3773 = vmatpush1.msra.mxu0 %v3762
    %3774 = vmatprep.subr.mxu0 0.0
    %3775 = vmatpush1.msra.mxu0 %v3763
    %3776 = vmatprep.subr.mxu0 0.0
    %3777 = vmatpush1.msra.mxu0 %v3764
    %3778 = vmatprep.subr.mxu0 0.0
    %3779 = vmatpush1.msra.mxu0 %v3765
    %3780 = vmatprep.subr.mxu0 0.0
    %3781 = vmatpush1.msra.mxu0 %v3766
    %3782 = vmatprep.subr.mxu0 0.0
    %3783 = vmatpush1.msra.mxu0 %v3767
    %3784 = vmatprep.subr.mxu0 0.0
    %3785 = vmatpush1.msra.mxu0 %v3768
    %3786 = vmatprep.subr.mxu0 0.0
    %3787 = vmatpush1.msra.mxu0 %v3769
    %3788 = vmatprep.subr.mxu0 0.0
    %3789 = vmatpush1.msra.mxu0 %v3770
    %3790 = vmatprep.subr.mxu0 0.0
    %3791 = vmatpush1.msra.mxu0 %v3771
    %3792 = vmatprep.subr.mxu0 0.0
    %3793 = vmatpush1.msra.mxu0 0.0
    %3794 = vmatprep.subr.mxu0 0.0
    %3795 = vmatpush1.msra.mxu0 0.0
    %3796 = vmatprep.subr.mxu0 0.0
    %3797 = vmatpush1.msra.mxu0 0.0
    %3798 = vmatprep.subr.mxu0 0.0
    %3799 = vmatpush1.msra.mxu0 0.0
    %3800 = vmatprep.subr.mxu0 0.0
    %3801 = vmatpush1.msra.mxu0 0.0
    %3802 = vmatprep.subr.mxu0 0.0
    %3803 = vmatpush1.msra.mxu0 0.0
    %3804 = vmatprep.subr.mxu0 0.0
    %3805 = vmatpush1.msra.mxu0 0.0
    %3806 = vmatprep.subr.mxu0 0.0
    %3807 = vmatpush1.msra.mxu0 0.0
    %3808 = vmatprep.subr.mxu0 0.0
    %3809 = vmatpush1.msra.mxu0 0.0
    %3810 = vmatprep.subr.mxu0 0.0
    %3811 = vmatpush1.msra.mxu0 0.0
    %3812 = vmatprep.subr.mxu0 0.0
    %3813 = vmatpush1.msra.mxu0 0.0
    %3814 = vmatprep.subr.mxu0 0.0
    %3815 = vmatpush1.msra.mxu0 0.0
    %3816 = vmatprep.subr.mxu0 0.0
    %3817 = vmatpush1.msra.mxu0 0.0
    %3818 = vmatprep.subr.mxu0 0.0
    %3819 = vmatpush1.msra.mxu0 0.0
    %3820 = vmatprep.subr.mxu0 0.0
    %3821 = vmatpush1.msra.mxu0 0.0
    %3822 = vmatprep.subr.mxu0 0.0
    %3823 = vmatpush1.msra.mxu0 0.0
    %3824 = vmatprep.subr.mxu0 0.0
    %3825 = vmatpush1.msra.mxu0 0.0
    %3826 = vmatprep.subr.mxu0 0.0
    %3827 = vmatpush1.msra.mxu0 0.0
    %3828 = vmatprep.subr.mxu0 0.0
    %3829 = vmatpush1.msra.mxu0 0.0
    %3830 = vmatprep.subr.mxu0 0.0
    %3831 = vmatpush1.msra.mxu0 0.0
    %3832 = vmatprep.subr.mxu0 0.0
    %3833 = vmatpush1.msra.mxu0 0.0
    %3834 = vmatprep.subr.mxu0 0.0
    %3835 = vmatpush1.msra.mxu0 0.0
    %3836 = vmatprep.mubr.f32.mxu0 0.0
    %3837 = vmatmul.mubr.f32.gmra.mrb[0].mxu0 %v3690
    %v3838 = vpop.f32.mrb[0].mxu0
    %v3839 = vadd.f32 0.0, %v3838
    %v3840 = vpop.f32.mrb[0].mxu0
    %3841 = vdwg.mxu0
    %v3842 = vmax.f32 %v3759, %v3839
    %v3843 = vld [vmem:[#allocation6] sm:$0xff]
    %v3844 = vld [vmem:[#allocation6 + $0x8] sm:$0xff]
    %v3845 = vld [vmem:[#allocation6 + $0x10] sm:$0xff]
    %v3846 = vld [vmem:[#allocation6 + $0x18] sm:$0xff]
    %v3847 = vld [vmem:[#allocation6 + $0x20] sm:$0xff]
    %v3848 = vld [vmem:[%s1822] sm:$0xff]
    %v3849 = vld [vmem:[%s1822 + $0x8] sm:$0xff]
    %v3850 = vld [vmem:[%s1822 + $0x10] sm:$0xff]
    %v3851 = vld [vmem:[%s1822 + $0x18] sm:$0xff]
    %v3852 = vld [vmem:[%s1822 + $0x20] sm:$0xff]
    %v3854 = vrot.slane %v3842, 1
    %v3855 = vsel %vm1830, %v3854, 0
    %3857 = vmatprep.subr.mxu0 0.0
    %3858 = vmatpush1.msra.mxu0 %v3848
    %3859 = vmatprep.subr.mxu0 0.0
    %3860 = vmatpush1.msra.mxu0 %v3849
    %3861 = vmatprep.subr.mxu0 0.0
    %3862 = vmatpush1.msra.mxu0 %v3850
    %3863 = vmatprep.subr.mxu0 0.0
    %3864 = vmatpush1.msra.mxu0 %v3851
    %3865 = vmatprep.subr.mxu0 0.0
    %3866 = vmatpush1.msra.mxu0 %v3852
    %3867 = vmatprep.subr.mxu0 0.0
    %3868 = vmatpush1.msra.mxu0 0.0
    %3869 = vmatprep.subr.mxu0 0.0
    %3870 = vmatpush1.msra.mxu0 0.0
    %3871 = vmatprep.subr.mxu0 0.0
    %3872 = vmatpush1.msra.mxu0 0.0
    %3873 = vmatprep.subr.mxu0 0.0
    %3874 = vmatpush1.msra.mxu0 0.0
    %3875 = vmatprep.subr.mxu0 0.0
    %3876 = vmatpush1.msra.mxu0 0.0
    %3877 = vmatprep.subr.mxu0 0.0
    %3878 = vmatpush1.msra.mxu0 0.0
    %3879 = vmatprep.subr.mxu0 0.0
    %3880 = vmatpush1.msra.mxu0 0.0
    %3881 = vmatprep.subr.mxu0 0.0
    %3882 = vmatpush1.msra.mxu0 0.0
    %3883 = vmatprep.subr.mxu0 0.0
    %3884 = vmatpush1.msra.mxu0 0.0
    %3885 = vmatprep.subr.mxu0 0.0
    %3886 = vmatpush1.msra.mxu0 0.0
    %3887 = vmatprep.subr.mxu0 0.0
    %3888 = vmatpush1.msra.mxu0 0.0
    %3889 = vmatprep.subr.mxu0 0.0
    %3890 = vmatpush1.msra.mxu0 0.0
    %3891 = vmatprep.subr.mxu0 0.0
    %3892 = vmatpush1.msra.mxu0 0.0
    %3893 = vmatprep.subr.mxu0 0.0
    %3894 = vmatpush1.msra.mxu0 0.0
    %3895 = vmatprep.subr.mxu0 0.0
    %3896 = vmatpush1.msra.mxu0 0.0
    %3897 = vmatprep.subr.mxu0 0.0
    %3898 = vmatpush1.msra.mxu0 0.0
    %3899 = vmatprep.subr.mxu0 0.0
    %3900 = vmatpush1.msra.mxu0 0.0
    %3901 = vmatprep.subr.mxu0 0.0
    %3902 = vmatpush1.msra.mxu0 0.0
    %3903 = vmatprep.subr.mxu0 0.0
    %3904 = vmatpush1.msra.mxu0 0.0
    %3905 = vmatprep.subr.mxu0 0.0
    %3906 = vmatpush1.msra.mxu0 0.0
    %3907 = vmatprep.subr.mxu0 0.0
    %3908 = vmatpush1.msra.mxu0 0.0
    %3909 = vmatprep.subr.mxu0 0.0
    %3910 = vmatpush1.msra.mxu0 0.0
    %3911 = vmatprep.subr.mxu0 0.0
    %3912 = vmatpush1.msra.mxu0 0.0
    %3913 = vmatprep.subr.mxu0 0.0
    %3914 = vmatpush1.msra.mxu0 0.0
    %3915 = vmatprep.subr.mxu0 0.0
    %3916 = vmatpush1.msra.mxu0 0.0
    %3917 = vmatprep.subr.mxu0 0.0
    %3918 = vmatpush1.msra.mxu0 0.0
    %3919 = vmatprep.subr.mxu0 0.0
    %3920 = vmatpush1.msra.mxu0 0.0
    %3921 = vmatprep.mubr.f32.mxu0 0.0
    %3922 = vmatmul.mubr.f32.gmra.mrb[0].mxu0 %v3855
    %v3923 = vpop.f32.mrb[0].mxu0
    %v3924 = vadd.f32 0.0, %v3923
    %v3925 = vpop.f32.mrb[0].mxu0
    %3926 = vdwg.mxu0
    %v3927 = vsel %vm1830, %v3842, 0
    %3929 = vmatprep.subr.mxu0 0.0
    %3930 = vmatpush1.msra.mxu0 %v3843
    %3931 = vmatprep.subr.mxu0 0.0
    %3932 = vmatpush1.msra.mxu0 %v3844
    %3933 = vmatprep.subr.mxu0 0.0
    %3934 = vmatpush1.msra.mxu0 %v3845
    %3935 = vmatprep.subr.mxu0 0.0
    %3936 = vmatpush1.msra.mxu0 %v3846
    %3937 = vmatprep.subr.mxu0 0.0
    %3938 = vmatpush1.msra.mxu0 %v3847
    %3939 = vmatprep.subr.mxu0 0.0
    %3940 = vmatpush1.msra.mxu0 0.0
    %3941 = vmatprep.subr.mxu0 0.0
    %3942 = vmatpush1.msra.mxu0 0.0
    %3943 = vmatprep.subr.mxu0 0.0
    %3944 = vmatpush1.msra.mxu0 0.0
    %3945 = vmatprep.subr.mxu0 0.0
    %3946 = vmatpush1.msra.mxu0 0.0
    %3947 = vmatprep.subr.mxu0 0.0
    %3948 = vmatpush1.msra.mxu0 0.0
    %3949 = vmatprep.subr.mxu0 0.0
    %3950 = vmatpush1.msra.mxu0 0.0
    %3951 = vmatprep.subr.mxu0 0.0
    %3952 = vmatpush1.msra.mxu0 0.0
    %3953 = vmatprep.subr.mxu0 0.0
    %3954 = vmatpush1.msra.mxu0 0.0
    %3955 = vmatprep.subr.mxu0 0.0
    %3956 = vmatpush1.msra.mxu0 0.0
    %3957 = vmatprep.subr.mxu0 0.0
    %3958 = vmatpush1.msra.mxu0 0.0
    %3959 = vmatprep.subr.mxu0 0.0
    %3960 = vmatpush1.msra.mxu0 0.0
    %3961 = vmatprep.subr.mxu0 0.0
    %3962 = vmatpush1.msra.mxu0 0.0
    %3963 = vmatprep.subr.mxu0 0.0
    %3964 = vmatpush1.msra.mxu0 0.0
    %3965 = vmatprep.subr.mxu0 0.0
    %3966 = vmatpush1.msra.mxu0 0.0
    %3967 = vmatprep.subr.mxu0 0.0
    %3968 = vmatpush1.msra.mxu0 0.0
    %3969 = vmatprep.subr.mxu0 0.0
    %3970 = vmatpush1.msra.mxu0 0.0
    %3971 = vmatprep.subr.mxu0 0.0
    %3972 = vmatpush1.msra.mxu0 0.0
    %3973 = vmatprep.subr.mxu0 0.0
    %3974 = vmatpush1.msra.mxu0 0.0
    %3975 = vmatprep.subr.mxu0 0.0
    %3976 = vmatpush1.msra.mxu0 0.0
    %3977 = vmatprep.subr.mxu0 0.0
    %3978 = vmatpush1.msra.mxu0 0.0
    %3979 = vmatprep.subr.mxu0 0.0
    %3980 = vmatpush1.msra.mxu0 0.0
    %3981 = vmatprep.subr.mxu0 0.0
    %3982 = vmatpush1.msra.mxu0 0.0
    %3983 = vmatprep.subr.mxu0 0.0
    %3984 = vmatpush1.msra.mxu0 0.0
    %3985 = vmatprep.subr.mxu0 0.0
    %3986 = vmatpush1.msra.mxu0 0.0
    %3987 = vmatprep.subr.mxu0 0.0
    %3988 = vmatpush1.msra.mxu0 0.0
    %3989 = vmatprep.subr.mxu0 0.0
    %3990 = vmatpush1.msra.mxu0 0.0
    %3991 = vmatprep.subr.mxu0 0.0
    %3992 = vmatpush1.msra.mxu0 0.0
    %3993 = vmatprep.mubr.f32.mxu0 0.0
    %3994 = vmatmul.mubr.f32.gmra.mrb[0].mxu0 %v3927
    %v3995 = vpop.f32.mrb[0].mxu0
    %v3996 = vadd.f32 %v3924, %v3995
    %v3997 = vpop.f32.mrb[0].mxu0
    %3998 = vdwg.mxu0
    %v3999 = vld [vmem:[%s1975] sm:$0xff]
    %v4000 = vld [vmem:[%s1975 + $0x8] sm:$0xff]
    %v4001 = vld [vmem:[%s1975 + $0x10] sm:$0xff]
    %v4002 = vld [vmem:[%s1975 + $0x18] sm:$0xff]
    %v4003 = vld [vmem:[%s1975 + $0x20] sm:$0xff]
    %v4004 = vrot.slane %v3842, 2
    %v4005 = vsel %vm1830, %v4004, 0
    %4007 = vmatprep.subr.mxu0 0.0
    %4008 = vmatpush1.msra.mxu0 %v3999
    %4009 = vmatprep.subr.mxu0 0.0
    %4010 = vmatpush1.msra.mxu0 %v4000
    %4011 = vmatprep.subr.mxu0 0.0
    %4012 = vmatpush1.msra.mxu0 %v4001
    %4013 = vmatprep.subr.mxu0 0.0
    %4014 = vmatpush1.msra.mxu0 %v4002
    %4015 = vmatprep.subr.mxu0 0.0
    %4016 = vmatpush1.msra.mxu0 %v4003
    %4017 = vmatprep.subr.mxu0 0.0
    %4018 = vmatpush1.msra.mxu0 0.0
    %4019 = vmatprep.subr.mxu0 0.0
    %4020 = vmatpush1.msra.mxu0 0.0
    %4021 = vmatprep.subr.mxu0 0.0
    %4022 = vmatpush1.msra.mxu0 0.0
    %4023 = vmatprep.subr.mxu0 0.0
    %4024 = vmatpush1.msra.mxu0 0.0
    %4025 = vmatprep.subr.mxu0 0.0
    %4026 = vmatpush1.msra.mxu0 0.0
    %4027 = vmatprep.subr.mxu0 0.0
    %4028 = vmatpush1.msra.mxu0 0.0
    %4029 = vmatprep.subr.mxu0 0.0
    %4030 = vmatpush1.msra.mxu0 0.0
    %4031 = vmatprep.subr.mxu0 0.0
    %4032 = vmatpush1.msra.mxu0 0.0
    %4033 = vmatprep.subr.mxu0 0.0
    %4034 = vmatpush1.msra.mxu0 0.0
    %4035 = vmatprep.subr.mxu0 0.0
    %4036 = vmatpush1.msra.mxu0 0.0
    %4037 = vmatprep.subr.mxu0 0.0
    %4038 = vmatpush1.msra.mxu0 0.0
    %4039 = vmatprep.subr.mxu0 0.0
    %4040 = vmatpush1.msra.mxu0 0.0
    %4041 = vmatprep.subr.mxu0 0.0
    %4042 = vmatpush1.msra.mxu0 0.0
    %4043 = vmatprep.subr.mxu0 0.0
    %4044 = vmatpush1.msra.mxu0 0.0
    %4045 = vmatprep.subr.mxu0 0.0
    %4046 = vmatpush1.msra.mxu0 0.0
    %4047 = vmatprep.subr.mxu0 0.0
    %4048 = vmatpush1.msra.mxu0 0.0
    %4049 = vmatprep.subr.mxu0 0.0
    %4050 = vmatpush1.msra.mxu0 0.0
    %4051 = vmatprep.subr.mxu0 0.0
    %4052 = vmatpush1.msra.mxu0 0.0
    %4053 = vmatprep.subr.mxu0 0.0
    %4054 = vmatpush1.msra.mxu0 0.0
    %4055 = vmatprep.subr.mxu0 0.0
    %4056 = vmatpush1.msra.mxu0 0.0
    %4057 = vmatprep.subr.mxu0 0.0
    %4058 = vmatpush1.msra.mxu0 0.0
    %4059 = vmatprep.subr.mxu0 0.0
    %4060 = vmatpush1.msra.mxu0 0.0
    %4061 = vmatprep.subr.mxu0 0.0
    %4062 = vmatpush1.msra.mxu0 0.0
    %4063 = vmatprep.subr.mxu0 0.0
    %4064 = vmatpush1.msra.mxu0 0.0
    %4065 = vmatprep.subr.mxu0 0.0
    %4066 = vmatpush1.msra.mxu0 0.0
    %4067 = vmatprep.subr.mxu0 0.0
    %4068 = vmatpush1.msra.mxu0 0.0
    %4069 = vmatprep.subr.mxu0 0.0
    %4070 = vmatpush1.msra.mxu0 0.0
    %4071 = vmatprep.mubr.f32.mxu0 0.0
    %4072 = vmatmul.mubr.f32.gmra.mrb[0].mxu0 %v4005
    %v4073 = vpop.f32.mrb[0].mxu0
    %v4074 = vadd.f32 0.0, %v4073
    %v4075 = vpop.f32.mrb[0].mxu0
    %4076 = vdwg.mxu0
    %v4077 = vadd.f32 %v3996, %v4074
    %v4078 = vld [vmem:[%s2055] sm:$0xff]
    %v4079 = vld [vmem:[%s2055 + $0x8] sm:$0xff]
    %v4080 = vld [vmem:[%s2055 + $0x10] sm:$0xff]
    %v4081 = vld [vmem:[%s2055 + $0x18] sm:$0xff]
    %v4082 = vld [vmem:[%s2055 + $0x20] sm:$0xff]
    %v4083 = vrot.slane %v3842, 3
    %v4084 = vsel %vm1830, %v4083, 0
    %4086 = vmatprep.subr.mxu0 0.0
    %4087 = vmatpush1.msra.mxu0 %v4078
    %4088 = vmatprep.subr.mxu0 0.0
    %4089 = vmatpush1.msra.mxu0 %v4079
    %4090 = vmatprep.subr.mxu0 0.0
    %4091 = vmatpush1.msra.mxu0 %v4080
    %4092 = vmatprep.subr.mxu0 0.0
    %4093 = vmatpush1.msra.mxu0 %v4081
    %4094 = vmatprep.subr.mxu0 0.0
    %4095 = vmatpush1.msra.mxu0 %v4082
    %4096 = vmatprep.subr.mxu0 0.0
    %4097 = vmatpush1.msra.mxu0 0.0
    %4098 = vmatprep.subr.mxu0 0.0
    %4099 = vmatpush1.msra.mxu0 0.0
    %4100 = vmatprep.subr.mxu0 0.0
    %4101 = vmatpush1.msra.mxu0 0.0
    %4102 = vmatprep.subr.mxu0 0.0
    %4103 = vmatpush1.msra.mxu0 0.0
    %4104 = vmatprep.subr.mxu0 0.0
    %4105 = vmatpush1.msra.mxu0 0.0
    %4106 = vmatprep.subr.mxu0 0.0
    %4107 = vmatpush1.msra.mxu0 0.0
    %4108 = vmatprep.subr.mxu0 0.0
    %4109 = vmatpush1.msra.mxu0 0.0
    %4110 = vmatprep.subr.mxu0 0.0
    %4111 = vmatpush1.msra.mxu0 0.0
    %4112 = vmatprep.subr.mxu0 0.0
    %4113 = vmatpush1.msra.mxu0 0.0
    %4114 = vmatprep.subr.mxu0 0.0
    %4115 = vmatpush1.msra.mxu0 0.0
    %4116 = vmatprep.subr.mxu0 0.0
    %4117 = vmatpush1.msra.mxu0 0.0
    %4118 = vmatprep.subr.mxu0 0.0
    %4119 = vmatpush1.msra.mxu0 0.0
    %4120 = vmatprep.subr.mxu0 0.0
    %4121 = vmatpush1.msra.mxu0 0.0
    %4122 = vmatprep.subr.mxu0 0.0
    %4123 = vmatpush1.msra.mxu0 0.0
    %4124 = vmatprep.subr.mxu0 0.0
    %4125 = vmatpush1.msra.mxu0 0.0
    %4126 = vmatprep.subr.mxu0 0.0
    %4127 = vmatpush1.msra.mxu0 0.0
    %4128 = vmatprep.subr.mxu0 0.0
    %4129 = vmatpush1.msra.mxu0 0.0
    %4130 = vmatprep.subr.mxu0 0.0
    %4131 = vmatpush1.msra.mxu0 0.0
    %4132 = vmatprep.subr.mxu0 0.0
    %4133 = vmatpush1.msra.mxu0 0.0
    %4134 = vmatprep.subr.mxu0 0.0
    %4135 = vmatpush1.msra.mxu0 0.0
    %4136 = vmatprep.subr.mxu0 0.0
    %4137 = vmatpush1.msra.mxu0 0.0
    %4138 = vmatprep.subr.mxu0 0.0
    %4139 = vmatpush1.msra.mxu0 0.0
    %4140 = vmatprep.subr.mxu0 0.0
    %4141 = vmatpush1.msra.mxu0 0.0
    %4142 = vmatprep.subr.mxu0 0.0
    %4143 = vmatpush1.msra.mxu0 0.0
    %4144 = vmatprep.subr.mxu0 0.0
    %4145 = vmatpush1.msra.mxu0 0.0
    %4146 = vmatprep.subr.mxu0 0.0
    %4147 = vmatpush1.msra.mxu0 0.0
    %4148 = vmatprep.subr.mxu0 0.0
    %4149 = vmatpush1.msra.mxu0 0.0
    %4150 = vmatprep.mubr.f32.mxu0 0.0
    %4151 = vmatmul.mubr.f32.gmra.mrb[0].mxu0 %v4084
    %v4152 = vpop.f32.mrb[0].mxu0
    %v4153 = vadd.f32 0.0, %v4152
    %v4154 = vpop.f32.mrb[0].mxu0
    %4155 = vdwg.mxu0
    %v4156 = vadd.f32 %v4077, %v4153
    %4157 = vst.msk [vmem:[#allocation2 + $0x1] sm:$0x1] %vm2135, %v4156
    %v4158 = vld [vmem:[#allocation2] sm:$0x3]
    %v4159 = vld [vmem:[%s10] sm:$0x1]
    %v4161 = vlaneseq
    %v4162 = vshrl.u32 %v4161, 7
    %v4163 = vsub.s32 0, %v4162
    %v4164 = vrot.slane %v4159, %v4163
    %v4166 = vadd.f32 %v4158, %v4164
    %v4167 = vmax.f32 %v4166, 0.0
    %v4168 = vld [vmem:[%s11] sm:$0xff]
    %v4169 = vld [vmem:[%s11 + $0x8] sm:$0xff]
    %v4170 = vld [vmem:[%s11 + $0x10] sm:$0xff]
    %v4171 = vld [vmem:[%s11 + $0x18] sm:$0xff]
    %v4172 = vld [vmem:[%s11 + $0x20] sm:$0xff]
    %v4173 = vld [vmem:[%s11 + $0x28] sm:$0xff]
    %v4174 = vld [vmem:[%s11 + $0x30] sm:$0xff]
    %v4175 = vld [vmem:[%s11 + $0x38] sm:$0xff]
    %v4176 = vld [vmem:[%s11 + $0x40] sm:$0xff]
    %v4177 = vld [vmem:[%s11 + $0x48] sm:$0xff]
    %v4178 = vld [vmem:[%s12] sm:$0x1]
    %v4180 = vlaneseq
    %v4181 = vshrl.u32 %v4180, 7
    %v4182 = vsub.s32 0, %v4181
    %v4183 = vrot.slane %v4178, %v4182
    %v4186 = vsel %vm1661, %v4167, 0
    %4188 = vmatprep.subr.mxu0 0.0
    %4189 = vmatpush1.msra.mxu0 %v4168
    %4190 = vmatprep.subr.mxu0 0.0
    %4191 = vmatpush1.msra.mxu0 %v4169
    %4192 = vmatprep.subr.mxu0 0.0
    %4193 = vmatpush1.msra.mxu0 %v4170
    %4194 = vmatprep.subr.mxu0 0.0
    %4195 = vmatpush1.msra.mxu0 %v4171
    %4196 = vmatprep.subr.mxu0 0.0
    %4197 = vmatpush1.msra.mxu0 %v4172
    %4198 = vmatprep.subr.mxu0 0.0
    %4199 = vmatpush1.msra.mxu0 %v4173
    %4200 = vmatprep.subr.mxu0 0.0
    %4201 = vmatpush1.msra.mxu0 %v4174
    %4202 = vmatprep.subr.mxu0 0.0
    %4203 = vmatpush1.msra.mxu0 %v4175
    %4204 = vmatprep.subr.mxu0 0.0
    %4205 = vmatpush1.msra.mxu0 %v4176
    %4206 = vmatprep.subr.mxu0 0.0
    %4207 = vmatpush1.msra.mxu0 %v4177
    %4208 = vmatprep.subr.mxu0 0.0
    %4209 = vmatpush1.msra.mxu0 0.0
    %4210 = vmatprep.subr.mxu0 0.0
    %4211 = vmatpush1.msra.mxu0 0.0
    %4212 = vmatprep.subr.mxu0 0.0
    %4213 = vmatpush1.msra.mxu0 0.0
    %4214 = vmatprep.subr.mxu0 0.0
    %4215 = vmatpush1.msra.mxu0 0.0
    %4216 = vmatprep.subr.mxu0 0.0
    %4217 = vmatpush1.msra.mxu0 0.0
    %4218 = vmatprep.subr.mxu0 0.0
    %4219 = vmatpush1.msra.mxu0 0.0
    %4220 = vmatprep.subr.mxu0 0.0
    %4221 = vmatpush1.msra.mxu0 0.0
    %4222 = vmatprep.subr.mxu0 0.0
    %4223 = vmatpush1.msra.mxu0 0.0
    %4224 = vmatprep.subr.mxu0 0.0
    %4225 = vmatpush1.msra.mxu0 0.0
    %4226 = vmatprep.subr.mxu0 0.0
    %4227 = vmatpush1.msra.mxu0 0.0
    %4228 = vmatprep.subr.mxu0 0.0
    %4229 = vmatpush1.msra.mxu0 0.0
    %4230 = vmatprep.subr.mxu0 0.0
    %4231 = vmatpush1.msra.mxu0 0.0
    %4232 = vmatprep.subr.mxu0 0.0
    %4233 = vmatpush1.msra.mxu0 0.0
    %4234 = vmatprep.subr.mxu0 0.0
    %4235 = vmatpush1.msra.mxu0 0.0
    %4236 = vmatprep.subr.mxu0 0.0
    %4237 = vmatpush1.msra.mxu0 0.0
    %4238 = vmatprep.subr.mxu0 0.0
    %4239 = vmatpush1.msra.mxu0 0.0
    %4240 = vmatprep.subr.mxu0 0.0
    %4241 = vmatpush1.msra.mxu0 0.0
    %4242 = vmatprep.subr.mxu0 0.0
    %4243 = vmatpush1.msra.mxu0 0.0
    %4244 = vmatprep.subr.mxu0 0.0
    %4245 = vmatpush1.msra.mxu0 0.0
    %4246 = vmatprep.subr.mxu0 0.0
    %4247 = vmatpush1.msra.mxu0 0.0
    %4248 = vmatprep.subr.mxu0 0.0
    %4249 = vmatpush1.msra.mxu0 0.0
    %4250 = vmatprep.subr.mxu0 0.0
    %4251 = vmatpush1.msra.mxu0 0.0
    %4252 = vmatprep.mubr.f32.mxu0 0.0
    %4253 = vmatmul.mubr.f32.gmra.mrb[0].mxu0 %v4186
    %v4254 = vpop.f32.mrb[0].mxu0
    %v4255 = vadd.f32 %v4183, %v4254
    %v4256 = vpop.f32.mrb[0].mxu0
    %4257 = vdwg.mxu0
    %v4258 = vmax.f32 %v4255, 0.0
    %v4259 = vld [vmem:[%s13] sm:$0xff]
    %v4260 = vld [vmem:[%s13 + $0x8] sm:$0xff]
    %v4261 = vld [vmem:[%s13 + $0x10] sm:$0xff]
    %v4262 = vld [vmem:[%s13 + $0x18] sm:$0x3f]
    %v4263 = vld [vmem:[#allocation8] sm:$0x1]
    %v4265 = vlaneseq
    %v4266 = vshrl.u32 %v4265, 7
    %v4267 = vsub.s32 0, %v4266
    %v4268 = vrot.slane %v4263, %v4267
    %vm4270 = vcmask 244736
    %v4272 = vsel %vm4270, %v4258, 0
    %v4275 = vsel %vm324, %v4262, 0
    %4277 = vmatprep.subr.mxu0 0.0
    %4278 = vmatpush1.msra.mxu0 %v4259
    %4279 = vmatprep.subr.mxu0 0.0
    %4280 = vmatpush1.msra.mxu0 %v4260
    %4281 = vmatprep.subr.mxu0 0.0
    %4282 = vmatpush1.msra.mxu0 %v4261
    %4283 = vmatprep.subr.mxu0 0.0
    %4284 = vmatpush1.msra.mxu0 %v4275
    %4285 = vmatprep.subr.mxu0 0.0
    %4286 = vmatpush1.msra.mxu0 0.0
    %4287 = vmatprep.subr.mxu0 0.0
    %4288 = vmatpush1.msra.mxu0 0.0
    %4289 = vmatprep.subr.mxu0 0.0
    %4290 = vmatpush1.msra.mxu0 0.0
    %4291 = vmatprep.subr.mxu0 0.0
    %4292 = vmatpush1.msra.mxu0 0.0
    %4293 = vmatprep.subr.mxu0 0.0
    %4294 = vmatpush1.msra.mxu0 0.0
    %4295 = vmatprep.subr.mxu0 0.0
    %4296 = vmatpush1.msra.mxu0 0.0
    %4297 = vmatprep.subr.mxu0 0.0
    %4298 = vmatpush1.msra.mxu0 0.0
    %4299 = vmatprep.subr.mxu0 0.0
    %4300 = vmatpush1.msra.mxu0 0.0
    %4301 = vmatprep.subr.mxu0 0.0
    %4302 = vmatpush1.msra.mxu0 0.0
    %4303 = vmatprep.subr.mxu0 0.0
    %4304 = vmatpush1.msra.mxu0 0.0
    %4305 = vmatprep.subr.mxu0 0.0
    %4306 = vmatpush1.msra.mxu0 0.0
    %4307 = vmatprep.subr.mxu0 0.0
    %4308 = vmatpush1.msra.mxu0 0.0
    %4309 = vmatprep.subr.mxu0 0.0
    %4310 = vmatpush1.msra.mxu0 0.0
    %4311 = vmatprep.subr.mxu0 0.0
    %4312 = vmatpush1.msra.mxu0 0.0
    %4313 = vmatprep.subr.mxu0 0.0
    %4314 = vmatpush1.msra.mxu0 0.0
    %4315 = vmatprep.subr.mxu0 0.0
    %4316 = vmatpush1.msra.mxu0 0.0
    %4317 = vmatprep.subr.mxu0 0.0
    %4318 = vmatpush1.msra.mxu0 0.0
    %4319 = vmatprep.subr.mxu0 0.0
    %4320 = vmatpush1.msra.mxu0 0.0
    %4321 = vmatprep.subr.mxu0 0.0
    %4322 = vmatpush1.msra.mxu0 0.0
    %4323 = vmatprep.subr.mxu0 0.0
    %4324 = vmatpush1.msra.mxu0 0.0
    %4325 = vmatprep.subr.mxu0 0.0
    %4326 = vmatpush1.msra.mxu0 0.0
    %4327 = vmatprep.subr.mxu0 0.0
    %4328 = vmatpush1.msra.mxu0 0.0
    %4329 = vmatprep.subr.mxu0 0.0
    %4330 = vmatpush1.msra.mxu0 0.0
    %4331 = vmatprep.subr.mxu0 0.0
    %4332 = vmatpush1.msra.mxu0 0.0
    %4333 = vmatprep.subr.mxu0 0.0
    %4334 = vmatpush1.msra.mxu0 0.0
    %4335 = vmatprep.subr.mxu0 0.0
    %4336 = vmatpush1.msra.mxu0 0.0
    %4337 = vmatprep.subr.mxu0 0.0
    %4338 = vmatpush1.msra.mxu0 0.0
    %4339 = vmatprep.subr.mxu0 0.0
    %4340 = vmatpush1.msra.mxu0 0.0
    %4341 = vmatprep.mubr.f32.mxu0 0.0
    %4342 = vmatmul.mubr.f32.gmra.mrb[0].mxu0 %v4272
    %v4343 = vpop.f32.mrb[0].mxu0
    %v4344 = vadd.f32 %v4268, %v4343
    %v4345 = vpop.f32.mrb[0].mxu0
    %4346 = vdwg.mxu0
    %4347 = vst [vmem:[#allocation9] sm:$0x3] %v4344
    // Predicated region
    $region74: #{projnet_forward.1} parent=1 // pred_check
      _
    $region75: #{projnet_forward.1} parent=1 // pred_check_branch
      %4349 = sbr.rel (0) target = $region77
    $region76: #{projnet_forward.1} parent=1 // pred_region
      %s4351 = ssub.s32 32, 32
      %4352 = vsyncadd [#allocation5], %s4351
      %s4354 = sshll.u32 [#allocation9], 4
      %s4355 = int_to_ptr.vmem [resolvable:$true] %s4354
      %4357 = dma.vmem_to_hbm [thread:$0]  %s4355, 32, %s15, [#allocation5]
    $region77: #{projnet_forward.1} parent=1 // pred_fallthru
      _
    // Predicated region
    $region78: #{projnet_forward.1} parent=1 // pred_check
      _
    $region79: #{projnet_forward.1} parent=1 // pred_check_branch
      %4359 = sbr.rel (0) target = $region81
    $region80: #{projnet_forward.1} parent=1 // pred_region
      %4360 = dma.done [#allocation5], 32
    $region81: #{projnet_forward.1} parent=1 // pred_fallthru
      _
    %4361 = vsyncpa [#allocation4], 1
    %4362 = vsyncpa [#allocation7], 1
    %4363 = vsyncpa [#allocation5], 1

</llo_original>
